<compile_context>
chip_gen: v7x
topology: tpu7x:2x2x1
jax: 0.10.0
libtpu: 0.0.40
codegen_flags: <defaults>
</compile_context>

<pallas_src>
import math

import jax
import jax.numpy as jnp
import numpy as np
from jax.experimental import pallas as pl
from jax.experimental.pallas import tpu as pltpu

_NUM_LAYERS = 13   # embeddings + 12 encoder layers
_NUM_HEADS = 3     # head, tail, segmentation


# --------------------------------------------------------------------------- #
# Kernel
# --------------------------------------------------------------------------- #
def _make_fused_heads_kernel(stacked):
    """Fused adaptive-layer-sum + three 1x1-conv heads for one (batch, seq-tile).

    Per step computes  logits[c, t] = sum_l sum_h (coeff_l * W[c, h]) * hs_l[t, h] + b[c]
    as 13 accumulating (3, H) x (TS, H)^T MXU matmuls into a (3, TS) f32
    accumulator (coefficients pre-folded into the per-layer weights).
    """
    def kernel(*refs):
        if stacked:
            hs_ref = refs[0]                                  # (13, 1, TS, H)
            wt_ref, b_ref, o_ref = refs[1], refs[2], refs[3]

            def layer(l):
                return hs_ref[l, 0]                           # (TS, H)
        else:
            hs_refs = refs[:_NUM_LAYERS]                      # 13 x (1, TS, H)
            wt_ref = refs[_NUM_LAYERS]                        # (13, 3, H)
            b_ref = refs[_NUM_LAYERS + 1]                     # (3, 1) f32
            o_ref = refs[_NUM_LAYERS + 2]                     # (1, 3, TS) f32

            def layer(l):
                return hs_refs[l][0]                          # (TS, H)

        acc = None
        for l in range(_NUM_LAYERS):
            term = jax.lax.dot_general(
                wt_ref[l], layer(l),
                dimension_numbers=(((1,), (1,)), ((), ())),
                preferred_element_type=jnp.float32)           # (3, TS) f32
            acc = term if acc is None else acc + term

        o_ref[0] = (acc + b_ref[...]).astype(o_ref.dtype)

    return kernel


# --------------------------------------------------------------------------- #
# Tiling / VMEM policy
# --------------------------------------------------------------------------- #
def _vmem_capacity_bytes():
    """Per-core physical VMEM (v5e/v6e: 128 MiB, v7x: 64 MiB); conservative fallback."""
    try:
        info = pltpu.get_tpu_info()
        cap = getattr(info, "vmem_capacity_bytes", None)
        if cap:
            return int(cap)
    except Exception:
        pass
    return 64 * 1024 * 1024  # assume the smallest (v7x) if we cannot query


def _choose_seq_tile(S, H, itemsize, batch, vmem_cap):
    """Largest lane-aligned sequence tile whose 13-stream block fits one of the
    two pipeline buffers (double-buffered inputs must stay well inside VMEM)."""
    per_buf_budget = max(vmem_cap // 3, 8 * 1024 * 1024)   # one of 2 input buffers
    stream_bytes = _NUM_LAYERS * H * itemsize               # bytes per seq position
    full_fits = S * stream_bytes <= per_buf_budget

    candidates = [t for t in (4096, 2048, 1024, 512, 256, 128)
                  if S % t == 0 and t * stream_bytes <= per_buf_budget]

    if full_fits:
        ts = S
    elif candidates:
        ts = candidates[0]
    else:
        # TODO(synk): S*H too large for any lane-aligned divisor tile; single
        # full-S block may exceed the raised VMEM limit.
        ts = S

    # v7x has 2 TensorCores splitting parallel grid axes: guarantee >= 2
    # grid iterations when B == 1 (harmless on single-TC v5e/v6e).
    if batch == 1 and ts == S and S % 256 == 0 and \
            (S // 2) * stream_bytes <= per_buf_budget:
        ts = S // 2
    return ts


# --------------------------------------------------------------------------- #
# Wrapper
# --------------------------------------------------------------------------- #
def fused_adaptive_layer_heads(hidden_states, adp_weights,
                               w_head, b_head, w_tail, b_tail, w_seg, b_seg,
                               special_tokens_mask=None, seq_tile=None):
    """Post-backbone forward of the module.

    hidden_states: either a sequence of 13 arrays (B, S, H) (f32 or bf16), or a
                   single stacked array (13, B, S, H) if the backbone already
                   provides one (no stack is performed here).
    adp_weights:   (13,) f32 -- self.classifier_adp_weights
    w_*: (1, H, 1) PyTorch Conv1d(H, 1, 1) weights;  b_*: (1,) biases
    Returns (logits_head, logits_tail, logits_segmentation), each (B, S) f32.
    """
    stacked = not isinstance(hidden_states, (list, tuple))
    if stacked:
        assert hidden_states.shape[0] == _NUM_LAYERS
        _, B, S, H = hidden_states.shape
        hs_dtype = hidden_states.dtype
    else:
        hidden_states = list(hidden_states)
        assert len(hidden_states) == _NUM_LAYERS
        B, S, H = hidden_states[0].shape
        hs_dtype = hidden_states[0].dtype
    itemsize = jnp.dtype(hs_dtype).itemsize

    vmem_cap = _vmem_capacity_bytes()
    TS = _choose_seq_tile(S, H, itemsize, B, vmem_cap) if seq_tile is None else seq_tile
    assert S % TS == 0, "sequence length must be divisible by the seq tile"
    assert TS == S or TS % 128 == 0, "partial seq tiles must be lane-aligned"
    n_s = S // TS

    # Layer coefficients: leaky_relu(w) / leaky_relu(w).sum()   (13 scalars),
    # folded into the packed conv weights so the kernel never applies them.
    lw = jax.nn.leaky_relu(adp_weights.astype(jnp.float32), negative_slope=0.01)
    coeffs = lw / jnp.sum(lw)                                        # (13,)

    # Pack the three Conv1d(H,1,1) heads into one (3, H) matrix + (3, 1) bias,
    # then fold the per-layer coefficient:  wt[l] = coeffs[l] * W  -> (13, 3, H).
    w_base = jnp.concatenate(
        [w_head[:, :, 0], w_tail[:, :, 0], w_seg[:, :, 0]], axis=0
    ).astype(jnp.float32)                                            # (3, H)
    wt = (coeffs[:, None, None] * w_base[None]).astype(hs_dtype)     # (13, 3, H)
    bias = jnp.concatenate([b_head, b_tail, b_seg]).reshape(
        _NUM_HEADS, 1).astype(jnp.float32)                           # (3, 1)

    wt_spec = pl.BlockSpec((_NUM_LAYERS, _NUM_HEADS, H), lambda b, s: (0, 0, 0))
    b_spec = pl.BlockSpec((_NUM_HEADS, 1), lambda b, s: (0, 0))

    if stacked:
        in_specs = [pl.BlockSpec((_NUM_LAYERS, 1, TS, H),
                                 lambda b, s: (0, b, s, 0)),
                    wt_spec, b_spec]
        args = (hidden_states, wt, bias)
    else:
        hs_spec = pl.BlockSpec((1, TS, H), lambda b, s: (b, s, 0))
        in_specs = [hs_spec] * _NUM_LAYERS + [wt_spec, b_spec]
        args = (*hidden_states, wt, bias)

    grid_spec = pltpu.PrefetchScalarGridSpec(
        num_scalar_prefetch=0,
        grid=(B, n_s),
        in_specs=in_specs,
        out_specs=pl.BlockSpec((1, _NUM_HEADS, TS), lambda b, s: (b, 0, s)),
    )

    # Raise the scoped VMEM limit so the large tiles actually compile:
    # 2x (double-buffered) 13-stream input block + output/weights + headroom,
    # capped just under the generation's physical VMEM.
    block_in_bytes = _NUM_LAYERS * TS * H * itemsize
    block_out_bytes = _NUM_HEADS * TS * 4
    weight_bytes = _NUM_LAYERS * _NUM_HEADS * H * itemsize + _NUM_HEADS * 4
    vmem_limit = 2 * (block_in_bytes + block_out_bytes + weight_bytes) + (8 << 20)
    vmem_limit = max(vmem_limit, 32 << 20)
    vmem_limit = min(vmem_limit, vmem_cap - (2 << 20))

    cost = pl.CostEstimate(
        flops=2 * _NUM_LAYERS * _NUM_HEADS * B * S * H,
        transcendentals=0,
        bytes_accessed=_NUM_LAYERS * B * S * H * itemsize
        + B * _NUM_HEADS * S * 4
        + _NUM_LAYERS * _NUM_HEADS * H * itemsize)

    out = pl.pallas_call(
        _make_fused_heads_kernel(stacked),
        out_shape=jax.ShapeDtypeStruct((B, _NUM_HEADS, S), jnp.float32),
        grid_spec=grid_spec,
        compiler_params=pltpu.CompilerParams(
            dimension_semantics=("parallel", "parallel"),
            vmem_limit_bytes=int(vmem_limit)),
        cost_estimate=cost,
    )(*args)

    # Lane-dense output: contiguous channel slices.
    logits_head = out[:, 0, :]
    logits_tail = out[:, 1, :]
    logits_seg = out[:, 2, :]

    if special_tokens_mask is not None:
        neg_inf = jnp.asarray(-jnp.inf, dtype=logits_head.dtype)
        logits_head = jnp.where(special_tokens_mask == 0, logits_head, neg_inf)
        # Same circular shift as torch.cat([mask[:, -1:], mask[:, :-1]], dim=1).
        tail_mask = jnp.concatenate(
            [special_tokens_mask[:, -1:], special_tokens_mask[:, :-1]], axis=1)
        logits_tail = jnp.where(tail_mask == 0, logits_tail, neg_inf)
        # segmentation head is not masked in the reference module

    return logits_head, logits_tail, logits_seg


# --------------------------------------------------------------------------- #
# Reference & demo
# --------------------------------------------------------------------------- #
def _init_conv1d_params(key, in_channels, out_channels=1, kernel_size=1):
    """Deterministic init matching torch.nn.Conv1d's default (kaiming uniform)."""
    k_w, k_b = jax.random.split(key)
    bound = 1.0 / math.sqrt(in_channels * kernel_size)
    w = jax.random.uniform(k_w, (out_channels, in_channels, kernel_size),
                           minval=-bound, maxval=bound, dtype=jnp.float32)
    b = jax.random.uniform(k_b, (out_channels,), minval=-bound, maxval=bound,
                           dtype=jnp.float32)
    return w, b


def _reference_forward(hidden_states, adp_weights, w_head, b_head, w_tail,
                       b_tail, w_seg, b_seg, special_tokens_mask=None):
    """Pure-JAX reference mirroring the PyTorch forward (post-backbone)."""
    lw = jax.nn.leaky_relu(adp_weights, negative_slope=0.01)
    coeffs = lw / jnp.sum(lw)
    x = sum(coeffs[i] * hidden_states[i] for i in range(_NUM_LAYERS))  # (B,S,H)

    def head(w, b):  # Conv1d(H, 1, 1) on (B, H, S) == per-position dot over H
        return jnp.einsum('bsh,h->bs', x, w[0, :, 0]) + b[0]

    lh = head(w_head, b_head)
    lt = head(w_tail, b_tail)
    ls = head(w_seg, b_seg)
    if special_tokens_mask is not None:
        neg_inf = jnp.asarray(-jnp.inf, dtype=lh.dtype)
        lh = jnp.where(special_tokens_mask == 0, lh, neg_inf)
        tail_mask = jnp.concatenate(
            [special_tokens_mask[:, -1:], special_tokens_mask[:, :-1]], axis=1)
        lt = jnp.where(tail_mask == 0, lt, neg_inf)
    return lh, lt, ls


if __name__ == "__main__":
    # Small shapes: batch=2, seq=256, hidden=32, 13 layers.
    B, S, H = 2, 256, 32

    key = jax.random.PRNGKey(0)
    keys = jax.random.split(key, _NUM_LAYERS + 4)

    # Stand-ins for RobertaModel(...)'s 13 hidden_states.
    hidden_states = [jax.random.normal(keys[i], (B, S, H), dtype=jnp.float32)
                     for i in range(_NUM_LAYERS)]
    adp_weights = jax.random.normal(keys[_NUM_LAYERS], (_NUM_LAYERS,),
                                    dtype=jnp.float32)
    w_head, b_head = _init_conv1d_params(keys[_NUM_LAYERS + 1], H)
    w_tail, b_tail = _init_conv1d_params(keys[_NUM_LAYERS + 2], H)
    w_seg, b_seg = _init_conv1d_params(keys[_NUM_LAYERS + 3], H)

    # Special tokens at the sequence boundaries (like <s> ... </s>).
    special_tokens_mask = jnp.zeros((B, S), dtype=jnp.int32)
    special_tokens_mask = special_tokens_mask.at[:, 0].set(1).at[:, -1].set(1)

    refs = _reference_forward(
        hidden_states, adp_weights, w_head, b_head, w_tail, b_tail,
        w_seg, b_seg, special_tokens_mask=special_tokens_mask)

    # 1) 13-tensor (list) path, f32 -- exact-ish check.
    outs = fused_adaptive_layer_heads(
        hidden_states, adp_weights, w_head, b_head, w_tail, b_tail,
        w_seg, b_seg, special_tokens_mask=special_tokens_mask)
    jax.block_until_ready(outs)
    for got, want in zip(outs, refs):
        np.testing.assert_allclose(np.asarray(got), np.asarray(want),
                                   rtol=1e-4, atol=1e-5)
    assert all(o.shape == (B, S) for o in outs)

    # 2) Stacked (13, B, S, H) path, f32 (single DMA stream per step).
    hs_stacked = jnp.stack(hidden_states, axis=0)   # stacked only for the demo
    outs_stacked = fused_adaptive_layer_heads(
        hs_stacked, adp_weights, w_head, b_head, w_tail, b_tail,
        w_seg, b_seg, special_tokens_mask=special_tokens_mask)
    jax.block_until_ready(outs_stacked)
    for got, want in zip(outs_stacked, refs):
        np.testing.assert_allclose(np.asarray(got), np.asarray(want),
                                   rtol=1e-4, atol=1e-5)

    # 3) bf16 hidden states (halves the dominant HBM traffic) -- loose check.
    hs_bf16 = [h.astype(jnp.bfloat16) for h in hidden_states]
    outs_bf16 = fused_adaptive_layer_heads(
        hs_bf16, adp_weights, w_head, b_head, w_tail, b_tail,
        w_seg, b_seg, special_tokens_mask=special_tokens_mask)
    jax.block_until_ready(outs_bf16)
    for got, want in zip(outs_bf16, refs):
        np.testing.assert_allclose(np.asarray(got), np.asarray(want),
                                   rtol=5e-2, atol=3e-2)

    print("KERNEL_OK")
</pallas_src>

<mosaic_0001>
module attributes {stable_mosaic.version = 11 : i64} {
  func.func @kernel(%arg0: i32, %arg1: i32, %arg2: memref<1x256x32xf32, #tpu.memory_space<vmem>>, %arg3: memref<1x256x32xf32, #tpu.memory_space<vmem>>, %arg4: memref<1x256x32xf32, #tpu.memory_space<vmem>>, %arg5: memref<1x256x32xf32, #tpu.memory_space<vmem>>, %arg6: memref<1x256x32xf32, #tpu.memory_space<vmem>>, %arg7: memref<1x256x32xf32, #tpu.memory_space<vmem>>, %arg8: memref<1x256x32xf32, #tpu.memory_space<vmem>>, %arg9: memref<1x256x32xf32, #tpu.memory_space<vmem>>, %arg10: memref<1x256x32xf32, #tpu.memory_space<vmem>>, %arg11: memref<1x256x32xf32, #tpu.memory_space<vmem>>, %arg12: memref<1x256x32xf32, #tpu.memory_space<vmem>>, %arg13: memref<1x256x32xf32, #tpu.memory_space<vmem>>, %arg14: memref<1x256x32xf32, #tpu.memory_space<vmem>>, %arg15: memref<13x3x32xf32, #tpu.memory_space<vmem>>, %arg16: memref<3x1xf32, #tpu.memory_space<vmem>>, %arg17: memref<1x3x256xf32, #tpu.memory_space<vmem>>) attributes {dimension_semantics = [#tpu.dimension_semantics<parallel>, #tpu.dimension_semantics<parallel>], iteration_bounds = array<i64: 2, 1>, scalar_prefetch = 0 : i64, scratch_operands = 0 : i64, tpu.core_type = #tpu.core_type<tc>, window_params = [{transform_indices = @transform_0, window_bounds = array<i64: 1, 256, 32>}, {transform_indices = @transform_1, window_bounds = array<i64: 1, 256, 32>}, {transform_indices = @transform_2, window_bounds = array<i64: 1, 256, 32>}, {transform_indices = @transform_3, window_bounds = array<i64: 1, 256, 32>}, {transform_indices = @transform_4, window_bounds = array<i64: 1, 256, 32>}, {transform_indices = @transform_5, window_bounds = array<i64: 1, 256, 32>}, {transform_indices = @transform_6, window_bounds = array<i64: 1, 256, 32>}, {transform_indices = @transform_7, window_bounds = array<i64: 1, 256, 32>}, {transform_indices = @transform_8, window_bounds = array<i64: 1, 256, 32>}, {transform_indices = @transform_9, window_bounds = array<i64: 1, 256, 32>}, {transform_indices = @transform_10, window_bounds = array<i64: 1, 256, 32>}, {transform_indices = @transform_11, window_bounds = array<i64: 1, 256, 32>}, {transform_indices = @transform_12, window_bounds = array<i64: 1, 256, 32>}, {pipeline_mode = #tpu.pipeline_mode<synchronous>, transform_indices = @transform_13, window_bounds = array<i64: 13, 3, 32>}, {pipeline_mode = #tpu.pipeline_mode<synchronous>, transform_indices = @transform_14, window_bounds = array<i64: 3, 1>}, {transform_indices = @transform_15, window_bounds = array<i64: 1, 3, 256>}]} {
    %c0 = arith.constant 0 : index
    %c0_0 = arith.constant 0 : index
    %c0_1 = arith.constant 0 : index
    %0 = vector.load %arg15[%c0, %c0_0, %c0_1] : memref<13x3x32xf32, #tpu.memory_space<vmem>>, vector<1x3x32xf32>
    %1 = vector.shape_cast %0 : vector<1x3x32xf32> to vector<3x32xf32>
    %c0_2 = arith.constant 0 : index
    %c0_3 = arith.constant 0 : index
    %c0_4 = arith.constant 0 : index
    %2 = vector.load %arg2[%c0_2, %c0_3, %c0_4] : memref<1x256x32xf32, #tpu.memory_space<vmem>>, vector<1x256x32xf32>
    %3 = vector.shape_cast %2 : vector<1x256x32xf32> to vector<256x32xf32>
    %cst = arith.constant dense<0.000000e+00> : vector<3x256xf32>
    %4 = tpu.matmul %1, %3, %cst {dimension_numbers = #tpu.dot_dimension_numbers<[1], [1], [0], [0], [0, 0, 1, 0], [], []>} : vector<3x32xf32>, vector<256x32xf32>, vector<3x256xf32> -> vector<3x256xf32>
    %c1 = arith.constant 1 : index
    %c0_5 = arith.constant 0 : index
    %c0_6 = arith.constant 0 : index
    %5 = vector.load %arg15[%c1, %c0_5, %c0_6] : memref<13x3x32xf32, #tpu.memory_space<vmem>>, vector<1x3x32xf32>
    %6 = vector.shape_cast %5 : vector<1x3x32xf32> to vector<3x32xf32>
    %c0_7 = arith.constant 0 : index
    %c0_8 = arith.constant 0 : index
    %c0_9 = arith.constant 0 : index
    %7 = vector.load %arg3[%c0_7, %c0_8, %c0_9] : memref<1x256x32xf32, #tpu.memory_space<vmem>>, vector<1x256x32xf32>
    %8 = vector.shape_cast %7 : vector<1x256x32xf32> to vector<256x32xf32>
    %cst_10 = arith.constant dense<0.000000e+00> : vector<3x256xf32>
    %9 = tpu.matmul %6, %8, %cst_10 {dimension_numbers = #tpu.dot_dimension_numbers<[1], [1], [0], [0], [0, 0, 1, 0], [], []>} : vector<3x32xf32>, vector<256x32xf32>, vector<3x256xf32> -> vector<3x256xf32>
    %10 = arith.addf %4, %9 : vector<3x256xf32>
    %c2 = arith.constant 2 : index
    %c0_11 = arith.constant 0 : index
    %c0_12 = arith.constant 0 : index
    %11 = vector.load %arg15[%c2, %c0_11, %c0_12] : memref<13x3x32xf32, #tpu.memory_space<vmem>>, vector<1x3x32xf32>
    %12 = vector.shape_cast %11 : vector<1x3x32xf32> to vector<3x32xf32>
    %c0_13 = arith.constant 0 : index
    %c0_14 = arith.constant 0 : index
    %c0_15 = arith.constant 0 : index
    %13 = vector.load %arg4[%c0_13, %c0_14, %c0_15] : memref<1x256x32xf32, #tpu.memory_space<vmem>>, vector<1x256x32xf32>
    %14 = vector.shape_cast %13 : vector<1x256x32xf32> to vector<256x32xf32>
    %cst_16 = arith.constant dense<0.000000e+00> : vector<3x256xf32>
    %15 = tpu.matmul %12, %14, %cst_16 {dimension_numbers = #tpu.dot_dimension_numbers<[1], [1], [0], [0], [0, 0, 1, 0], [], []>} : vector<3x32xf32>, vector<256x32xf32>, vector<3x256xf32> -> vector<3x256xf32>
    %16 = arith.addf %10, %15 : vector<3x256xf32>
    %c3 = arith.constant 3 : index
    %c0_17 = arith.constant 0 : index
    %c0_18 = arith.constant 0 : index
    %17 = vector.load %arg15[%c3, %c0_17, %c0_18] : memref<13x3x32xf32, #tpu.memory_space<vmem>>, vector<1x3x32xf32>
    %18 = vector.shape_cast %17 : vector<1x3x32xf32> to vector<3x32xf32>
    %c0_19 = arith.constant 0 : index
    %c0_20 = arith.constant 0 : index
    %c0_21 = arith.constant 0 : index
    %19 = vector.load %arg5[%c0_19, %c0_20, %c0_21] : memref<1x256x32xf32, #tpu.memory_space<vmem>>, vector<1x256x32xf32>
    %20 = vector.shape_cast %19 : vector<1x256x32xf32> to vector<256x32xf32>
    %cst_22 = arith.constant dense<0.000000e+00> : vector<3x256xf32>
    %21 = tpu.matmul %18, %20, %cst_22 {dimension_numbers = #tpu.dot_dimension_numbers<[1], [1], [0], [0], [0, 0, 1, 0], [], []>} : vector<3x32xf32>, vector<256x32xf32>, vector<3x256xf32> -> vector<3x256xf32>
    %22 = arith.addf %16, %21 : vector<3x256xf32>
    %c4 = arith.constant 4 : index
    %c0_23 = arith.constant 0 : index
    %c0_24 = arith.constant 0 : index
    %23 = vector.load %arg15[%c4, %c0_23, %c0_24] : memref<13x3x32xf32, #tpu.memory_space<vmem>>, vector<1x3x32xf32>
    %24 = vector.shape_cast %23 : vector<1x3x32xf32> to vector<3x32xf32>
    %c0_25 = arith.constant 0 : index
    %c0_26 = arith.constant 0 : index
    %c0_27 = arith.constant 0 : index
    %25 = vector.load %arg6[%c0_25, %c0_26, %c0_27] : memref<1x256x32xf32, #tpu.memory_space<vmem>>, vector<1x256x32xf32>
    %26 = vector.shape_cast %25 : vector<1x256x32xf32> to vector<256x32xf32>
    %cst_28 = arith.constant dense<0.000000e+00> : vector<3x256xf32>
    %27 = tpu.matmul %24, %26, %cst_28 {dimension_numbers = #tpu.dot_dimension_numbers<[1], [1], [0], [0], [0, 0, 1, 0], [], []>} : vector<3x32xf32>, vector<256x32xf32>, vector<3x256xf32> -> vector<3x256xf32>
    %28 = arith.addf %22, %27 : vector<3x256xf32>
    %c5 = arith.constant 5 : index
    %c0_29 = arith.constant 0 : index
    %c0_30 = arith.constant 0 : index
    %29 = vector.load %arg15[%c5, %c0_29, %c0_30] : memref<13x3x32xf32, #tpu.memory_space<vmem>>, vector<1x3x32xf32>
    %30 = vector.shape_cast %29 : vector<1x3x32xf32> to vector<3x32xf32>
    %c0_31 = arith.constant 0 : index
    %c0_32 = arith.constant 0 : index
    %c0_33 = arith.constant 0 : index
    %31 = vector.load %arg7[%c0_31, %c0_32, %c0_33] : memref<1x256x32xf32, #tpu.memory_space<vmem>>, vector<1x256x32xf32>
    %32 = vector.shape_cast %31 : vector<1x256x32xf32> to vector<256x32xf32>
    %cst_34 = arith.constant dense<0.000000e+00> : vector<3x256xf32>
    %33 = tpu.matmul %30, %32, %cst_34 {dimension_numbers = #tpu.dot_dimension_numbers<[1], [1], [0], [0], [0, 0, 1, 0], [], []>} : vector<3x32xf32>, vector<256x32xf32>, vector<3x256xf32> -> vector<3x256xf32>
    %34 = arith.addf %28, %33 : vector<3x256xf32>
    %c6 = arith.constant 6 : index
    %c0_35 = arith.constant 0 : index
    %c0_36 = arith.constant 0 : index
    %35 = vector.load %arg15[%c6, %c0_35, %c0_36] : memref<13x3x32xf32, #tpu.memory_space<vmem>>, vector<1x3x32xf32>
    %36 = vector.shape_cast %35 : vector<1x3x32xf32> to vector<3x32xf32>
    %c0_37 = arith.constant 0 : index
    %c0_38 = arith.constant 0 : index
    %c0_39 = arith.constant 0 : index
    %37 = vector.load %arg8[%c0_37, %c0_38, %c0_39] : memref<1x256x32xf32, #tpu.memory_space<vmem>>, vector<1x256x32xf32>
    %38 = vector.shape_cast %37 : vector<1x256x32xf32> to vector<256x32xf32>
    %cst_40 = arith.constant dense<0.000000e+00> : vector<3x256xf32>
    %39 = tpu.matmul %36, %38, %cst_40 {dimension_numbers = #tpu.dot_dimension_numbers<[1], [1], [0], [0], [0, 0, 1, 0], [], []>} : vector<3x32xf32>, vector<256x32xf32>, vector<3x256xf32> -> vector<3x256xf32>
    %40 = arith.addf %34, %39 : vector<3x256xf32>
    %c7 = arith.constant 7 : index
    %c0_41 = arith.constant 0 : index
    %c0_42 = arith.constant 0 : index
    %41 = vector.load %arg15[%c7, %c0_41, %c0_42] : memref<13x3x32xf32, #tpu.memory_space<vmem>>, vector<1x3x32xf32>
    %42 = vector.shape_cast %41 : vector<1x3x32xf32> to vector<3x32xf32>
    %c0_43 = arith.constant 0 : index
    %c0_44 = arith.constant 0 : index
    %c0_45 = arith.constant 0 : index
    %43 = vector.load %arg9[%c0_43, %c0_44, %c0_45] : memref<1x256x32xf32, #tpu.memory_space<vmem>>, vector<1x256x32xf32>
    %44 = vector.shape_cast %43 : vector<1x256x32xf32> to vector<256x32xf32>
    %cst_46 = arith.constant dense<0.000000e+00> : vector<3x256xf32>
    %45 = tpu.matmul %42, %44, %cst_46 {dimension_numbers = #tpu.dot_dimension_numbers<[1], [1], [0], [0], [0, 0, 1, 0], [], []>} : vector<3x32xf32>, vector<256x32xf32>, vector<3x256xf32> -> vector<3x256xf32>
    %46 = arith.addf %40, %45 : vector<3x256xf32>
    %c8 = arith.constant 8 : index
    %c0_47 = arith.constant 0 : index
    %c0_48 = arith.constant 0 : index
    %47 = vector.load %arg15[%c8, %c0_47, %c0_48] : memref<13x3x32xf32, #tpu.memory_space<vmem>>, vector<1x3x32xf32>
    %48 = vector.shape_cast %47 : vector<1x3x32xf32> to vector<3x32xf32>
    %c0_49 = arith.constant 0 : index
    %c0_50 = arith.constant 0 : index
    %c0_51 = arith.constant 0 : index
    %49 = vector.load %arg10[%c0_49, %c0_50, %c0_51] : memref<1x256x32xf32, #tpu.memory_space<vmem>>, vector<1x256x32xf32>
    %50 = vector.shape_cast %49 : vector<1x256x32xf32> to vector<256x32xf32>
    %cst_52 = arith.constant dense<0.000000e+00> : vector<3x256xf32>
    %51 = tpu.matmul %48, %50, %cst_52 {dimension_numbers = #tpu.dot_dimension_numbers<[1], [1], [0], [0], [0, 0, 1, 0], [], []>} : vector<3x32xf32>, vector<256x32xf32>, vector<3x256xf32> -> vector<3x256xf32>
    %52 = arith.addf %46, %51 : vector<3x256xf32>
    %c9 = arith.constant 9 : index
    %c0_53 = arith.constant 0 : index
    %c0_54 = arith.constant 0 : index
    %53 = vector.load %arg15[%c9, %c0_53, %c0_54] : memref<13x3x32xf32, #tpu.memory_space<vmem>>, vector<1x3x32xf32>
    %54 = vector.shape_cast %53 : vector<1x3x32xf32> to vector<3x32xf32>
    %c0_55 = arith.constant 0 : index
    %c0_56 = arith.constant 0 : index
    %c0_57 = arith.constant 0 : index
    %55 = vector.load %arg11[%c0_55, %c0_56, %c0_57] : memref<1x256x32xf32, #tpu.memory_space<vmem>>, vector<1x256x32xf32>
    %56 = vector.shape_cast %55 : vector<1x256x32xf32> to vector<256x32xf32>
    %cst_58 = arith.constant dense<0.000000e+00> : vector<3x256xf32>
    %57 = tpu.matmul %54, %56, %cst_58 {dimension_numbers = #tpu.dot_dimension_numbers<[1], [1], [0], [0], [0, 0, 1, 0], [], []>} : vector<3x32xf32>, vector<256x32xf32>, vector<3x256xf32> -> vector<3x256xf32>
    %58 = arith.addf %52, %57 : vector<3x256xf32>
    %c10 = arith.constant 10 : index
    %c0_59 = arith.constant 0 : index
    %c0_60 = arith.constant 0 : index
    %59 = vector.load %arg15[%c10, %c0_59, %c0_60] : memref<13x3x32xf32, #tpu.memory_space<vmem>>, vector<1x3x32xf32>
    %60 = vector.shape_cast %59 : vector<1x3x32xf32> to vector<3x32xf32>
    %c0_61 = arith.constant 0 : index
    %c0_62 = arith.constant 0 : index
    %c0_63 = arith.constant 0 : index
    %61 = vector.load %arg12[%c0_61, %c0_62, %c0_63] : memref<1x256x32xf32, #tpu.memory_space<vmem>>, vector<1x256x32xf32>
    %62 = vector.shape_cast %61 : vector<1x256x32xf32> to vector<256x32xf32>
    %cst_64 = arith.constant dense<0.000000e+00> : vector<3x256xf32>
    %63 = tpu.matmul %60, %62, %cst_64 {dimension_numbers = #tpu.dot_dimension_numbers<[1], [1], [0], [0], [0, 0, 1, 0], [], []>} : vector<3x32xf32>, vector<256x32xf32>, vector<3x256xf32> -> vector<3x256xf32>
    %64 = arith.addf %58, %63 : vector<3x256xf32>
    %c11 = arith.constant 11 : index
    %c0_65 = arith.constant 0 : index
    %c0_66 = arith.constant 0 : index
    %65 = vector.load %arg15[%c11, %c0_65, %c0_66] : memref<13x3x32xf32, #tpu.memory_space<vmem>>, vector<1x3x32xf32>
    %66 = vector.shape_cast %65 : vector<1x3x32xf32> to vector<3x32xf32>
    %c0_67 = arith.constant 0 : index
    %c0_68 = arith.constant 0 : index
    %c0_69 = arith.constant 0 : index
    %67 = vector.load %arg13[%c0_67, %c0_68, %c0_69] : memref<1x256x32xf32, #tpu.memory_space<vmem>>, vector<1x256x32xf32>
    %68 = vector.shape_cast %67 : vector<1x256x32xf32> to vector<256x32xf32>
    %cst_70 = arith.constant dense<0.000000e+00> : vector<3x256xf32>
    %69 = tpu.matmul %66, %68, %cst_70 {dimension_numbers = #tpu.dot_dimension_numbers<[1], [1], [0], [0], [0, 0, 1, 0], [], []>} : vector<3x32xf32>, vector<256x32xf32>, vector<3x256xf32> -> vector<3x256xf32>
    %70 = arith.addf %64, %69 : vector<3x256xf32>
    %c12 = arith.constant 12 : index
    %c0_71 = arith.constant 0 : index
    %c0_72 = arith.constant 0 : index
    %71 = vector.load %arg15[%c12, %c0_71, %c0_72] : memref<13x3x32xf32, #tpu.memory_space<vmem>>, vector<1x3x32xf32>
    %72 = vector.shape_cast %71 : vector<1x3x32xf32> to vector<3x32xf32>
    %c0_73 = arith.constant 0 : index
    %c0_74 = arith.constant 0 : index
    %c0_75 = arith.constant 0 : index
    %73 = vector.load %arg14[%c0_73, %c0_74, %c0_75] : memref<1x256x32xf32, #tpu.memory_space<vmem>>, vector<1x256x32xf32>
    %74 = vector.shape_cast %73 : vector<1x256x32xf32> to vector<256x32xf32>
    %cst_76 = arith.constant dense<0.000000e+00> : vector<3x256xf32>
    %75 = tpu.matmul %72, %74, %cst_76 {dimension_numbers = #tpu.dot_dimension_numbers<[1], [1], [0], [0], [0, 0, 1, 0], [], []>} : vector<3x32xf32>, vector<256x32xf32>, vector<3x256xf32> -> vector<3x256xf32>
    %76 = arith.addf %70, %75 : vector<3x256xf32>
    %c0_77 = arith.constant 0 : index
    %c0_78 = arith.constant 0 : index
    %77 = vector.load %arg16[%c0_77, %c0_78] : memref<3x1xf32, #tpu.memory_space<vmem>>, vector<3x1xf32>
    %78 = vector.broadcast %77 : vector<3x1xf32> to vector<3x256xf32>
    %79 = arith.addf %76, %78 : vector<3x256xf32>
    %c0_79 = arith.constant 0 : index
    %c0_80 = arith.constant 0 : index
    %c0_81 = arith.constant 0 : index
    %80 = vector.load %arg17[%c0_79, %c0_80, %c0_81] : memref<1x3x256xf32, #tpu.memory_space<vmem>>, vector<1x3x256xf32>
    %81 = vector.shape_cast %80 : vector<1x3x256xf32> to vector<3x256xf32>
    %82 = vector.shape_cast %79 : vector<3x256xf32> to vector<1x3x256xf32>
    tpu.vector_store %arg17[%c0_79, %c0_80, %c0_81], %82 {strides = array<i32>} : memref<1x3x256xf32, #tpu.memory_space<vmem>>, vector<1x3x256xf32>,
    return
  }
  func.func @transform_0(%arg0: i32, %arg1: i32) -> (i32, i32, i32) {
    %c0_i32 = arith.constant 0 : i32
    %c0_i32_0 = arith.constant 0 : i32
    return %arg0, %arg1, %c0_i32 : i32, i32, i32
  }
  func.func @transform_1(%arg0: i32, %arg1: i32) -> (i32, i32, i32) {
    %c0_i32 = arith.constant 0 : i32
    %c0_i32_0 = arith.constant 0 : i32
    return %arg0, %arg1, %c0_i32 : i32, i32, i32
  }
  func.func @transform_2(%arg0: i32, %arg1: i32) -> (i32, i32, i32) {
    %c0_i32 = arith.constant 0 : i32
    %c0_i32_0 = arith.constant 0 : i32
    return %arg0, %arg1, %c0_i32 : i32, i32, i32
  }
  func.func @transform_3(%arg0: i32, %arg1: i32) -> (i32, i32, i32) {
    %c0_i32 = arith.constant 0 : i32
    %c0_i32_0 = arith.constant 0 : i32
    return %arg0, %arg1, %c0_i32 : i32, i32, i32
  }
  func.func @transform_4(%arg0: i32, %arg1: i32) -> (i32, i32, i32) {
    %c0_i32 = arith.constant 0 : i32
    %c0_i32_0 = arith.constant 0 : i32
    return %arg0, %arg1, %c0_i32 : i32, i32, i32
  }
  func.func @transform_5(%arg0: i32, %arg1: i32) -> (i32, i32, i32) {
    %c0_i32 = arith.constant 0 : i32
    %c0_i32_0 = arith.constant 0 : i32
    return %arg0, %arg1, %c0_i32 : i32, i32, i32
  }
  func.func @transform_6(%arg0: i32, %arg1: i32) -> (i32, i32, i32) {
    %c0_i32 = arith.constant 0 : i32
    %c0_i32_0 = arith.constant 0 : i32
    return %arg0, %arg1, %c0_i32 : i32, i32, i32
  }
  func.func @transform_7(%arg0: i32, %arg1: i32) -> (i32, i32, i32) {
    %c0_i32 = arith.constant 0 : i32
    %c0_i32_0 = arith.constant 0 : i32
    return %arg0, %arg1, %c0_i32 : i32, i32, i32
  }
  func.func @transform_8(%arg0: i32, %arg1: i32) -> (i32, i32, i32) {
    %c0_i32 = arith.constant 0 : i32
    %c0_i32_0 = arith.constant 0 : i32
    return %arg0, %arg1, %c0_i32 : i32, i32, i32
  }
  func.func @transform_9(%arg0: i32, %arg1: i32) -> (i32, i32, i32) {
    %c0_i32 = arith.constant 0 : i32
    %c0_i32_0 = arith.constant 0 : i32
    return %arg0, %arg1, %c0_i32 : i32, i32, i32
  }
  func.func @transform_10(%arg0: i32, %arg1: i32) -> (i32, i32, i32) {
    %c0_i32 = arith.constant 0 : i32
    %c0_i32_0 = arith.constant 0 : i32
    return %arg0, %arg1, %c0_i32 : i32, i32, i32
  }
  func.func @transform_11(%arg0: i32, %arg1: i32) -> (i32, i32, i32) {
    %c0_i32 = arith.constant 0 : i32
    %c0_i32_0 = arith.constant 0 : i32
    return %arg0, %arg1, %c0_i32 : i32, i32, i32
  }
  func.func @transform_12(%arg0: i32, %arg1: i32) -> (i32, i32, i32) {
    %c0_i32 = arith.constant 0 : i32
    %c0_i32_0 = arith.constant 0 : i32
    return %arg0, %arg1, %c0_i32 : i32, i32, i32
  }
  func.func @transform_13(%arg0: i32, %arg1: i32) -> (i32, i32, i32) {
    %c0_i32 = arith.constant 0 : i32
    %c0_i32_0 = arith.constant 0 : i32
    %c0_i32_1 = arith.constant 0 : i32
    %c0_i32_2 = arith.constant 0 : i32
    return %c0_i32, %c0_i32_0, %c0_i32_1 : i32, i32, i32
  }
  func.func @transform_14(%arg0: i32, %arg1: i32) -> (i32, i32) {
    %c0_i32 = arith.constant 0 : i32
    %c0_i32_0 = arith.constant 0 : i32
    %c0_i32_1 = arith.constant 0 : i32
    return %c0_i32, %c0_i32_0 : i32, i32
  }
  func.func @transform_15(%arg0: i32, %arg1: i32) -> (i32, i32, i32) {
    %c0_i32 = arith.constant 0 : i32
    %c0_i32_0 = arith.constant 0 : i32
    return %arg0, %c0_i32, %arg1 : i32, i32, i32
  }
}

</mosaic_0001>

<llo_original>
// kernel: tpu_custom_call.1
$region0: #{tpu_custom_call.1}
  #allocation0 [shape = 'u32[]', space=smem, size = 0x4, offset = 0x4, fixed_abs, tag = 'smem constant byte address 0x4 - core index']
  #allocation1 [shape = 'u32[144,128]{1,0:T(1,128)}', space=vmem, size = 0x12000, scoped, tag = 'internal scratch']
  %s0 = inlined_call_operand.vmem [shape: f32[2,256,32], index: 0, kind: input, shape index: {}]
  %s1 = inlined_call_operand.vmem [shape: f32[2,256,32], index: 1, kind: input, shape index: {}]
  %s2 = inlined_call_operand.vmem [shape: f32[2,256,32], index: 2, kind: input, shape index: {}]
  %s3 = inlined_call_operand.vmem [shape: f32[2,256,32], index: 3, kind: input, shape index: {}]
  %s4 = inlined_call_operand.vmem [shape: f32[2,256,32], index: 4, kind: input, shape index: {}]
  %s5 = inlined_call_operand.vmem [shape: f32[2,256,32], index: 5, kind: input, shape index: {}]
  %s6 = inlined_call_operand.vmem [shape: f32[2,256,32], index: 6, kind: input, shape index: {}]
  %s7 = inlined_call_operand.vmem [shape: f32[2,256,32], index: 7, kind: input, shape index: {}]
  %s8 = inlined_call_operand.vmem [shape: f32[2,256,32], index: 8, kind: input, shape index: {}]
  %s9 = inlined_call_operand.vmem [shape: f32[2,256,32], index: 9, kind: input, shape index: {}]
  %s10 = inlined_call_operand.vmem [shape: f32[2,256,32], index: 10, kind: input, shape index: {}]
  %s11 = inlined_call_operand.vmem [shape: f32[2,256,32], index: 11, kind: input, shape index: {}]
  %s12 = inlined_call_operand.vmem [shape: f32[2,256,32], index: 12, kind: input, shape index: {}]
  %s13 = inlined_call_operand.vmem [shape: f32[13,3,32], index: 13, kind: input, shape index: {}]
  %s14 = inlined_call_operand.vmem [shape: f32[3,1], index: 14, kind: input, shape index: {}]
  %s15 = inlined_call_operand.vmem [shape: f32[2,3,256], index: 15, kind: output, shape index: {}]
  %s16 = sld [smem:[#allocation0]]
  $region93: #{tpu_custom_call.1} parent=0
    _
  %s18 = ssub.s32 1, %s16
  %s19 = scalar_select 0, %s18, %s16
  loop: start=0, step=1, limit=4
  $region2: #{tpu_custom_call.1} parent=0 // loop_pre_header
    _
  $region3: #{tpu_custom_call.1} parent=0 // loop_header
    %s21 = sphi 0, %s25
    %p22 = scmp.ge.s32.totalorder %s21, 4
    %s28 = sphi 0, %s40
    %s29 = sphi 0, %s36
    %s30 = sphi 0, %s28
    %s31 = sphi 0, %s29
    %s32 = sphi 0, %s30
    %s33 = sphi 0, %s31
    %s45 = sphi 0, %s47
    %s48 = sphi 0, %s45
    %s49 = sphi 0, %s48
    %s65 = sphi 0, %s49
    %s73 = sphi 0, %s75
    %s76 = sphi 0, %s73
    %s77 = sphi 0, %s76
    %s93 = sphi 0, %s77
    %s101 = sphi 0, %s103
    %s104 = sphi 0, %s101
    %s105 = sphi 0, %s104
    %s121 = sphi 0, %s105
    %s129 = sphi 0, %s131
    %s132 = sphi 0, %s129
    %s133 = sphi 0, %s132
    %s149 = sphi 0, %s133
    %s157 = sphi 0, %s159
    %s160 = sphi 0, %s157
    %s161 = sphi 0, %s160
    %s177 = sphi 0, %s161
    %s185 = sphi 0, %s187
    %s188 = sphi 0, %s185
    %s189 = sphi 0, %s188
    %s205 = sphi 0, %s189
    %s213 = sphi 0, %s215
    %s216 = sphi 0, %s213
    %s217 = sphi 0, %s216
    %s233 = sphi 0, %s217
    %s241 = sphi 0, %s243
    %s244 = sphi 0, %s241
    %s245 = sphi 0, %s244
    %s261 = sphi 0, %s245
    %s269 = sphi 0, %s271
    %s272 = sphi 0, %s269
    %s273 = sphi 0, %s272
    %s289 = sphi 0, %s273
    %s297 = sphi 0, %s299
    %s300 = sphi 0, %s297
    %s301 = sphi 0, %s300
    %s317 = sphi 0, %s301
    %s325 = sphi 0, %s327
    %s328 = sphi 0, %s325
    %s329 = sphi 0, %s328
    %s345 = sphi 0, %s329
    %s353 = sphi 0, %s355
    %s356 = sphi 0, %s353
    %s357 = sphi 0, %s356
    %s373 = sphi 0, %s357
    %s381 = sphi 0, %s383
    %s384 = sphi 0, %s381
    %s385 = sphi 0, %s384
    %s401 = sphi 0, %s385
    %s405 = sphi 0, %s405
    %s407 = sphi 0, %s405
    %s408 = sphi 0, %s407
    %s422 = sphi 0, %s408
    %s426 = sphi 0, %s426
    %s428 = sphi 0, %s426
    %s429 = sphi 0, %s428
    %s443 = sphi 0, %s429
    %s451 = sphi 0, %s453
    %s454 = sphi 0, %s451
    %s455 = sphi 0, %s454
    %s471 = sphi 0, %s455
  $region4: #{tpu_custom_call.1} parent=0 // loop_header_branch
    %24 = sbr.rel (%p22) target = $region8
  $region5: #{tpu_custom_call.1} parent=0 // loop_body
    %s26 = ssub.s32 %s21, 1
    %s27 = ssub.s32 %s21, 2
    %s34 = sadd.s32 1, %s29
    %p35 = scmp.ge.s32.totalorder %s34, 1
    %s36 = scalar_select %p35, 0, %s34
    %s37 = sadd.s32 1, %s28
    %s38 = scalar_select %p35, %s37, %s28
    %p39 = scmp.ge.s32.totalorder %s38, 2
    %s40 = scalar_select %p39, 0, %s38
    %s41 = ssub.s32 %s28, %s40
    %s42 = ssub.s32 %s29, %s36
    %s43 = sor.u32 %s41, %s42
    %p44 = scmp.eq.s32.totalorder %s43, 0
    %s46 = sadd.s32 %s45, 1
    %s47 = scalar_select %p44, %s45, %s46
    %p50 = pneg %p44
    %p51 = scmp.eq.s32.totalorder %s21, 1
    %p52 = por %p50, %p51
    %p53 = scmp.ne.s32.totalorder %s45, %s48
    %p54 = scmp.eq.s32.totalorder %s21, 0
    %p55 = por %p53, %p54
    %p56 = scmp.ne.s32.totalorder %s45, %s48
    %p57 = scmp.eq.s32.totalorder %s26, 1
    %p58 = por %p56, %p57
    %p59 = scmp.ne.s32.totalorder %s48, %s49
    %p60 = scmp.eq.s32.totalorder %s26, 0
    %p61 = por %p59, %p60
    %p62 = scmp.ne.s32.totalorder %s48, %s49
    %p63 = scmp.eq.s32.totalorder %s27, 1
    %p64 = por %p62, %p63
    %p66 = scmp.ne.s32.totalorder %s49, %s65
    %p67 = scmp.eq.s32.totalorder %s27, 0
    %p68 = por %p66, %p67
    %s69 = ssub.s32 %s28, %s40
    %s70 = ssub.s32 %s29, %s36
    %s71 = sor.u32 %s69, %s70
    %p72 = scmp.eq.s32.totalorder %s71, 0
    %s74 = sadd.s32 %s73, 1
    %s75 = scalar_select %p72, %s73, %s74
    %p78 = pneg %p72
    %p79 = scmp.eq.s32.totalorder %s21, 1
    %p80 = por %p78, %p79
    %p81 = scmp.ne.s32.totalorder %s73, %s76
    %p82 = scmp.eq.s32.totalorder %s21, 0
    %p83 = por %p81, %p82
    %p84 = scmp.ne.s32.totalorder %s73, %s76
    %p85 = scmp.eq.s32.totalorder %s26, 1
    %p86 = por %p84, %p85
    %p87 = scmp.ne.s32.totalorder %s76, %s77
    %p88 = scmp.eq.s32.totalorder %s26, 0
    %p89 = por %p87, %p88
    %p90 = scmp.ne.s32.totalorder %s76, %s77
    %p91 = scmp.eq.s32.totalorder %s27, 1
    %p92 = por %p90, %p91
    %p94 = scmp.ne.s32.totalorder %s77, %s93
    %p95 = scmp.eq.s32.totalorder %s27, 0
    %p96 = por %p94, %p95
    %s97 = ssub.s32 %s28, %s40
    %s98 = ssub.s32 %s29, %s36
    %s99 = sor.u32 %s97, %s98
    %p100 = scmp.eq.s32.totalorder %s99, 0
    %s102 = sadd.s32 %s101, 1
    %s103 = scalar_select %p100, %s101, %s102
    %p106 = pneg %p100
    %p107 = scmp.eq.s32.totalorder %s21, 1
    %p108 = por %p106, %p107
    %p109 = scmp.ne.s32.totalorder %s101, %s104
    %p110 = scmp.eq.s32.totalorder %s21, 0
    %p111 = por %p109, %p110
    %p112 = scmp.ne.s32.totalorder %s101, %s104
    %p113 = scmp.eq.s32.totalorder %s26, 1
    %p114 = por %p112, %p113
    %p115 = scmp.ne.s32.totalorder %s104, %s105
    %p116 = scmp.eq.s32.totalorder %s26, 0
    %p117 = por %p115, %p116
    %p118 = scmp.ne.s32.totalorder %s104, %s105
    %p119 = scmp.eq.s32.totalorder %s27, 1
    %p120 = por %p118, %p119
    %p122 = scmp.ne.s32.totalorder %s105, %s121
    %p123 = scmp.eq.s32.totalorder %s27, 0
    %p124 = por %p122, %p123
    %s125 = ssub.s32 %s28, %s40
    %s126 = ssub.s32 %s29, %s36
    %s127 = sor.u32 %s125, %s126
    %p128 = scmp.eq.s32.totalorder %s127, 0
    %s130 = sadd.s32 %s129, 1
    %s131 = scalar_select %p128, %s129, %s130
    %p134 = pneg %p128
    %p135 = scmp.eq.s32.totalorder %s21, 1
    %p136 = por %p134, %p135
    %p137 = scmp.ne.s32.totalorder %s129, %s132
    %p138 = scmp.eq.s32.totalorder %s21, 0
    %p139 = por %p137, %p138
    %p140 = scmp.ne.s32.totalorder %s129, %s132
    %p141 = scmp.eq.s32.totalorder %s26, 1
    %p142 = por %p140, %p141
    %p143 = scmp.ne.s32.totalorder %s132, %s133
    %p144 = scmp.eq.s32.totalorder %s26, 0
    %p145 = por %p143, %p144
    %p146 = scmp.ne.s32.totalorder %s132, %s133
    %p147 = scmp.eq.s32.totalorder %s27, 1
    %p148 = por %p146, %p147
    %p150 = scmp.ne.s32.totalorder %s133, %s149
    %p151 = scmp.eq.s32.totalorder %s27, 0
    %p152 = por %p150, %p151
    %s153 = ssub.s32 %s28, %s40
    %s154 = ssub.s32 %s29, %s36
    %s155 = sor.u32 %s153, %s154
    %p156 = scmp.eq.s32.totalorder %s155, 0
    %s158 = sadd.s32 %s157, 1
    %s159 = scalar_select %p156, %s157, %s158
    %p162 = pneg %p156
    %p163 = scmp.eq.s32.totalorder %s21, 1
    %p164 = por %p162, %p163
    %p165 = scmp.ne.s32.totalorder %s157, %s160
    %p166 = scmp.eq.s32.totalorder %s21, 0
    %p167 = por %p165, %p166
    %p168 = scmp.ne.s32.totalorder %s157, %s160
    %p169 = scmp.eq.s32.totalorder %s26, 1
    %p170 = por %p168, %p169
    %p171 = scmp.ne.s32.totalorder %s160, %s161
    %p172 = scmp.eq.s32.totalorder %s26, 0
    %p173 = por %p171, %p172
    %p174 = scmp.ne.s32.totalorder %s160, %s161
    %p175 = scmp.eq.s32.totalorder %s27, 1
    %p176 = por %p174, %p175
    %p178 = scmp.ne.s32.totalorder %s161, %s177
    %p179 = scmp.eq.s32.totalorder %s27, 0
    %p180 = por %p178, %p179
    %s181 = ssub.s32 %s28, %s40
    %s182 = ssub.s32 %s29, %s36
    %s183 = sor.u32 %s181, %s182
    %p184 = scmp.eq.s32.totalorder %s183, 0
    %s186 = sadd.s32 %s185, 1
    %s187 = scalar_select %p184, %s185, %s186
    %p190 = pneg %p184
    %p191 = scmp.eq.s32.totalorder %s21, 1
    %p192 = por %p190, %p191
    %p193 = scmp.ne.s32.totalorder %s185, %s188
    %p194 = scmp.eq.s32.totalorder %s21, 0
    %p195 = por %p193, %p194
    %p196 = scmp.ne.s32.totalorder %s185, %s188
    %p197 = scmp.eq.s32.totalorder %s26, 1
    %p198 = por %p196, %p197
    %p199 = scmp.ne.s32.totalorder %s188, %s189
    %p200 = scmp.eq.s32.totalorder %s26, 0
    %p201 = por %p199, %p200
    %p202 = scmp.ne.s32.totalorder %s188, %s189
    %p203 = scmp.eq.s32.totalorder %s27, 1
    %p204 = por %p202, %p203
    %p206 = scmp.ne.s32.totalorder %s189, %s205
    %p207 = scmp.eq.s32.totalorder %s27, 0
    %p208 = por %p206, %p207
    %s209 = ssub.s32 %s28, %s40
    %s210 = ssub.s32 %s29, %s36
    %s211 = sor.u32 %s209, %s210
    %p212 = scmp.eq.s32.totalorder %s211, 0
    %s214 = sadd.s32 %s213, 1
    %s215 = scalar_select %p212, %s213, %s214
    %p218 = pneg %p212
    %p219 = scmp.eq.s32.totalorder %s21, 1
    %p220 = por %p218, %p219
    %p221 = scmp.ne.s32.totalorder %s213, %s216
    %p222 = scmp.eq.s32.totalorder %s21, 0
    %p223 = por %p221, %p222
    %p224 = scmp.ne.s32.totalorder %s213, %s216
    %p225 = scmp.eq.s32.totalorder %s26, 1
    %p226 = por %p224, %p225
    %p227 = scmp.ne.s32.totalorder %s216, %s217
    %p228 = scmp.eq.s32.totalorder %s26, 0
    %p229 = por %p227, %p228
    %p230 = scmp.ne.s32.totalorder %s216, %s217
    %p231 = scmp.eq.s32.totalorder %s27, 1
    %p232 = por %p230, %p231
    %p234 = scmp.ne.s32.totalorder %s217, %s233
    %p235 = scmp.eq.s32.totalorder %s27, 0
    %p236 = por %p234, %p235
    %s237 = ssub.s32 %s28, %s40
    %s238 = ssub.s32 %s29, %s36
    %s239 = sor.u32 %s237, %s238
    %p240 = scmp.eq.s32.totalorder %s239, 0
    %s242 = sadd.s32 %s241, 1
    %s243 = scalar_select %p240, %s241, %s242
    %p246 = pneg %p240
    %p247 = scmp.eq.s32.totalorder %s21, 1
    %p248 = por %p246, %p247
    %p249 = scmp.ne.s32.totalorder %s241, %s244
    %p250 = scmp.eq.s32.totalorder %s21, 0
    %p251 = por %p249, %p250
    %p252 = scmp.ne.s32.totalorder %s241, %s244
    %p253 = scmp.eq.s32.totalorder %s26, 1
    %p254 = por %p252, %p253
    %p255 = scmp.ne.s32.totalorder %s244, %s245
    %p256 = scmp.eq.s32.totalorder %s26, 0
    %p257 = por %p255, %p256
    %p258 = scmp.ne.s32.totalorder %s244, %s245
    %p259 = scmp.eq.s32.totalorder %s27, 1
    %p260 = por %p258, %p259
    %p262 = scmp.ne.s32.totalorder %s245, %s261
    %p263 = scmp.eq.s32.totalorder %s27, 0
    %p264 = por %p262, %p263
    %s265 = ssub.s32 %s28, %s40
    %s266 = ssub.s32 %s29, %s36
    %s267 = sor.u32 %s265, %s266
    %p268 = scmp.eq.s32.totalorder %s267, 0
    %s270 = sadd.s32 %s269, 1
    %s271 = scalar_select %p268, %s269, %s270
    %p274 = pneg %p268
    %p275 = scmp.eq.s32.totalorder %s21, 1
    %p276 = por %p274, %p275
    %p277 = scmp.ne.s32.totalorder %s269, %s272
    %p278 = scmp.eq.s32.totalorder %s21, 0
    %p279 = por %p277, %p278
    %p280 = scmp.ne.s32.totalorder %s269, %s272
    %p281 = scmp.eq.s32.totalorder %s26, 1
    %p282 = por %p280, %p281
    %p283 = scmp.ne.s32.totalorder %s272, %s273
    %p284 = scmp.eq.s32.totalorder %s26, 0
    %p285 = por %p283, %p284
    %p286 = scmp.ne.s32.totalorder %s272, %s273
    %p287 = scmp.eq.s32.totalorder %s27, 1
    %p288 = por %p286, %p287
    %p290 = scmp.ne.s32.totalorder %s273, %s289
    %p291 = scmp.eq.s32.totalorder %s27, 0
    %p292 = por %p290, %p291
    %s293 = ssub.s32 %s28, %s40
    %s294 = ssub.s32 %s29, %s36
    %s295 = sor.u32 %s293, %s294
    %p296 = scmp.eq.s32.totalorder %s295, 0
    %s298 = sadd.s32 %s297, 1
    %s299 = scalar_select %p296, %s297, %s298
    %p302 = pneg %p296
    %p303 = scmp.eq.s32.totalorder %s21, 1
    %p304 = por %p302, %p303
    %p305 = scmp.ne.s32.totalorder %s297, %s300
    %p306 = scmp.eq.s32.totalorder %s21, 0
    %p307 = por %p305, %p306
    %p308 = scmp.ne.s32.totalorder %s297, %s300
    %p309 = scmp.eq.s32.totalorder %s26, 1
    %p310 = por %p308, %p309
    %p311 = scmp.ne.s32.totalorder %s300, %s301
    %p312 = scmp.eq.s32.totalorder %s26, 0
    %p313 = por %p311, %p312
    %p314 = scmp.ne.s32.totalorder %s300, %s301
    %p315 = scmp.eq.s32.totalorder %s27, 1
    %p316 = por %p314, %p315
    %p318 = scmp.ne.s32.totalorder %s301, %s317
    %p319 = scmp.eq.s32.totalorder %s27, 0
    %p320 = por %p318, %p319
    %s321 = ssub.s32 %s28, %s40
    %s322 = ssub.s32 %s29, %s36
    %s323 = sor.u32 %s321, %s322
    %p324 = scmp.eq.s32.totalorder %s323, 0
    %s326 = sadd.s32 %s325, 1
    %s327 = scalar_select %p324, %s325, %s326
    %p330 = pneg %p324
    %p331 = scmp.eq.s32.totalorder %s21, 1
    %p332 = por %p330, %p331
    %p333 = scmp.ne.s32.totalorder %s325, %s328
    %p334 = scmp.eq.s32.totalorder %s21, 0
    %p335 = por %p333, %p334
    %p336 = scmp.ne.s32.totalorder %s325, %s328
    %p337 = scmp.eq.s32.totalorder %s26, 1
    %p338 = por %p336, %p337
    %p339 = scmp.ne.s32.totalorder %s328, %s329
    %p340 = scmp.eq.s32.totalorder %s26, 0
    %p341 = por %p339, %p340
    %p342 = scmp.ne.s32.totalorder %s328, %s329
    %p343 = scmp.eq.s32.totalorder %s27, 1
    %p344 = por %p342, %p343
    %p346 = scmp.ne.s32.totalorder %s329, %s345
    %p347 = scmp.eq.s32.totalorder %s27, 0
    %p348 = por %p346, %p347
    %s349 = ssub.s32 %s28, %s40
    %s350 = ssub.s32 %s29, %s36
    %s351 = sor.u32 %s349, %s350
    %p352 = scmp.eq.s32.totalorder %s351, 0
    %s354 = sadd.s32 %s353, 1
    %s355 = scalar_select %p352, %s353, %s354
    %p358 = pneg %p352
    %p359 = scmp.eq.s32.totalorder %s21, 1
    %p360 = por %p358, %p359
    %p361 = scmp.ne.s32.totalorder %s353, %s356
    %p362 = scmp.eq.s32.totalorder %s21, 0
    %p363 = por %p361, %p362
    %p364 = scmp.ne.s32.totalorder %s353, %s356
    %p365 = scmp.eq.s32.totalorder %s26, 1
    %p366 = por %p364, %p365
    %p367 = scmp.ne.s32.totalorder %s356, %s357
    %p368 = scmp.eq.s32.totalorder %s26, 0
    %p369 = por %p367, %p368
    %p370 = scmp.ne.s32.totalorder %s356, %s357
    %p371 = scmp.eq.s32.totalorder %s27, 1
    %p372 = por %p370, %p371
    %p374 = scmp.ne.s32.totalorder %s357, %s373
    %p375 = scmp.eq.s32.totalorder %s27, 0
    %p376 = por %p374, %p375
    %s377 = ssub.s32 %s28, %s40
    %s378 = ssub.s32 %s29, %s36
    %s379 = sor.u32 %s377, %s378
    %p380 = scmp.eq.s32.totalorder %s379, 0
    %s382 = sadd.s32 %s381, 1
    %s383 = scalar_select %p380, %s381, %s382
    %p386 = pneg %p380
    %p387 = scmp.eq.s32.totalorder %s21, 1
    %p388 = por %p386, %p387
    %p389 = scmp.ne.s32.totalorder %s381, %s384
    %p390 = scmp.eq.s32.totalorder %s21, 0
    %p391 = por %p389, %p390
    %p392 = scmp.ne.s32.totalorder %s381, %s384
    %p393 = scmp.eq.s32.totalorder %s26, 1
    %p394 = por %p392, %p393
    %p395 = scmp.ne.s32.totalorder %s384, %s385
    %p396 = scmp.eq.s32.totalorder %s26, 0
    %p397 = por %p395, %p396
    %p398 = scmp.ne.s32.totalorder %s384, %s385
    %p399 = scmp.eq.s32.totalorder %s27, 1
    %p400 = por %p398, %p399
    %p402 = scmp.ne.s32.totalorder %s385, %s401
    %p403 = scmp.eq.s32.totalorder %s27, 0
    %p404 = por %p402, %p403
    %s406 = sadd.s32 %s405, 1
    %p409 = scmp.eq.s32.totalorder %s21, 1
    %p410 = scmp.ne.s32.totalorder %s405, %s407
    %p411 = scmp.eq.s32.totalorder %s21, 0
    %p412 = por %p410, %p411
    %p413 = scmp.ne.s32.totalorder %s405, %s407
    %p414 = scmp.eq.s32.totalorder %s26, 1
    %p415 = por %p413, %p414
    %p416 = scmp.ne.s32.totalorder %s407, %s408
    %p417 = scmp.eq.s32.totalorder %s26, 0
    %p418 = por %p416, %p417
    %p419 = scmp.ne.s32.totalorder %s407, %s408
    %p420 = scmp.eq.s32.totalorder %s27, 1
    %p421 = por %p419, %p420
    %p423 = scmp.ne.s32.totalorder %s408, %s422
    %p424 = scmp.eq.s32.totalorder %s27, 0
    %p425 = por %p423, %p424
    %s427 = sadd.s32 %s426, 1
    %p430 = scmp.eq.s32.totalorder %s21, 1
    %p431 = scmp.ne.s32.totalorder %s426, %s428
    %p432 = scmp.eq.s32.totalorder %s21, 0
    %p433 = por %p431, %p432
    %p434 = scmp.ne.s32.totalorder %s426, %s428
    %p435 = scmp.eq.s32.totalorder %s26, 1
    %p436 = por %p434, %p435
    %p437 = scmp.ne.s32.totalorder %s428, %s429
    %p438 = scmp.eq.s32.totalorder %s26, 0
    %p439 = por %p437, %p438
    %p440 = scmp.ne.s32.totalorder %s428, %s429
    %p441 = scmp.eq.s32.totalorder %s27, 1
    %p442 = por %p440, %p441
    %p444 = scmp.ne.s32.totalorder %s429, %s443
    %p445 = scmp.eq.s32.totalorder %s27, 0
    %p446 = por %p444, %p445
    %s447 = ssub.s32 %s28, %s40
    %s448 = ssub.s32 %s29, %s36
    %s449 = sor.u32 %s447, %s448
    %p450 = scmp.eq.s32.totalorder %s449, 0
    %s452 = sadd.s32 %s451, 1
    %s453 = scalar_select %p450, %s451, %s452
    %p456 = pneg %p450
    %p457 = scmp.eq.s32.totalorder %s21, 1
    %p458 = por %p456, %p457
    %p459 = scmp.ne.s32.totalorder %s451, %s454
    %p460 = scmp.eq.s32.totalorder %s21, 0
    %p461 = por %p459, %p460
    %p462 = scmp.ne.s32.totalorder %s451, %s454
    %p463 = scmp.eq.s32.totalorder %s26, 1
    %p464 = por %p462, %p463
    %p465 = scmp.ne.s32.totalorder %s454, %s455
    %p466 = scmp.eq.s32.totalorder %s26, 0
    %p467 = por %p465, %p466
    %p468 = scmp.ne.s32.totalorder %s454, %s455
    %p469 = scmp.eq.s32.totalorder %s27, 1
    %p470 = por %p468, %p469
    %p472 = scmp.ne.s32.totalorder %s455, %s471
    %p473 = scmp.eq.s32.totalorder %s27, 0
    %p474 = por %p472, %p473
    %p475 = scmp.le.s32.totalorder 1, %s21
    %p476 = scmp.lt.s32.totalorder %s21, 3
    %p477 = pnand %p475, %p476
    %p478 = pneg %p477
    // Predicated region
    $region9: #{tpu_custom_call.1} parent=5 // pred_check
      _
    $region10: #{tpu_custom_call.1} parent=5 // pred_check_branch
      %480 = sbr.rel (%p477) target = $region12
    $region11: #{tpu_custom_call.1} parent=5 // pred_region
      %s481 = ssub.s32 %s21, 1
      // Predicated region
      $region13: #{tpu_custom_call.1} parent=11 // pred_check
        %p482 = pneg %p418
      $region14: #{tpu_custom_call.1} parent=11 // pred_check_branch
        %484 = sbr.rel (%p482) target = $region16
      $region15: #{tpu_custom_call.1} parent=11 // pred_region
        _
      $region16: #{tpu_custom_call.1} parent=11 // pred_fallthru
        _
      // Predicated region
      $region17: #{tpu_custom_call.1} parent=11 // pred_check
        %p485 = pneg %p439
      $region18: #{tpu_custom_call.1} parent=11 // pred_check_branch
        %487 = sbr.rel (%p485) target = $region20
      $region19: #{tpu_custom_call.1} parent=11 // pred_region
        _
      $region20: #{tpu_custom_call.1} parent=11 // pred_fallthru
        _
    $region12: #{tpu_custom_call.1} parent=5 // pred_fallthru
      _
    %p488 = scmp.lt.s32.totalorder %s21, 2
    // Predicated region
    $region21: #{tpu_custom_call.1} parent=5 // pred_check
      %p489 = pneg %p488
    $region22: #{tpu_custom_call.1} parent=5 // pred_check_branch
      %491 = sbr.rel (%p489) target = $region24
    $region23: #{tpu_custom_call.1} parent=5 // pred_region
      // Predicated region
      $region25: #{tpu_custom_call.1} parent=23 // pred_check
        %p492 = pneg %p55
      $region26: #{tpu_custom_call.1} parent=23 // pred_check_branch
        %494 = sbr.rel (%p492) target = $region28
      $region27: #{tpu_custom_call.1} parent=23 // pred_region
        %s495 = smul.u32 32, %s29
        %p496 = scmp.lt.s32.totalorder %s28, 1
        %s497 = scalar_select %p496, %s28, 1
        %p498 = scmp.lt.s32.totalorder %s495, 31
        %s499 = scalar_select %p498, %s495, 31
        %s500 = smul.addr %s497, 32
        %s501 = sadd.s32 %s499, %s500
        %s502 = smul.addr %s501, 8
        %s503 = scalar_lea.vmem %s0, %s502
        %s504 = smul.u32 32, %s29
      $region28: #{tpu_custom_call.1} parent=23 // pred_fallthru
        _
      // Predicated region
      $region29: #{tpu_custom_call.1} parent=23 // pred_check
        %p505 = pneg %p83
      $region30: #{tpu_custom_call.1} parent=23 // pred_check_branch
        %507 = sbr.rel (%p505) target = $region32
      $region31: #{tpu_custom_call.1} parent=23 // pred_region
        %s508 = smul.u32 32, %s29
        %p509 = scmp.lt.s32.totalorder %s28, 1
        %s510 = scalar_select %p509, %s28, 1
        %p511 = scmp.lt.s32.totalorder %s508, 31
        %s512 = scalar_select %p511, %s508, 31
        %s513 = smul.addr %s510, 32
        %s514 = sadd.s32 %s512, %s513
        %s515 = smul.addr %s514, 8
        %s516 = scalar_lea.vmem %s1, %s515
        %s517 = smul.u32 32, %s29
      $region32: #{tpu_custom_call.1} parent=23 // pred_fallthru
        _
      // Predicated region
      $region33: #{tpu_custom_call.1} parent=23 // pred_check
        %p518 = pneg %p111
      $region34: #{tpu_custom_call.1} parent=23 // pred_check_branch
        %520 = sbr.rel (%p518) target = $region36
      $region35: #{tpu_custom_call.1} parent=23 // pred_region
        %s521 = smul.u32 32, %s29
        %p522 = scmp.lt.s32.totalorder %s28, 1
        %s523 = scalar_select %p522, %s28, 1
        %p524 = scmp.lt.s32.totalorder %s521, 31
        %s525 = scalar_select %p524, %s521, 31
        %s526 = smul.addr %s523, 32
        %s527 = sadd.s32 %s525, %s526
        %s528 = smul.addr %s527, 8
        %s529 = scalar_lea.vmem %s2, %s528
        %s530 = smul.u32 32, %s29
      $region36: #{tpu_custom_call.1} parent=23 // pred_fallthru
        _
      // Predicated region
      $region37: #{tpu_custom_call.1} parent=23 // pred_check
        %p531 = pneg %p139
      $region38: #{tpu_custom_call.1} parent=23 // pred_check_branch
        %533 = sbr.rel (%p531) target = $region40
      $region39: #{tpu_custom_call.1} parent=23 // pred_region
        %s534 = smul.u32 32, %s29
        %p535 = scmp.lt.s32.totalorder %s28, 1
        %s536 = scalar_select %p535, %s28, 1
        %p537 = scmp.lt.s32.totalorder %s534, 31
        %s538 = scalar_select %p537, %s534, 31
        %s539 = smul.addr %s536, 32
        %s540 = sadd.s32 %s538, %s539
        %s541 = smul.addr %s540, 8
        %s542 = scalar_lea.vmem %s3, %s541
        %s543 = smul.u32 32, %s29
      $region40: #{tpu_custom_call.1} parent=23 // pred_fallthru
        _
      // Predicated region
      $region41: #{tpu_custom_call.1} parent=23 // pred_check
        %p544 = pneg %p167
      $region42: #{tpu_custom_call.1} parent=23 // pred_check_branch
        %546 = sbr.rel (%p544) target = $region44
      $region43: #{tpu_custom_call.1} parent=23 // pred_region
        %s547 = smul.u32 32, %s29
        %p548 = scmp.lt.s32.totalorder %s28, 1
        %s549 = scalar_select %p548, %s28, 1
        %p550 = scmp.lt.s32.totalorder %s547, 31
        %s551 = scalar_select %p550, %s547, 31
        %s552 = smul.addr %s549, 32
        %s553 = sadd.s32 %s551, %s552
        %s554 = smul.addr %s553, 8
        %s555 = scalar_lea.vmem %s4, %s554
        %s556 = smul.u32 32, %s29
      $region44: #{tpu_custom_call.1} parent=23 // pred_fallthru
        _
      // Predicated region
      $region45: #{tpu_custom_call.1} parent=23 // pred_check
        %p557 = pneg %p195
      $region46: #{tpu_custom_call.1} parent=23 // pred_check_branch
        %559 = sbr.rel (%p557) target = $region48
      $region47: #{tpu_custom_call.1} parent=23 // pred_region
        %s560 = smul.u32 32, %s29
        %p561 = scmp.lt.s32.totalorder %s28, 1
        %s562 = scalar_select %p561, %s28, 1
        %p563 = scmp.lt.s32.totalorder %s560, 31
        %s564 = scalar_select %p563, %s560, 31
        %s565 = smul.addr %s562, 32
        %s566 = sadd.s32 %s564, %s565
        %s567 = smul.addr %s566, 8
        %s568 = scalar_lea.vmem %s5, %s567
        %s569 = smul.u32 32, %s29
      $region48: #{tpu_custom_call.1} parent=23 // pred_fallthru
        _
      // Predicated region
      $region49: #{tpu_custom_call.1} parent=23 // pred_check
        %p570 = pneg %p223
      $region50: #{tpu_custom_call.1} parent=23 // pred_check_branch
        %572 = sbr.rel (%p570) target = $region52
      $region51: #{tpu_custom_call.1} parent=23 // pred_region
        %s573 = smul.u32 32, %s29
        %p574 = scmp.lt.s32.totalorder %s28, 1
        %s575 = scalar_select %p574, %s28, 1
        %p576 = scmp.lt.s32.totalorder %s573, 31
        %s577 = scalar_select %p576, %s573, 31
        %s578 = smul.addr %s575, 32
        %s579 = sadd.s32 %s577, %s578
        %s580 = smul.addr %s579, 8
        %s581 = scalar_lea.vmem %s6, %s580
        %s582 = smul.u32 32, %s29
      $region52: #{tpu_custom_call.1} parent=23 // pred_fallthru
        _
      // Predicated region
      $region53: #{tpu_custom_call.1} parent=23 // pred_check
        %p583 = pneg %p251
      $region54: #{tpu_custom_call.1} parent=23 // pred_check_branch
        %585 = sbr.rel (%p583) target = $region56
      $region55: #{tpu_custom_call.1} parent=23 // pred_region
        %s586 = smul.u32 32, %s29
        %p587 = scmp.lt.s32.totalorder %s28, 1
        %s588 = scalar_select %p587, %s28, 1
        %p589 = scmp.lt.s32.totalorder %s586, 31
        %s590 = scalar_select %p589, %s586, 31
        %s591 = smul.addr %s588, 32
        %s592 = sadd.s32 %s590, %s591
        %s593 = smul.addr %s592, 8
        %s594 = scalar_lea.vmem %s7, %s593
        %s595 = smul.u32 32, %s29
      $region56: #{tpu_custom_call.1} parent=23 // pred_fallthru
        _
      // Predicated region
      $region57: #{tpu_custom_call.1} parent=23 // pred_check
        %p596 = pneg %p279
      $region58: #{tpu_custom_call.1} parent=23 // pred_check_branch
        %598 = sbr.rel (%p596) target = $region60
      $region59: #{tpu_custom_call.1} parent=23 // pred_region
        %s599 = smul.u32 32, %s29
        %p600 = scmp.lt.s32.totalorder %s28, 1
        %s601 = scalar_select %p600, %s28, 1
        %p602 = scmp.lt.s32.totalorder %s599, 31
        %s603 = scalar_select %p602, %s599, 31
        %s604 = smul.addr %s601, 32
        %s605 = sadd.s32 %s603, %s604
        %s606 = smul.addr %s605, 8
        %s607 = scalar_lea.vmem %s8, %s606
        %s608 = smul.u32 32, %s29
      $region60: #{tpu_custom_call.1} parent=23 // pred_fallthru
        _
      // Predicated region
      $region61: #{tpu_custom_call.1} parent=23 // pred_check
        %p609 = pneg %p307
      $region62: #{tpu_custom_call.1} parent=23 // pred_check_branch
        %611 = sbr.rel (%p609) target = $region64
      $region63: #{tpu_custom_call.1} parent=23 // pred_region
        %s612 = smul.u32 32, %s29
        %p613 = scmp.lt.s32.totalorder %s28, 1
        %s614 = scalar_select %p613, %s28, 1
        %p615 = scmp.lt.s32.totalorder %s612, 31
        %s616 = scalar_select %p615, %s612, 31
        %s617 = smul.addr %s614, 32
        %s618 = sadd.s32 %s616, %s617
        %s619 = smul.addr %s618, 8
        %s620 = scalar_lea.vmem %s9, %s619
        %s621 = smul.u32 32, %s29
      $region64: #{tpu_custom_call.1} parent=23 // pred_fallthru
        _
      // Predicated region
      $region65: #{tpu_custom_call.1} parent=23 // pred_check
        %p622 = pneg %p335
      $region66: #{tpu_custom_call.1} parent=23 // pred_check_branch
        %624 = sbr.rel (%p622) target = $region68
      $region67: #{tpu_custom_call.1} parent=23 // pred_region
        %s625 = smul.u32 32, %s29
        %p626 = scmp.lt.s32.totalorder %s28, 1
        %s627 = scalar_select %p626, %s28, 1
        %p628 = scmp.lt.s32.totalorder %s625, 31
        %s629 = scalar_select %p628, %s625, 31
        %s630 = smul.addr %s627, 32
        %s631 = sadd.s32 %s629, %s630
        %s632 = smul.addr %s631, 8
        %s633 = scalar_lea.vmem %s10, %s632
        %s634 = smul.u32 32, %s29
      $region68: #{tpu_custom_call.1} parent=23 // pred_fallthru
        _
      // Predicated region
      $region69: #{tpu_custom_call.1} parent=23 // pred_check
        %p635 = pneg %p363
      $region70: #{tpu_custom_call.1} parent=23 // pred_check_branch
        %637 = sbr.rel (%p635) target = $region72
      $region71: #{tpu_custom_call.1} parent=23 // pred_region
        %s638 = smul.u32 32, %s29
        %p639 = scmp.lt.s32.totalorder %s28, 1
        %s640 = scalar_select %p639, %s28, 1
        %p641 = scmp.lt.s32.totalorder %s638, 31
        %s642 = scalar_select %p641, %s638, 31
        %s643 = smul.addr %s640, 32
        %s644 = sadd.s32 %s642, %s643
        %s645 = smul.addr %s644, 8
        %s646 = scalar_lea.vmem %s11, %s645
        %s647 = smul.u32 32, %s29
      $region72: #{tpu_custom_call.1} parent=23 // pred_fallthru
        _
      // Predicated region
      $region73: #{tpu_custom_call.1} parent=23 // pred_check
        %p648 = pneg %p391
      $region74: #{tpu_custom_call.1} parent=23 // pred_check_branch
        %650 = sbr.rel (%p648) target = $region76
      $region75: #{tpu_custom_call.1} parent=23 // pred_region
        %s651 = smul.u32 32, %s29
        %p652 = scmp.lt.s32.totalorder %s28, 1
        %s653 = scalar_select %p652, %s28, 1
        %p654 = scmp.lt.s32.totalorder %s651, 31
        %s655 = scalar_select %p654, %s651, 31
        %s656 = smul.addr %s653, 32
        %s657 = sadd.s32 %s655, %s656
        %s658 = smul.addr %s657, 8
        %s659 = scalar_lea.vmem %s12, %s658
        %s660 = smul.u32 32, %s29
      $region76: #{tpu_custom_call.1} parent=23 // pred_fallthru
        _
    $region24: #{tpu_custom_call.1} parent=5 // pred_fallthru
      _
    %p661 = scmp.le.s32.totalorder 1, %s21
    %p662 = scmp.lt.s32.totalorder %s21, 3
    %p663 = pnand %p661, %p662
    %p664 = pneg %p663
    // Predicated region
    $region77: #{tpu_custom_call.1} parent=5 // pred_check
      _
    $region78: #{tpu_custom_call.1} parent=5 // pred_check_branch
      %666 = sbr.rel (%p663) target = $region80
    $region79: #{tpu_custom_call.1} parent=5 // pred_region
      %s667 = ssub.s32 %s21, 1
      %s668 = smul.u32 32, %s31
      %p669 = scmp.lt.s32.totalorder %s30, 1
      %s670 = scalar_select %p669, %s30, 1
      %p671 = scmp.lt.s32.totalorder %s668, 31
      %s672 = scalar_select %p671, %s668, 31
      %s673 = smul.addr %s670, 32
      %s674 = sadd.s32 %s672, %s673
      %s675 = smul.addr %s674, 8
      %s676 = scalar_lea.vmem %s0, %s675
      %p677 = pneg %p61
      %p678 = pneg %p58
      %s679 = smul.u32 32, %s31
      %p680 = scmp.lt.s32.totalorder %s30, 1
      %s681 = scalar_select %p680, %s30, 1
      %p682 = scmp.lt.s32.totalorder %s679, 31
      %s683 = scalar_select %p682, %s679, 31
      %s684 = smul.addr %s681, 32
      %s685 = sadd.s32 %s683, %s684
      %s686 = smul.addr %s685, 8
      %s687 = scalar_lea.vmem %s1, %s686
      %p688 = pneg %p89
      %p689 = pneg %p86
      %s690 = smul.u32 32, %s31
      %p691 = scmp.lt.s32.totalorder %s30, 1
      %s692 = scalar_select %p691, %s30, 1
      %p693 = scmp.lt.s32.totalorder %s690, 31
      %s694 = scalar_select %p693, %s690, 31
      %s695 = smul.addr %s692, 32
      %s696 = sadd.s32 %s694, %s695
      %s697 = smul.addr %s696, 8
      %s698 = scalar_lea.vmem %s2, %s697
      %p699 = pneg %p117
      %p700 = pneg %p114
      %s701 = smul.u32 32, %s31
      %p702 = scmp.lt.s32.totalorder %s30, 1
      %s703 = scalar_select %p702, %s30, 1
      %p704 = scmp.lt.s32.totalorder %s701, 31
      %s705 = scalar_select %p704, %s701, 31
      %s706 = smul.addr %s703, 32
      %s707 = sadd.s32 %s705, %s706
      %s708 = smul.addr %s707, 8
      %s709 = scalar_lea.vmem %s3, %s708
      %p710 = pneg %p145
      %p711 = pneg %p142
      %s712 = smul.u32 32, %s31
      %p713 = scmp.lt.s32.totalorder %s30, 1
      %s714 = scalar_select %p713, %s30, 1
      %p715 = scmp.lt.s32.totalorder %s712, 31
      %s716 = scalar_select %p715, %s712, 31
      %s717 = smul.addr %s714, 32
      %s718 = sadd.s32 %s716, %s717
      %s719 = smul.addr %s718, 8
      %s720 = scalar_lea.vmem %s4, %s719
      %p721 = pneg %p173
      %p722 = pneg %p170
      %s723 = smul.u32 32, %s31
      %p724 = scmp.lt.s32.totalorder %s30, 1
      %s725 = scalar_select %p724, %s30, 1
      %p726 = scmp.lt.s32.totalorder %s723, 31
      %s727 = scalar_select %p726, %s723, 31
      %s728 = smul.addr %s725, 32
      %s729 = sadd.s32 %s727, %s728
      %s730 = smul.addr %s729, 8
      %s731 = scalar_lea.vmem %s5, %s730
      %p732 = pneg %p201
      %p733 = pneg %p198
      %s734 = smul.u32 32, %s31
      %p735 = scmp.lt.s32.totalorder %s30, 1
      %s736 = scalar_select %p735, %s30, 1
      %p737 = scmp.lt.s32.totalorder %s734, 31
      %s738 = scalar_select %p737, %s734, 31
      %s739 = smul.addr %s736, 32
      %s740 = sadd.s32 %s738, %s739
      %s741 = smul.addr %s740, 8
      %s742 = scalar_lea.vmem %s6, %s741
      %p743 = pneg %p229
      %p744 = pneg %p226
      %s745 = smul.u32 32, %s31
      %p746 = scmp.lt.s32.totalorder %s30, 1
      %s747 = scalar_select %p746, %s30, 1
      %p748 = scmp.lt.s32.totalorder %s745, 31
      %s749 = scalar_select %p748, %s745, 31
      %s750 = smul.addr %s747, 32
      %s751 = sadd.s32 %s749, %s750
      %s752 = smul.addr %s751, 8
      %s753 = scalar_lea.vmem %s7, %s752
      %p754 = pneg %p257
      %p755 = pneg %p254
      %s756 = smul.u32 32, %s31
      %p757 = scmp.lt.s32.totalorder %s30, 1
      %s758 = scalar_select %p757, %s30, 1
      %p759 = scmp.lt.s32.totalorder %s756, 31
      %s760 = scalar_select %p759, %s756, 31
      %s761 = smul.addr %s758, 32
      %s762 = sadd.s32 %s760, %s761
      %s763 = smul.addr %s762, 8
      %s764 = scalar_lea.vmem %s8, %s763
      %p765 = pneg %p285
      %p766 = pneg %p282
      %s767 = smul.u32 32, %s31
      %p768 = scmp.lt.s32.totalorder %s30, 1
      %s769 = scalar_select %p768, %s30, 1
      %p770 = scmp.lt.s32.totalorder %s767, 31
      %s771 = scalar_select %p770, %s767, 31
      %s772 = smul.addr %s769, 32
      %s773 = sadd.s32 %s771, %s772
      %s774 = smul.addr %s773, 8
      %s775 = scalar_lea.vmem %s9, %s774
      %p776 = pneg %p313
      %p777 = pneg %p310
      %s778 = smul.u32 32, %s31
      %p779 = scmp.lt.s32.totalorder %s30, 1
      %s780 = scalar_select %p779, %s30, 1
      %p781 = scmp.lt.s32.totalorder %s778, 31
      %s782 = scalar_select %p781, %s778, 31
      %s783 = smul.addr %s780, 32
      %s784 = sadd.s32 %s782, %s783
      %s785 = smul.addr %s784, 8
      %s786 = scalar_lea.vmem %s10, %s785
      %p787 = pneg %p341
      %p788 = pneg %p338
      %s789 = smul.u32 32, %s31
      %p790 = scmp.lt.s32.totalorder %s30, 1
      %s791 = scalar_select %p790, %s30, 1
      %p792 = scmp.lt.s32.totalorder %s789, 31
      %s793 = scalar_select %p792, %s789, 31
      %s794 = smul.addr %s791, 32
      %s795 = sadd.s32 %s793, %s794
      %s796 = smul.addr %s795, 8
      %s797 = scalar_lea.vmem %s11, %s796
      %p798 = pneg %p369
      %p799 = pneg %p366
      %s800 = smul.u32 32, %s31
      %p801 = scmp.lt.s32.totalorder %s30, 1
      %s802 = scalar_select %p801, %s30, 1
      %p803 = scmp.lt.s32.totalorder %s800, 31
      %s804 = scalar_select %p803, %s800, 31
      %s805 = smul.addr %s802, 32
      %s806 = sadd.s32 %s804, %s805
      %s807 = smul.addr %s806, 8
      %s808 = scalar_lea.vmem %s12, %s807
      %p809 = pneg %p397
      %p810 = pneg %p394
      %p811 = pneg %p418
      %p812 = pneg %p415
      %p813 = pneg %p439
      %p814 = pneg %p436
      %p815 = pneg %p467
      %p816 = pneg %p464
      %s817 = smul.u32 2, %s31
      %p818 = scmp.lt.s32.totalorder %s30, 1
      %s819 = scalar_select %p818, %s30, 1
      %p820 = scmp.lt.s32.totalorder %s817, 1
      %s821 = scalar_select %p820, %s817, 1
      %s822 = smul.addr %s819, 2
      %s823 = sadd.s32 %s821, %s822
      %s824 = smul.addr %s823, 4
      %s825 = scalar_lea.vmem %s15, %s824
      %s826 = smul.u32 32, %s31
      %p827 = scmp.lt.s32.totalorder %s30, 1
      %s828 = scalar_select %p827, %s30, 1
      %p829 = scmp.lt.s32.totalorder %s826, 31
      %s830 = scalar_select %p829, %s826, 31
      %s831 = smul.addr %s828, 32
      %s832 = sadd.s32 %s830, %s831
      %s833 = smul.addr %s832, 8
      %s834 = scalar_lea.vmem %s0, %s833
      %s835 = smul.u32 32, %s31
      %s836 = smul.u32 32, %s31
      %p837 = scmp.lt.s32.totalorder %s30, 1
      %s838 = scalar_select %p837, %s30, 1
      %p839 = scmp.lt.s32.totalorder %s836, 31
      %s840 = scalar_select %p839, %s836, 31
      %s841 = smul.addr %s838, 32
      %s842 = sadd.s32 %s840, %s841
      %s843 = smul.addr %s842, 8
      %s844 = scalar_lea.vmem %s1, %s843
      %s845 = smul.u32 32, %s31
      %s846 = smul.u32 32, %s31
      %p847 = scmp.lt.s32.totalorder %s30, 1
      %s848 = scalar_select %p847, %s30, 1
      %p849 = scmp.lt.s32.totalorder %s846, 31
      %s850 = scalar_select %p849, %s846, 31
      %s851 = smul.addr %s848, 32
      %s852 = sadd.s32 %s850, %s851
      %s853 = smul.addr %s852, 8
      %s854 = scalar_lea.vmem %s2, %s853
      %s855 = smul.u32 32, %s31
      %s856 = smul.u32 32, %s31
      %p857 = scmp.lt.s32.totalorder %s30, 1
      %s858 = scalar_select %p857, %s30, 1
      %p859 = scmp.lt.s32.totalorder %s856, 31
      %s860 = scalar_select %p859, %s856, 31
      %s861 = smul.addr %s858, 32
      %s862 = sadd.s32 %s860, %s861
      %s863 = smul.addr %s862, 8
      %s864 = scalar_lea.vmem %s3, %s863
      %s865 = smul.u32 32, %s31
      %s866 = smul.u32 32, %s31
      %p867 = scmp.lt.s32.totalorder %s30, 1
      %s868 = scalar_select %p867, %s30, 1
      %p869 = scmp.lt.s32.totalorder %s866, 31
      %s870 = scalar_select %p869, %s866, 31
      %s871 = smul.addr %s868, 32
      %s872 = sadd.s32 %s870, %s871
      %s873 = smul.addr %s872, 8
      %s874 = scalar_lea.vmem %s4, %s873
      %s875 = smul.u32 32, %s31
      %s876 = smul.u32 32, %s31
      %p877 = scmp.lt.s32.totalorder %s30, 1
      %s878 = scalar_select %p877, %s30, 1
      %p879 = scmp.lt.s32.totalorder %s876, 31
      %s880 = scalar_select %p879, %s876, 31
      %s881 = smul.addr %s878, 32
      %s882 = sadd.s32 %s880, %s881
      %s883 = smul.addr %s882, 8
      %s884 = scalar_lea.vmem %s5, %s883
      %s885 = smul.u32 32, %s31
      %s886 = smul.u32 32, %s31
      %p887 = scmp.lt.s32.totalorder %s30, 1
      %s888 = scalar_select %p887, %s30, 1
      %p889 = scmp.lt.s32.totalorder %s886, 31
      %s890 = scalar_select %p889, %s886, 31
      %s891 = smul.addr %s888, 32
      %s892 = sadd.s32 %s890, %s891
      %s893 = smul.addr %s892, 8
      %s894 = scalar_lea.vmem %s6, %s893
      %s895 = smul.u32 32, %s31
      %s896 = smul.u32 32, %s31
      %p897 = scmp.lt.s32.totalorder %s30, 1
      %s898 = scalar_select %p897, %s30, 1
      %p899 = scmp.lt.s32.totalorder %s896, 31
      %s900 = scalar_select %p899, %s896, 31
      %s901 = smul.addr %s898, 32
      %s902 = sadd.s32 %s900, %s901
      %s903 = smul.addr %s902, 8
      %s904 = scalar_lea.vmem %s7, %s903
      %s905 = smul.u32 32, %s31
      %s906 = smul.u32 32, %s31
      %p907 = scmp.lt.s32.totalorder %s30, 1
      %s908 = scalar_select %p907, %s30, 1
      %p909 = scmp.lt.s32.totalorder %s906, 31
      %s910 = scalar_select %p909, %s906, 31
      %s911 = smul.addr %s908, 32
      %s912 = sadd.s32 %s910, %s911
      %s913 = smul.addr %s912, 8
      %s914 = scalar_lea.vmem %s8, %s913
      %s915 = smul.u32 32, %s31
      %s916 = smul.u32 32, %s31
      %p917 = scmp.lt.s32.totalorder %s30, 1
      %s918 = scalar_select %p917, %s30, 1
      %p919 = scmp.lt.s32.totalorder %s916, 31
      %s920 = scalar_select %p919, %s916, 31
      %s921 = smul.addr %s918, 32
      %s922 = sadd.s32 %s920, %s921
      %s923 = smul.addr %s922, 8
      %s924 = scalar_lea.vmem %s9, %s923
      %s925 = smul.u32 32, %s31
      %s926 = smul.u32 32, %s31
      %p927 = scmp.lt.s32.totalorder %s30, 1
      %s928 = scalar_select %p927, %s30, 1
      %p929 = scmp.lt.s32.totalorder %s926, 31
      %s930 = scalar_select %p929, %s926, 31
      %s931 = smul.addr %s928, 32
      %s932 = sadd.s32 %s930, %s931
      %s933 = smul.addr %s932, 8
      %s934 = scalar_lea.vmem %s10, %s933
      %s935 = smul.u32 32, %s31
      %s936 = smul.u32 32, %s31
      %p937 = scmp.lt.s32.totalorder %s30, 1
      %s938 = scalar_select %p937, %s30, 1
      %p939 = scmp.lt.s32.totalorder %s936, 31
      %s940 = scalar_select %p939, %s936, 31
      %s941 = smul.addr %s938, 32
      %s942 = sadd.s32 %s940, %s941
      %s943 = smul.addr %s942, 8
      %s944 = scalar_lea.vmem %s11, %s943
      %s945 = smul.u32 32, %s31
      %s946 = smul.u32 32, %s31
      %p947 = scmp.lt.s32.totalorder %s30, 1
      %s948 = scalar_select %p947, %s30, 1
      %p949 = scmp.lt.s32.totalorder %s946, 31
      %s950 = scalar_select %p949, %s946, 31
      %s951 = smul.addr %s948, 32
      %s952 = sadd.s32 %s950, %s951
      %s953 = smul.addr %s952, 8
      %s954 = scalar_lea.vmem %s12, %s953
      %s955 = smul.u32 32, %s31
      %s956 = smul.u32 2, %s31
      %p957 = scmp.lt.s32.totalorder %s30, 1
      %s958 = scalar_select %p957, %s30, 1
      %p959 = scmp.lt.s32.totalorder %s956, 1
      %s960 = scalar_select %p959, %s956, 1
      %s961 = smul.addr %s958, 2
      %s962 = sadd.s32 %s960, %s961
      %s963 = smul.addr %s962, 4
      %s964 = scalar_lea.vmem %s15, %s963
      %s965 = smul.u32 2, %s31
      %v966 = vld [vmem:[%s13] sm:$0x7]
      %v967 = vld [vmem:[%s834] sm:$0xff]
      %v968 = vld [vmem:[%s834 + $0x8] sm:$0xff]
      %v969 = vld [vmem:[%s834 + $0x10] sm:$0xff]
      %v970 = vld [vmem:[%s834 + $0x18] sm:$0xff]
      %v971 = vld [vmem:[%s834 + $0x20] sm:$0xff]
      %v972 = vld [vmem:[%s834 + $0x28] sm:$0xff]
      %v973 = vld [vmem:[%s834 + $0x30] sm:$0xff]
      %v974 = vld [vmem:[%s834 + $0x38] sm:$0xff]
      %v975 = vld [vmem:[%s834 + $0x40] sm:$0xff]
      %v976 = vld [vmem:[%s834 + $0x48] sm:$0xff]
      %v977 = vld [vmem:[%s834 + $0x50] sm:$0xff]
      %v978 = vld [vmem:[%s834 + $0x58] sm:$0xff]
      %v979 = vld [vmem:[%s834 + $0x60] sm:$0xff]
      %v980 = vld [vmem:[%s834 + $0x68] sm:$0xff]
      %v981 = vld [vmem:[%s834 + $0x70] sm:$0xff]
      %v982 = vld [vmem:[%s834 + $0x78] sm:$0xff]
      %v983 = vld [vmem:[%s834 + $0x80] sm:$0xff]
      %v984 = vld [vmem:[%s834 + $0x88] sm:$0xff]
      %v985 = vld [vmem:[%s834 + $0x90] sm:$0xff]
      %v986 = vld [vmem:[%s834 + $0x98] sm:$0xff]
      %v987 = vld [vmem:[%s834 + $0xa0] sm:$0xff]
      %v988 = vld [vmem:[%s834 + $0xa8] sm:$0xff]
      %v989 = vld [vmem:[%s834 + $0xb0] sm:$0xff]
      %v990 = vld [vmem:[%s834 + $0xb8] sm:$0xff]
      %v991 = vld [vmem:[%s834 + $0xc0] sm:$0xff]
      %v992 = vld [vmem:[%s834 + $0xc8] sm:$0xff]
      %v993 = vld [vmem:[%s834 + $0xd0] sm:$0xff]
      %v994 = vld [vmem:[%s834 + $0xd8] sm:$0xff]
      %v995 = vld [vmem:[%s834 + $0xe0] sm:$0xff]
      %v996 = vld [vmem:[%s834 + $0xe8] sm:$0xff]
      %v997 = vld [vmem:[%s834 + $0xf0] sm:$0xff]
      %v998 = vld [vmem:[%s834 + $0xf8] sm:$0xff]
      %s999 = scalar_lea.vmem %s13, 4
      %v1000 = vld [vmem:[%s999] sm:$0x7]
      %v1001 = vld [vmem:[%s844] sm:$0xff]
      %v1002 = vld [vmem:[%s844 + $0x8] sm:$0xff]
      %v1003 = vld [vmem:[%s844 + $0x10] sm:$0xff]
      %v1004 = vld [vmem:[%s844 + $0x18] sm:$0xff]
      %v1005 = vld [vmem:[%s844 + $0x20] sm:$0xff]
      %v1006 = vld [vmem:[%s844 + $0x28] sm:$0xff]
      %v1007 = vld [vmem:[%s844 + $0x30] sm:$0xff]
      %v1008 = vld [vmem:[%s844 + $0x38] sm:$0xff]
      %v1009 = vld [vmem:[%s844 + $0x40] sm:$0xff]
      %v1010 = vld [vmem:[%s844 + $0x48] sm:$0xff]
      %v1011 = vld [vmem:[%s844 + $0x50] sm:$0xff]
      %v1012 = vld [vmem:[%s844 + $0x58] sm:$0xff]
      %v1013 = vld [vmem:[%s844 + $0x60] sm:$0xff]
      %v1014 = vld [vmem:[%s844 + $0x68] sm:$0xff]
      %v1015 = vld [vmem:[%s844 + $0x70] sm:$0xff]
      %v1016 = vld [vmem:[%s844 + $0x78] sm:$0xff]
      %v1017 = vld [vmem:[%s844 + $0x80] sm:$0xff]
      %v1018 = vld [vmem:[%s844 + $0x88] sm:$0xff]
      %v1019 = vld [vmem:[%s844 + $0x90] sm:$0xff]
      %v1020 = vld [vmem:[%s844 + $0x98] sm:$0xff]
      %v1021 = vld [vmem:[%s844 + $0xa0] sm:$0xff]
      %v1022 = vld [vmem:[%s844 + $0xa8] sm:$0xff]
      %v1023 = vld [vmem:[%s844 + $0xb0] sm:$0xff]
      %v1024 = vld [vmem:[%s844 + $0xb8] sm:$0xff]
      %v1025 = vld [vmem:[%s844 + $0xc0] sm:$0xff]
      %v1026 = vld [vmem:[%s844 + $0xc8] sm:$0xff]
      %v1027 = vld [vmem:[%s844 + $0xd0] sm:$0xff]
      %v1028 = vld [vmem:[%s844 + $0xd8] sm:$0xff]
      %v1029 = vld [vmem:[%s844 + $0xe0] sm:$0xff]
      %v1030 = vld [vmem:[%s844 + $0xe8] sm:$0xff]
      %v1031 = vld [vmem:[%s844 + $0xf0] sm:$0xff]
      %v1032 = vld [vmem:[%s844 + $0xf8] sm:$0xff]
      %vm1033 = vcmask 261120
      %v1035 = vsel %vm1033, %v1000, 0
      %v1038 = vsel %vm1033, %v1001, 0
      %v1041 = vsel %vm1033, %v1002, 0
      %v1044 = vsel %vm1033, %v1003, 0
      %v1047 = vsel %vm1033, %v1004, 0
      %v1050 = vsel %vm1033, %v1005, 0
      %v1053 = vsel %vm1033, %v1006, 0
      %v1056 = vsel %vm1033, %v1007, 0
      %v1059 = vsel %vm1033, %v1008, 0
      %v1062 = vsel %vm1033, %v1009, 0
      %v1065 = vsel %vm1033, %v1010, 0
      %v1068 = vsel %vm1033, %v1011, 0
      %v1071 = vsel %vm1033, %v1012, 0
      %v1074 = vsel %vm1033, %v1013, 0
      %v1077 = vsel %vm1033, %v1014, 0
      %v1080 = vsel %vm1033, %v1015, 0
      %v1083 = vsel %vm1033, %v1016, 0
      %v1086 = vsel %vm1033, %v1017, 0
      %v1089 = vsel %vm1033, %v1018, 0
      %v1092 = vsel %vm1033, %v1019, 0
      %v1095 = vsel %vm1033, %v1020, 0
      %v1098 = vsel %vm1033, %v1021, 0
      %v1101 = vsel %vm1033, %v1022, 0
      %v1104 = vsel %vm1033, %v1023, 0
      %v1107 = vsel %vm1033, %v1024, 0
      %v1110 = vsel %vm1033, %v1025, 0
      %v1113 = vsel %vm1033, %v1026, 0
      %v1116 = vsel %vm1033, %v1027, 0
      %v1119 = vsel %vm1033, %v1028, 0
      %v1122 = vsel %vm1033, %v1029, 0
      %v1125 = vsel %vm1033, %v1030, 0
      %v1128 = vsel %vm1033, %v1031, 0
      %v1131 = vsel %vm1033, %v1032, 0
      %1133 = vmatprep.subr.mxu0 0.0
      %1134 = vmatpush1.xpose.msra.mxu0 %v1038
      %1135 = vmatprep.subr.mxu0 0.0
      %1136 = vmatpush1.xpose.msra.mxu0 %v1041
      %1137 = vmatprep.subr.mxu0 0.0
      %1138 = vmatpush1.xpose.msra.mxu0 %v1044
      %1139 = vmatprep.subr.mxu0 0.0
      %1140 = vmatpush1.xpose.msra.mxu0 %v1047
      %1141 = vmatprep.subr.mxu0 0.0
      %1142 = vmatpush1.xpose.msra.mxu0 %v1050
      %1143 = vmatprep.subr.mxu0 0.0
      %1144 = vmatpush1.xpose.msra.mxu0 %v1053
      %1145 = vmatprep.subr.mxu0 0.0
      %1146 = vmatpush1.xpose.msra.mxu0 %v1056
      %1147 = vmatprep.subr.mxu0 0.0
      %1148 = vmatpush1.xpose.msra.mxu0 %v1059
      %1149 = vmatprep.subr.mxu0 0.0
      %1150 = vmatpush1.xpose.msra.mxu0 %v1062
      %1151 = vmatprep.subr.mxu0 0.0
      %1152 = vmatpush1.xpose.msra.mxu0 %v1065
      %1153 = vmatprep.subr.mxu0 0.0
      %1154 = vmatpush1.xpose.msra.mxu0 %v1068
      %1155 = vmatprep.subr.mxu0 0.0
      %1156 = vmatpush1.xpose.msra.mxu0 %v1071
      %1157 = vmatprep.subr.mxu0 0.0
      %1158 = vmatpush1.xpose.msra.mxu0 %v1074
      %1159 = vmatprep.subr.mxu0 0.0
      %1160 = vmatpush1.xpose.msra.mxu0 %v1077
      %1161 = vmatprep.subr.mxu0 0.0
      %1162 = vmatpush1.xpose.msra.mxu0 %v1080
      %1163 = vmatprep.subr.mxu0 0.0
      %1164 = vmatpush1.xpose.msra.mxu0 %v1083
      %1165 = vmatprep.subr.mxu0 0.0
      %1166 = vmatpush1.xpose.msra.mxu0 %v1086
      %1167 = vmatprep.subr.mxu0 0.0
      %1168 = vmatpush1.xpose.msra.mxu0 %v1089
      %1169 = vmatprep.subr.mxu0 0.0
      %1170 = vmatpush1.xpose.msra.mxu0 %v1092
      %1171 = vmatprep.subr.mxu0 0.0
      %1172 = vmatpush1.xpose.msra.mxu0 %v1095
      %1173 = vmatprep.subr.mxu0 0.0
      %1174 = vmatpush1.xpose.msra.mxu0 %v1098
      %1175 = vmatprep.subr.mxu0 0.0
      %1176 = vmatpush1.xpose.msra.mxu0 %v1101
      %1177 = vmatprep.subr.mxu0 0.0
      %1178 = vmatpush1.xpose.msra.mxu0 %v1104
      %1179 = vmatprep.subr.mxu0 0.0
      %1180 = vmatpush1.xpose.msra.mxu0 %v1107
      %1181 = vmatprep.subr.mxu0 0.0
      %1182 = vmatpush1.xpose.msra.mxu0 %v1110
      %1183 = vmatprep.subr.mxu0 0.0
      %1184 = vmatpush1.xpose.msra.mxu0 %v1113
      %1185 = vmatprep.subr.mxu0 0.0
      %1186 = vmatpush1.xpose.msra.mxu0 %v1116
      %1187 = vmatprep.subr.mxu0 0.0
      %1188 = vmatpush1.xpose.msra.mxu0 %v1119
      %1189 = vmatprep.subr.mxu0 0.0
      %1190 = vmatpush1.xpose.msra.mxu0 %v1122
      %1191 = vmatprep.subr.mxu0 0.0
      %1192 = vmatpush1.xpose.msra.mxu0 %v1125
      %1193 = vmatprep.subr.mxu0 0.0
      %1194 = vmatpush1.xpose.msra.mxu0 %v1128
      %1195 = vmatprep.subr.mxu0 0.0
      %1196 = vmatpush1.xpose.msra.mxu0 %v1131
      %1197 = vmatprep.mubr.f32.mxu0 0.0
      %1198 = vmatmul.mubr.f32.gmra.mrb[0].mxu0 %v1035
      %v1199 = vpop.f32.mrb[0].mxu0
      %v1200 = vadd.f32 0.0, %v1199
      %v1201 = vpop.f32.mrb[0].mxu0
      %v1202 = vadd.f32 0.0, %v1201
      %1203 = vdwg.mxu0
      %v1205 = vsel %vm1033, %v966, 0
      %v1208 = vsel %vm1033, %v967, 0
      %v1211 = vsel %vm1033, %v968, 0
      %v1214 = vsel %vm1033, %v969, 0
      %v1217 = vsel %vm1033, %v970, 0
      %v1220 = vsel %vm1033, %v971, 0
      %v1223 = vsel %vm1033, %v972, 0
      %v1226 = vsel %vm1033, %v973, 0
      %v1229 = vsel %vm1033, %v974, 0
      %v1232 = vsel %vm1033, %v975, 0
      %v1235 = vsel %vm1033, %v976, 0
      %v1238 = vsel %vm1033, %v977, 0
      %v1241 = vsel %vm1033, %v978, 0
      %v1244 = vsel %vm1033, %v979, 0
      %v1247 = vsel %vm1033, %v980, 0
      %v1250 = vsel %vm1033, %v981, 0
      %v1253 = vsel %vm1033, %v982, 0
      %v1256 = vsel %vm1033, %v983, 0
      %v1259 = vsel %vm1033, %v984, 0
      %v1262 = vsel %vm1033, %v985, 0
      %v1265 = vsel %vm1033, %v986, 0
      %v1268 = vsel %vm1033, %v987, 0
      %v1271 = vsel %vm1033, %v988, 0
      %v1274 = vsel %vm1033, %v989, 0
      %v1277 = vsel %vm1033, %v990, 0
      %v1280 = vsel %vm1033, %v991, 0
      %v1283 = vsel %vm1033, %v992, 0
      %v1286 = vsel %vm1033, %v993, 0
      %v1289 = vsel %vm1033, %v994, 0
      %v1292 = vsel %vm1033, %v995, 0
      %v1295 = vsel %vm1033, %v996, 0
      %v1298 = vsel %vm1033, %v997, 0
      %v1301 = vsel %vm1033, %v998, 0
      %1303 = vmatprep.subr.mxu0 0.0
      %1304 = vmatpush1.xpose.msra.mxu0 %v1208
      %1305 = vmatprep.subr.mxu0 0.0
      %1306 = vmatpush1.xpose.msra.mxu0 %v1211
      %1307 = vmatprep.subr.mxu0 0.0
      %1308 = vmatpush1.xpose.msra.mxu0 %v1214
      %1309 = vmatprep.subr.mxu0 0.0
      %1310 = vmatpush1.xpose.msra.mxu0 %v1217
      %1311 = vmatprep.subr.mxu0 0.0
      %1312 = vmatpush1.xpose.msra.mxu0 %v1220
      %1313 = vmatprep.subr.mxu0 0.0
      %1314 = vmatpush1.xpose.msra.mxu0 %v1223
      %1315 = vmatprep.subr.mxu0 0.0
      %1316 = vmatpush1.xpose.msra.mxu0 %v1226
      %1317 = vmatprep.subr.mxu0 0.0
      %1318 = vmatpush1.xpose.msra.mxu0 %v1229
      %1319 = vmatprep.subr.mxu0 0.0
      %1320 = vmatpush1.xpose.msra.mxu0 %v1232
      %1321 = vmatprep.subr.mxu0 0.0
      %1322 = vmatpush1.xpose.msra.mxu0 %v1235
      %1323 = vmatprep.subr.mxu0 0.0
      %1324 = vmatpush1.xpose.msra.mxu0 %v1238
      %1325 = vmatprep.subr.mxu0 0.0
      %1326 = vmatpush1.xpose.msra.mxu0 %v1241
      %1327 = vmatprep.subr.mxu0 0.0
      %1328 = vmatpush1.xpose.msra.mxu0 %v1244
      %1329 = vmatprep.subr.mxu0 0.0
      %1330 = vmatpush1.xpose.msra.mxu0 %v1247
      %1331 = vmatprep.subr.mxu0 0.0
      %1332 = vmatpush1.xpose.msra.mxu0 %v1250
      %1333 = vmatprep.subr.mxu0 0.0
      %1334 = vmatpush1.xpose.msra.mxu0 %v1253
      %1335 = vmatprep.subr.mxu0 0.0
      %1336 = vmatpush1.xpose.msra.mxu0 %v1256
      %1337 = vmatprep.subr.mxu0 0.0
      %1338 = vmatpush1.xpose.msra.mxu0 %v1259
      %1339 = vmatprep.subr.mxu0 0.0
      %1340 = vmatpush1.xpose.msra.mxu0 %v1262
      %1341 = vmatprep.subr.mxu0 0.0
      %1342 = vmatpush1.xpose.msra.mxu0 %v1265
      %1343 = vmatprep.subr.mxu0 0.0
      %1344 = vmatpush1.xpose.msra.mxu0 %v1268
      %1345 = vmatprep.subr.mxu0 0.0
      %1346 = vmatpush1.xpose.msra.mxu0 %v1271
      %1347 = vmatprep.subr.mxu0 0.0
      %1348 = vmatpush1.xpose.msra.mxu0 %v1274
      %1349 = vmatprep.subr.mxu0 0.0
      %1350 = vmatpush1.xpose.msra.mxu0 %v1277
      %1351 = vmatprep.subr.mxu0 0.0
      %1352 = vmatpush1.xpose.msra.mxu0 %v1280
      %1353 = vmatprep.subr.mxu0 0.0
      %1354 = vmatpush1.xpose.msra.mxu0 %v1283
      %1355 = vmatprep.subr.mxu0 0.0
      %1356 = vmatpush1.xpose.msra.mxu0 %v1286
      %1357 = vmatprep.subr.mxu0 0.0
      %1358 = vmatpush1.xpose.msra.mxu0 %v1289
      %1359 = vmatprep.subr.mxu0 0.0
      %1360 = vmatpush1.xpose.msra.mxu0 %v1292
      %1361 = vmatprep.subr.mxu0 0.0
      %1362 = vmatpush1.xpose.msra.mxu0 %v1295
      %1363 = vmatprep.subr.mxu0 0.0
      %1364 = vmatpush1.xpose.msra.mxu0 %v1298
      %1365 = vmatprep.subr.mxu0 0.0
      %1366 = vmatpush1.xpose.msra.mxu0 %v1301
      %1367 = vmatprep.mubr.f32.mxu0 0.0
      %1368 = vmatmul.mubr.f32.gmra.mrb[0].mxu0 %v1205
      %v1369 = vpop.f32.mrb[0].mxu0
      %v1370 = vadd.f32 %v1200, %v1369
      %v1371 = vpop.f32.mrb[0].mxu0
      %v1372 = vadd.f32 %v1202, %v1371
      %1373 = vdwg.mxu0
      %s1374 = scalar_lea.vmem %s13, 8
      %v1375 = vld [vmem:[%s1374] sm:$0x7]
      %v1376 = vld [vmem:[%s854] sm:$0xff]
      %v1377 = vld [vmem:[%s854 + $0x8] sm:$0xff]
      %v1378 = vld [vmem:[%s854 + $0x10] sm:$0xff]
      %v1379 = vld [vmem:[%s854 + $0x18] sm:$0xff]
      %v1380 = vld [vmem:[%s854 + $0x20] sm:$0xff]
      %v1381 = vld [vmem:[%s854 + $0x28] sm:$0xff]
      %v1382 = vld [vmem:[%s854 + $0x30] sm:$0xff]
      %v1383 = vld [vmem:[%s854 + $0x38] sm:$0xff]
      %v1384 = vld [vmem:[%s854 + $0x40] sm:$0xff]
      %v1385 = vld [vmem:[%s854 + $0x48] sm:$0xff]
      %v1386 = vld [vmem:[%s854 + $0x50] sm:$0xff]
      %v1387 = vld [vmem:[%s854 + $0x58] sm:$0xff]
      %v1388 = vld [vmem:[%s854 + $0x60] sm:$0xff]
      %v1389 = vld [vmem:[%s854 + $0x68] sm:$0xff]
      %v1390 = vld [vmem:[%s854 + $0x70] sm:$0xff]
      %v1391 = vld [vmem:[%s854 + $0x78] sm:$0xff]
      %v1392 = vld [vmem:[%s854 + $0x80] sm:$0xff]
      %v1393 = vld [vmem:[%s854 + $0x88] sm:$0xff]
      %v1394 = vld [vmem:[%s854 + $0x90] sm:$0xff]
      %v1395 = vld [vmem:[%s854 + $0x98] sm:$0xff]
      %v1396 = vld [vmem:[%s854 + $0xa0] sm:$0xff]
      %v1397 = vld [vmem:[%s854 + $0xa8] sm:$0xff]
      %v1398 = vld [vmem:[%s854 + $0xb0] sm:$0xff]
      %v1399 = vld [vmem:[%s854 + $0xb8] sm:$0xff]
      %v1400 = vld [vmem:[%s854 + $0xc0] sm:$0xff]
      %v1401 = vld [vmem:[%s854 + $0xc8] sm:$0xff]
      %v1402 = vld [vmem:[%s854 + $0xd0] sm:$0xff]
      %v1403 = vld [vmem:[%s854 + $0xd8] sm:$0xff]
      %v1404 = vld [vmem:[%s854 + $0xe0] sm:$0xff]
      %v1405 = vld [vmem:[%s854 + $0xe8] sm:$0xff]
      %v1406 = vld [vmem:[%s854 + $0xf0] sm:$0xff]
      %v1407 = vld [vmem:[%s854 + $0xf8] sm:$0xff]
      %v1409 = vsel %vm1033, %v1375, 0
      %v1412 = vsel %vm1033, %v1376, 0
      %v1415 = vsel %vm1033, %v1377, 0
      %v1418 = vsel %vm1033, %v1378, 0
      %v1421 = vsel %vm1033, %v1379, 0
      %v1424 = vsel %vm1033, %v1380, 0
      %v1427 = vsel %vm1033, %v1381, 0
      %v1430 = vsel %vm1033, %v1382, 0
      %v1433 = vsel %vm1033, %v1383, 0
      %v1436 = vsel %vm1033, %v1384, 0
      %v1439 = vsel %vm1033, %v1385, 0
      %v1442 = vsel %vm1033, %v1386, 0
      %v1445 = vsel %vm1033, %v1387, 0
      %v1448 = vsel %vm1033, %v1388, 0
      %v1451 = vsel %vm1033, %v1389, 0
      %v1454 = vsel %vm1033, %v1390, 0
      %v1457 = vsel %vm1033, %v1391, 0
      %v1460 = vsel %vm1033, %v1392, 0
      %v1463 = vsel %vm1033, %v1393, 0
      %v1466 = vsel %vm1033, %v1394, 0
      %v1469 = vsel %vm1033, %v1395, 0
      %v1472 = vsel %vm1033, %v1396, 0
      %v1475 = vsel %vm1033, %v1397, 0
      %v1478 = vsel %vm1033, %v1398, 0
      %v1481 = vsel %vm1033, %v1399, 0
      %v1484 = vsel %vm1033, %v1400, 0
      %v1487 = vsel %vm1033, %v1401, 0
      %v1490 = vsel %vm1033, %v1402, 0
      %v1493 = vsel %vm1033, %v1403, 0
      %v1496 = vsel %vm1033, %v1404, 0
      %v1499 = vsel %vm1033, %v1405, 0
      %v1502 = vsel %vm1033, %v1406, 0
      %v1505 = vsel %vm1033, %v1407, 0
      %1507 = vmatprep.subr.mxu0 0.0
      %1508 = vmatpush1.xpose.msra.mxu0 %v1412
      %1509 = vmatprep.subr.mxu0 0.0
      %1510 = vmatpush1.xpose.msra.mxu0 %v1415
      %1511 = vmatprep.subr.mxu0 0.0
      %1512 = vmatpush1.xpose.msra.mxu0 %v1418
      %1513 = vmatprep.subr.mxu0 0.0
      %1514 = vmatpush1.xpose.msra.mxu0 %v1421
      %1515 = vmatprep.subr.mxu0 0.0
      %1516 = vmatpush1.xpose.msra.mxu0 %v1424
      %1517 = vmatprep.subr.mxu0 0.0
      %1518 = vmatpush1.xpose.msra.mxu0 %v1427
      %1519 = vmatprep.subr.mxu0 0.0
      %1520 = vmatpush1.xpose.msra.mxu0 %v1430
      %1521 = vmatprep.subr.mxu0 0.0
      %1522 = vmatpush1.xpose.msra.mxu0 %v1433
      %1523 = vmatprep.subr.mxu0 0.0
      %1524 = vmatpush1.xpose.msra.mxu0 %v1436
      %1525 = vmatprep.subr.mxu0 0.0
      %1526 = vmatpush1.xpose.msra.mxu0 %v1439
      %1527 = vmatprep.subr.mxu0 0.0
      %1528 = vmatpush1.xpose.msra.mxu0 %v1442
      %1529 = vmatprep.subr.mxu0 0.0
      %1530 = vmatpush1.xpose.msra.mxu0 %v1445
      %1531 = vmatprep.subr.mxu0 0.0
      %1532 = vmatpush1.xpose.msra.mxu0 %v1448
      %1533 = vmatprep.subr.mxu0 0.0
      %1534 = vmatpush1.xpose.msra.mxu0 %v1451
      %1535 = vmatprep.subr.mxu0 0.0
      %1536 = vmatpush1.xpose.msra.mxu0 %v1454
      %1537 = vmatprep.subr.mxu0 0.0
      %1538 = vmatpush1.xpose.msra.mxu0 %v1457
      %1539 = vmatprep.subr.mxu0 0.0
      %1540 = vmatpush1.xpose.msra.mxu0 %v1460
      %1541 = vmatprep.subr.mxu0 0.0
      %1542 = vmatpush1.xpose.msra.mxu0 %v1463
      %1543 = vmatprep.subr.mxu0 0.0
      %1544 = vmatpush1.xpose.msra.mxu0 %v1466
      %1545 = vmatprep.subr.mxu0 0.0
      %1546 = vmatpush1.xpose.msra.mxu0 %v1469
      %1547 = vmatprep.subr.mxu0 0.0
      %1548 = vmatpush1.xpose.msra.mxu0 %v1472
      %1549 = vmatprep.subr.mxu0 0.0
      %1550 = vmatpush1.xpose.msra.mxu0 %v1475
      %1551 = vmatprep.subr.mxu0 0.0
      %1552 = vmatpush1.xpose.msra.mxu0 %v1478
      %1553 = vmatprep.subr.mxu0 0.0
      %1554 = vmatpush1.xpose.msra.mxu0 %v1481
      %1555 = vmatprep.subr.mxu0 0.0
      %1556 = vmatpush1.xpose.msra.mxu0 %v1484
      %1557 = vmatprep.subr.mxu0 0.0
      %1558 = vmatpush1.xpose.msra.mxu0 %v1487
      %1559 = vmatprep.subr.mxu0 0.0
      %1560 = vmatpush1.xpose.msra.mxu0 %v1490
      %1561 = vmatprep.subr.mxu0 0.0
      %1562 = vmatpush1.xpose.msra.mxu0 %v1493
      %1563 = vmatprep.subr.mxu0 0.0
      %1564 = vmatpush1.xpose.msra.mxu0 %v1496
      %1565 = vmatprep.subr.mxu0 0.0
      %1566 = vmatpush1.xpose.msra.mxu0 %v1499
      %1567 = vmatprep.subr.mxu0 0.0
      %1568 = vmatpush1.xpose.msra.mxu0 %v1502
      %1569 = vmatprep.subr.mxu0 0.0
      %1570 = vmatpush1.xpose.msra.mxu0 %v1505
      %1571 = vmatprep.mubr.f32.mxu0 0.0
      %1572 = vmatmul.mubr.f32.gmra.mrb[0].mxu0 %v1409
      %v1573 = vpop.f32.mrb[0].mxu0
      %v1574 = vadd.f32 0.0, %v1573
      %v1575 = vpop.f32.mrb[0].mxu0
      %v1576 = vadd.f32 0.0, %v1575
      %1577 = vdwg.mxu0
      %v1578 = vadd.f32 %v1370, %v1574
      %v1579 = vadd.f32 %v1372, %v1576
      %s1580 = scalar_lea.vmem %s13, 12
      %v1581 = vld [vmem:[%s1580] sm:$0x7]
      %v1582 = vld [vmem:[%s864] sm:$0xff]
      %v1583 = vld [vmem:[%s864 + $0x8] sm:$0xff]
      %v1584 = vld [vmem:[%s864 + $0x10] sm:$0xff]
      %v1585 = vld [vmem:[%s864 + $0x18] sm:$0xff]
      %v1586 = vld [vmem:[%s864 + $0x20] sm:$0xff]
      %v1587 = vld [vmem:[%s864 + $0x28] sm:$0xff]
      %v1588 = vld [vmem:[%s864 + $0x30] sm:$0xff]
      %v1589 = vld [vmem:[%s864 + $0x38] sm:$0xff]
      %v1590 = vld [vmem:[%s864 + $0x40] sm:$0xff]
      %v1591 = vld [vmem:[%s864 + $0x48] sm:$0xff]
      %v1592 = vld [vmem:[%s864 + $0x50] sm:$0xff]
      %v1593 = vld [vmem:[%s864 + $0x58] sm:$0xff]
      %v1594 = vld [vmem:[%s864 + $0x60] sm:$0xff]
      %v1595 = vld [vmem:[%s864 + $0x68] sm:$0xff]
      %v1596 = vld [vmem:[%s864 + $0x70] sm:$0xff]
      %v1597 = vld [vmem:[%s864 + $0x78] sm:$0xff]
      %v1598 = vld [vmem:[%s864 + $0x80] sm:$0xff]
      %v1599 = vld [vmem:[%s864 + $0x88] sm:$0xff]
      %v1600 = vld [vmem:[%s864 + $0x90] sm:$0xff]
      %v1601 = vld [vmem:[%s864 + $0x98] sm:$0xff]
      %v1602 = vld [vmem:[%s864 + $0xa0] sm:$0xff]
      %v1603 = vld [vmem:[%s864 + $0xa8] sm:$0xff]
      %v1604 = vld [vmem:[%s864 + $0xb0] sm:$0xff]
      %v1605 = vld [vmem:[%s864 + $0xb8] sm:$0xff]
      %v1606 = vld [vmem:[%s864 + $0xc0] sm:$0xff]
      %v1607 = vld [vmem:[%s864 + $0xc8] sm:$0xff]
      %v1608 = vld [vmem:[%s864 + $0xd0] sm:$0xff]
      %v1609 = vld [vmem:[%s864 + $0xd8] sm:$0xff]
      %v1610 = vld [vmem:[%s864 + $0xe0] sm:$0xff]
      %v1611 = vld [vmem:[%s864 + $0xe8] sm:$0xff]
      %v1612 = vld [vmem:[%s864 + $0xf0] sm:$0xff]
      %v1613 = vld [vmem:[%s864 + $0xf8] sm:$0xff]
      %v1615 = vsel %vm1033, %v1581, 0
      %v1618 = vsel %vm1033, %v1582, 0
      %v1621 = vsel %vm1033, %v1583, 0
      %v1624 = vsel %vm1033, %v1584, 0
      %v1627 = vsel %vm1033, %v1585, 0
      %v1630 = vsel %vm1033, %v1586, 0
      %v1633 = vsel %vm1033, %v1587, 0
      %v1636 = vsel %vm1033, %v1588, 0
      %v1639 = vsel %vm1033, %v1589, 0
      %v1642 = vsel %vm1033, %v1590, 0
      %v1645 = vsel %vm1033, %v1591, 0
      %v1648 = vsel %vm1033, %v1592, 0
      %v1651 = vsel %vm1033, %v1593, 0
      %v1654 = vsel %vm1033, %v1594, 0
      %v1657 = vsel %vm1033, %v1595, 0
      %v1660 = vsel %vm1033, %v1596, 0
      %v1663 = vsel %vm1033, %v1597, 0
      %v1666 = vsel %vm1033, %v1598, 0
      %v1669 = vsel %vm1033, %v1599, 0
      %v1672 = vsel %vm1033, %v1600, 0
      %v1675 = vsel %vm1033, %v1601, 0
      %v1678 = vsel %vm1033, %v1602, 0
      %v1681 = vsel %vm1033, %v1603, 0
      %v1684 = vsel %vm1033, %v1604, 0
      %v1687 = vsel %vm1033, %v1605, 0
      %v1690 = vsel %vm1033, %v1606, 0
      %v1693 = vsel %vm1033, %v1607, 0
      %v1696 = vsel %vm1033, %v1608, 0
      %v1699 = vsel %vm1033, %v1609, 0
      %v1702 = vsel %vm1033, %v1610, 0
      %v1705 = vsel %vm1033, %v1611, 0
      %v1708 = vsel %vm1033, %v1612, 0
      %v1711 = vsel %vm1033, %v1613, 0
      %1713 = vmatprep.subr.mxu0 0.0
      %1714 = vmatpush1.xpose.msra.mxu0 %v1618
      %1715 = vmatprep.subr.mxu0 0.0
      %1716 = vmatpush1.xpose.msra.mxu0 %v1621
      %1717 = vmatprep.subr.mxu0 0.0
      %1718 = vmatpush1.xpose.msra.mxu0 %v1624
      %1719 = vmatprep.subr.mxu0 0.0
      %1720 = vmatpush1.xpose.msra.mxu0 %v1627
      %1721 = vmatprep.subr.mxu0 0.0
      %1722 = vmatpush1.xpose.msra.mxu0 %v1630
      %1723 = vmatprep.subr.mxu0 0.0
      %1724 = vmatpush1.xpose.msra.mxu0 %v1633
      %1725 = vmatprep.subr.mxu0 0.0
      %1726 = vmatpush1.xpose.msra.mxu0 %v1636
      %1727 = vmatprep.subr.mxu0 0.0
      %1728 = vmatpush1.xpose.msra.mxu0 %v1639
      %1729 = vmatprep.subr.mxu0 0.0
      %1730 = vmatpush1.xpose.msra.mxu0 %v1642
      %1731 = vmatprep.subr.mxu0 0.0
      %1732 = vmatpush1.xpose.msra.mxu0 %v1645
      %1733 = vmatprep.subr.mxu0 0.0
      %1734 = vmatpush1.xpose.msra.mxu0 %v1648
      %1735 = vmatprep.subr.mxu0 0.0
      %1736 = vmatpush1.xpose.msra.mxu0 %v1651
      %1737 = vmatprep.subr.mxu0 0.0
      %1738 = vmatpush1.xpose.msra.mxu0 %v1654
      %1739 = vmatprep.subr.mxu0 0.0
      %1740 = vmatpush1.xpose.msra.mxu0 %v1657
      %1741 = vmatprep.subr.mxu0 0.0
      %1742 = vmatpush1.xpose.msra.mxu0 %v1660
      %1743 = vmatprep.subr.mxu0 0.0
      %1744 = vmatpush1.xpose.msra.mxu0 %v1663
      %1745 = vmatprep.subr.mxu0 0.0
      %1746 = vmatpush1.xpose.msra.mxu0 %v1666
      %1747 = vmatprep.subr.mxu0 0.0
      %1748 = vmatpush1.xpose.msra.mxu0 %v1669
      %1749 = vmatprep.subr.mxu0 0.0
      %1750 = vmatpush1.xpose.msra.mxu0 %v1672
      %1751 = vmatprep.subr.mxu0 0.0
      %1752 = vmatpush1.xpose.msra.mxu0 %v1675
      %1753 = vmatprep.subr.mxu0 0.0
      %1754 = vmatpush1.xpose.msra.mxu0 %v1678
      %1755 = vmatprep.subr.mxu0 0.0
      %1756 = vmatpush1.xpose.msra.mxu0 %v1681
      %1757 = vmatprep.subr.mxu0 0.0
      %1758 = vmatpush1.xpose.msra.mxu0 %v1684
      %1759 = vmatprep.subr.mxu0 0.0
      %1760 = vmatpush1.xpose.msra.mxu0 %v1687
      %1761 = vmatprep.subr.mxu0 0.0
      %1762 = vmatpush1.xpose.msra.mxu0 %v1690
      %1763 = vmatprep.subr.mxu0 0.0
      %1764 = vmatpush1.xpose.msra.mxu0 %v1693
      %1765 = vmatprep.subr.mxu0 0.0
      %1766 = vmatpush1.xpose.msra.mxu0 %v1696
      %1767 = vmatprep.subr.mxu0 0.0
      %1768 = vmatpush1.xpose.msra.mxu0 %v1699
      %1769 = vmatprep.subr.mxu0 0.0
      %1770 = vmatpush1.xpose.msra.mxu0 %v1702
      %1771 = vmatprep.subr.mxu0 0.0
      %1772 = vmatpush1.xpose.msra.mxu0 %v1705
      %1773 = vmatprep.subr.mxu0 0.0
      %1774 = vmatpush1.xpose.msra.mxu0 %v1708
      %1775 = vmatprep.subr.mxu0 0.0
      %1776 = vmatpush1.xpose.msra.mxu0 %v1711
      %1777 = vmatprep.mubr.f32.mxu0 0.0
      %1778 = vmatmul.mubr.f32.gmra.mrb[0].mxu0 %v1615
      %v1779 = vpop.f32.mrb[0].mxu0
      %v1780 = vadd.f32 0.0, %v1779
      %v1781 = vpop.f32.mrb[0].mxu0
      %v1782 = vadd.f32 0.0, %v1781
      %1783 = vdwg.mxu0
      %v1784 = vadd.f32 %v1578, %v1780
      %v1785 = vadd.f32 %v1579, %v1782
      %s1786 = scalar_lea.vmem %s13, 16
      %v1787 = vld [vmem:[%s1786] sm:$0x7]
      %v1788 = vld [vmem:[%s874] sm:$0xff]
      %v1789 = vld [vmem:[%s874 + $0x8] sm:$0xff]
      %v1790 = vld [vmem:[%s874 + $0x10] sm:$0xff]
      %v1791 = vld [vmem:[%s874 + $0x18] sm:$0xff]
      %v1792 = vld [vmem:[%s874 + $0x20] sm:$0xff]
      %v1793 = vld [vmem:[%s874 + $0x28] sm:$0xff]
      %v1794 = vld [vmem:[%s874 + $0x30] sm:$0xff]
      %v1795 = vld [vmem:[%s874 + $0x38] sm:$0xff]
      %v1796 = vld [vmem:[%s874 + $0x40] sm:$0xff]
      %v1797 = vld [vmem:[%s874 + $0x48] sm:$0xff]
      %v1798 = vld [vmem:[%s874 + $0x50] sm:$0xff]
      %v1799 = vld [vmem:[%s874 + $0x58] sm:$0xff]
      %v1800 = vld [vmem:[%s874 + $0x60] sm:$0xff]
      %v1801 = vld [vmem:[%s874 + $0x68] sm:$0xff]
      %v1802 = vld [vmem:[%s874 + $0x70] sm:$0xff]
      %v1803 = vld [vmem:[%s874 + $0x78] sm:$0xff]
      %v1804 = vld [vmem:[%s874 + $0x80] sm:$0xff]
      %v1805 = vld [vmem:[%s874 + $0x88] sm:$0xff]
      %v1806 = vld [vmem:[%s874 + $0x90] sm:$0xff]
      %v1807 = vld [vmem:[%s874 + $0x98] sm:$0xff]
      %v1808 = vld [vmem:[%s874 + $0xa0] sm:$0xff]
      %v1809 = vld [vmem:[%s874 + $0xa8] sm:$0xff]
      %v1810 = vld [vmem:[%s874 + $0xb0] sm:$0xff]
      %v1811 = vld [vmem:[%s874 + $0xb8] sm:$0xff]
      %v1812 = vld [vmem:[%s874 + $0xc0] sm:$0xff]
      %v1813 = vld [vmem:[%s874 + $0xc8] sm:$0xff]
      %v1814 = vld [vmem:[%s874 + $0xd0] sm:$0xff]
      %v1815 = vld [vmem:[%s874 + $0xd8] sm:$0xff]
      %v1816 = vld [vmem:[%s874 + $0xe0] sm:$0xff]
      %v1817 = vld [vmem:[%s874 + $0xe8] sm:$0xff]
      %v1818 = vld [vmem:[%s874 + $0xf0] sm:$0xff]
      %v1819 = vld [vmem:[%s874 + $0xf8] sm:$0xff]
      %v1821 = vsel %vm1033, %v1787, 0
      %v1824 = vsel %vm1033, %v1788, 0
      %v1827 = vsel %vm1033, %v1789, 0
      %v1830 = vsel %vm1033, %v1790, 0
      %v1833 = vsel %vm1033, %v1791, 0
      %v1836 = vsel %vm1033, %v1792, 0
      %v1839 = vsel %vm1033, %v1793, 0
      %v1842 = vsel %vm1033, %v1794, 0
      %v1845 = vsel %vm1033, %v1795, 0
      %v1848 = vsel %vm1033, %v1796, 0
      %v1851 = vsel %vm1033, %v1797, 0
      %v1854 = vsel %vm1033, %v1798, 0
      %v1857 = vsel %vm1033, %v1799, 0
      %v1860 = vsel %vm1033, %v1800, 0
      %v1863 = vsel %vm1033, %v1801, 0
      %v1866 = vsel %vm1033, %v1802, 0
      %v1869 = vsel %vm1033, %v1803, 0
      %v1872 = vsel %vm1033, %v1804, 0
      %v1875 = vsel %vm1033, %v1805, 0
      %v1878 = vsel %vm1033, %v1806, 0
      %v1881 = vsel %vm1033, %v1807, 0
      %v1884 = vsel %vm1033, %v1808, 0
      %v1887 = vsel %vm1033, %v1809, 0
      %v1890 = vsel %vm1033, %v1810, 0
      %v1893 = vsel %vm1033, %v1811, 0
      %v1896 = vsel %vm1033, %v1812, 0
      %v1899 = vsel %vm1033, %v1813, 0
      %v1902 = vsel %vm1033, %v1814, 0
      %v1905 = vsel %vm1033, %v1815, 0
      %v1908 = vsel %vm1033, %v1816, 0
      %v1911 = vsel %vm1033, %v1817, 0
      %v1914 = vsel %vm1033, %v1818, 0
      %v1917 = vsel %vm1033, %v1819, 0
      %1919 = vmatprep.subr.mxu0 0.0
      %1920 = vmatpush1.xpose.msra.mxu0 %v1824
      %1921 = vmatprep.subr.mxu0 0.0
      %1922 = vmatpush1.xpose.msra.mxu0 %v1827
      %1923 = vmatprep.subr.mxu0 0.0
      %1924 = vmatpush1.xpose.msra.mxu0 %v1830
      %1925 = vmatprep.subr.mxu0 0.0
      %1926 = vmatpush1.xpose.msra.mxu0 %v1833
      %1927 = vmatprep.subr.mxu0 0.0
      %1928 = vmatpush1.xpose.msra.mxu0 %v1836
      %1929 = vmatprep.subr.mxu0 0.0
      %1930 = vmatpush1.xpose.msra.mxu0 %v1839
      %1931 = vmatprep.subr.mxu0 0.0
      %1932 = vmatpush1.xpose.msra.mxu0 %v1842
      %1933 = vmatprep.subr.mxu0 0.0
      %1934 = vmatpush1.xpose.msra.mxu0 %v1845
      %1935 = vmatprep.subr.mxu0 0.0
      %1936 = vmatpush1.xpose.msra.mxu0 %v1848
      %1937 = vmatprep.subr.mxu0 0.0
      %1938 = vmatpush1.xpose.msra.mxu0 %v1851
      %1939 = vmatprep.subr.mxu0 0.0
      %1940 = vmatpush1.xpose.msra.mxu0 %v1854
      %1941 = vmatprep.subr.mxu0 0.0
      %1942 = vmatpush1.xpose.msra.mxu0 %v1857
      %1943 = vmatprep.subr.mxu0 0.0
      %1944 = vmatpush1.xpose.msra.mxu0 %v1860
      %1945 = vmatprep.subr.mxu0 0.0
      %1946 = vmatpush1.xpose.msra.mxu0 %v1863
      %1947 = vmatprep.subr.mxu0 0.0
      %1948 = vmatpush1.xpose.msra.mxu0 %v1866
      %1949 = vmatprep.subr.mxu0 0.0
      %1950 = vmatpush1.xpose.msra.mxu0 %v1869
      %1951 = vmatprep.subr.mxu0 0.0
      %1952 = vmatpush1.xpose.msra.mxu0 %v1872
      %1953 = vmatprep.subr.mxu0 0.0
      %1954 = vmatpush1.xpose.msra.mxu0 %v1875
      %1955 = vmatprep.subr.mxu0 0.0
      %1956 = vmatpush1.xpose.msra.mxu0 %v1878
      %1957 = vmatprep.subr.mxu0 0.0
      %1958 = vmatpush1.xpose.msra.mxu0 %v1881
      %1959 = vmatprep.subr.mxu0 0.0
      %1960 = vmatpush1.xpose.msra.mxu0 %v1884
      %1961 = vmatprep.subr.mxu0 0.0
      %1962 = vmatpush1.xpose.msra.mxu0 %v1887
      %1963 = vmatprep.subr.mxu0 0.0
      %1964 = vmatpush1.xpose.msra.mxu0 %v1890
      %1965 = vmatprep.subr.mxu0 0.0
      %1966 = vmatpush1.xpose.msra.mxu0 %v1893
      %1967 = vmatprep.subr.mxu0 0.0
      %1968 = vmatpush1.xpose.msra.mxu0 %v1896
      %1969 = vmatprep.subr.mxu0 0.0
      %1970 = vmatpush1.xpose.msra.mxu0 %v1899
      %1971 = vmatprep.subr.mxu0 0.0
      %1972 = vmatpush1.xpose.msra.mxu0 %v1902
      %1973 = vmatprep.subr.mxu0 0.0
      %1974 = vmatpush1.xpose.msra.mxu0 %v1905
      %1975 = vmatprep.subr.mxu0 0.0
      %1976 = vmatpush1.xpose.msra.mxu0 %v1908
      %1977 = vmatprep.subr.mxu0 0.0
      %1978 = vmatpush1.xpose.msra.mxu0 %v1911
      %1979 = vmatprep.subr.mxu0 0.0
      %1980 = vmatpush1.xpose.msra.mxu0 %v1914
      %1981 = vmatprep.subr.mxu0 0.0
      %1982 = vmatpush1.xpose.msra.mxu0 %v1917
      %1983 = vmatprep.mubr.f32.mxu0 0.0
      %1984 = vmatmul.mubr.f32.gmra.mrb[0].mxu0 %v1821
      %v1985 = vpop.f32.mrb[0].mxu0
      %v1986 = vadd.f32 0.0, %v1985
      %v1987 = vpop.f32.mrb[0].mxu0
      %v1988 = vadd.f32 0.0, %v1987
      %1989 = vdwg.mxu0
      %v1990 = vadd.f32 %v1784, %v1986
      %v1991 = vadd.f32 %v1785, %v1988
      %s1992 = scalar_lea.vmem %s13, 20
      %v1993 = vld [vmem:[%s1992] sm:$0x7]
      %v1994 = vld [vmem:[%s884] sm:$0xff]
      %v1995 = vld [vmem:[%s884 + $0x8] sm:$0xff]
      %v1996 = vld [vmem:[%s884 + $0x10] sm:$0xff]
      %v1997 = vld [vmem:[%s884 + $0x18] sm:$0xff]
      %v1998 = vld [vmem:[%s884 + $0x20] sm:$0xff]
      %v1999 = vld [vmem:[%s884 + $0x28] sm:$0xff]
      %v2000 = vld [vmem:[%s884 + $0x30] sm:$0xff]
      %v2001 = vld [vmem:[%s884 + $0x38] sm:$0xff]
      %v2002 = vld [vmem:[%s884 + $0x40] sm:$0xff]
      %v2003 = vld [vmem:[%s884 + $0x48] sm:$0xff]
      %v2004 = vld [vmem:[%s884 + $0x50] sm:$0xff]
      %v2005 = vld [vmem:[%s884 + $0x58] sm:$0xff]
      %v2006 = vld [vmem:[%s884 + $0x60] sm:$0xff]
      %v2007 = vld [vmem:[%s884 + $0x68] sm:$0xff]
      %v2008 = vld [vmem:[%s884 + $0x70] sm:$0xff]
      %v2009 = vld [vmem:[%s884 + $0x78] sm:$0xff]
      %v2010 = vld [vmem:[%s884 + $0x80] sm:$0xff]
      %v2011 = vld [vmem:[%s884 + $0x88] sm:$0xff]
      %v2012 = vld [vmem:[%s884 + $0x90] sm:$0xff]
      %v2013 = vld [vmem:[%s884 + $0x98] sm:$0xff]
      %v2014 = vld [vmem:[%s884 + $0xa0] sm:$0xff]
      %v2015 = vld [vmem:[%s884 + $0xa8] sm:$0xff]
      %v2016 = vld [vmem:[%s884 + $0xb0] sm:$0xff]
      %v2017 = vld [vmem:[%s884 + $0xb8] sm:$0xff]
      %v2018 = vld [vmem:[%s884 + $0xc0] sm:$0xff]
      %v2019 = vld [vmem:[%s884 + $0xc8] sm:$0xff]
      %v2020 = vld [vmem:[%s884 + $0xd0] sm:$0xff]
      %v2021 = vld [vmem:[%s884 + $0xd8] sm:$0xff]
      %v2022 = vld [vmem:[%s884 + $0xe0] sm:$0xff]
      %v2023 = vld [vmem:[%s884 + $0xe8] sm:$0xff]
      %v2024 = vld [vmem:[%s884 + $0xf0] sm:$0xff]
      %v2025 = vld [vmem:[%s884 + $0xf8] sm:$0xff]
      %v2027 = vsel %vm1033, %v1993, 0
      %v2030 = vsel %vm1033, %v1994, 0
      %v2033 = vsel %vm1033, %v1995, 0
      %v2036 = vsel %vm1033, %v1996, 0
      %v2039 = vsel %vm1033, %v1997, 0
      %v2042 = vsel %vm1033, %v1998, 0
      %v2045 = vsel %vm1033, %v1999, 0
      %v2048 = vsel %vm1033, %v2000, 0
      %v2051 = vsel %vm1033, %v2001, 0
      %v2054 = vsel %vm1033, %v2002, 0
      %v2057 = vsel %vm1033, %v2003, 0
      %v2060 = vsel %vm1033, %v2004, 0
      %v2063 = vsel %vm1033, %v2005, 0
      %v2066 = vsel %vm1033, %v2006, 0
      %v2069 = vsel %vm1033, %v2007, 0
      %v2072 = vsel %vm1033, %v2008, 0
      %v2075 = vsel %vm1033, %v2009, 0
      %v2078 = vsel %vm1033, %v2010, 0
      %v2081 = vsel %vm1033, %v2011, 0
      %v2084 = vsel %vm1033, %v2012, 0
      %v2087 = vsel %vm1033, %v2013, 0
      %v2090 = vsel %vm1033, %v2014, 0
      %v2093 = vsel %vm1033, %v2015, 0
      %v2096 = vsel %vm1033, %v2016, 0
      %v2099 = vsel %vm1033, %v2017, 0
      %v2102 = vsel %vm1033, %v2018, 0
      %v2105 = vsel %vm1033, %v2019, 0
      %v2108 = vsel %vm1033, %v2020, 0
      %v2111 = vsel %vm1033, %v2021, 0
      %v2114 = vsel %vm1033, %v2022, 0
      %v2117 = vsel %vm1033, %v2023, 0
      %v2120 = vsel %vm1033, %v2024, 0
      %v2123 = vsel %vm1033, %v2025, 0
      %2125 = vmatprep.subr.mxu0 0.0
      %2126 = vmatpush1.xpose.msra.mxu0 %v2030
      %2127 = vmatprep.subr.mxu0 0.0
      %2128 = vmatpush1.xpose.msra.mxu0 %v2033
      %2129 = vmatprep.subr.mxu0 0.0
      %2130 = vmatpush1.xpose.msra.mxu0 %v2036
      %2131 = vmatprep.subr.mxu0 0.0
      %2132 = vmatpush1.xpose.msra.mxu0 %v2039
      %2133 = vmatprep.subr.mxu0 0.0
      %2134 = vmatpush1.xpose.msra.mxu0 %v2042
      %2135 = vmatprep.subr.mxu0 0.0
      %2136 = vmatpush1.xpose.msra.mxu0 %v2045
      %2137 = vmatprep.subr.mxu0 0.0
      %2138 = vmatpush1.xpose.msra.mxu0 %v2048
      %2139 = vmatprep.subr.mxu0 0.0
      %2140 = vmatpush1.xpose.msra.mxu0 %v2051
      %2141 = vmatprep.subr.mxu0 0.0
      %2142 = vmatpush1.xpose.msra.mxu0 %v2054
      %2143 = vmatprep.subr.mxu0 0.0
      %2144 = vmatpush1.xpose.msra.mxu0 %v2057
      %2145 = vmatprep.subr.mxu0 0.0
      %2146 = vmatpush1.xpose.msra.mxu0 %v2060
      %2147 = vmatprep.subr.mxu0 0.0
      %2148 = vmatpush1.xpose.msra.mxu0 %v2063
      %2149 = vmatprep.subr.mxu0 0.0
      %2150 = vmatpush1.xpose.msra.mxu0 %v2066
      %2151 = vmatprep.subr.mxu0 0.0
      %2152 = vmatpush1.xpose.msra.mxu0 %v2069
      %2153 = vmatprep.subr.mxu0 0.0
      %2154 = vmatpush1.xpose.msra.mxu0 %v2072
      %2155 = vmatprep.subr.mxu0 0.0
      %2156 = vmatpush1.xpose.msra.mxu0 %v2075
      %2157 = vmatprep.subr.mxu0 0.0
      %2158 = vmatpush1.xpose.msra.mxu0 %v2078
      %2159 = vmatprep.subr.mxu0 0.0
      %2160 = vmatpush1.xpose.msra.mxu0 %v2081
      %2161 = vmatprep.subr.mxu0 0.0
      %2162 = vmatpush1.xpose.msra.mxu0 %v2084
      %2163 = vmatprep.subr.mxu0 0.0
      %2164 = vmatpush1.xpose.msra.mxu0 %v2087
      %2165 = vmatprep.subr.mxu0 0.0
      %2166 = vmatpush1.xpose.msra.mxu0 %v2090
      %2167 = vmatprep.subr.mxu0 0.0
      %2168 = vmatpush1.xpose.msra.mxu0 %v2093
      %2169 = vmatprep.subr.mxu0 0.0
      %2170 = vmatpush1.xpose.msra.mxu0 %v2096
      %2171 = vmatprep.subr.mxu0 0.0
      %2172 = vmatpush1.xpose.msra.mxu0 %v2099
      %2173 = vmatprep.subr.mxu0 0.0
      %2174 = vmatpush1.xpose.msra.mxu0 %v2102
      %2175 = vmatprep.subr.mxu0 0.0
      %2176 = vmatpush1.xpose.msra.mxu0 %v2105
      %2177 = vmatprep.subr.mxu0 0.0
      %2178 = vmatpush1.xpose.msra.mxu0 %v2108
      %2179 = vmatprep.subr.mxu0 0.0
      %2180 = vmatpush1.xpose.msra.mxu0 %v2111
      %2181 = vmatprep.subr.mxu0 0.0
      %2182 = vmatpush1.xpose.msra.mxu0 %v2114
      %2183 = vmatprep.subr.mxu0 0.0
      %2184 = vmatpush1.xpose.msra.mxu0 %v2117
      %2185 = vmatprep.subr.mxu0 0.0
      %2186 = vmatpush1.xpose.msra.mxu0 %v2120
      %2187 = vmatprep.subr.mxu0 0.0
      %2188 = vmatpush1.xpose.msra.mxu0 %v2123
      %2189 = vmatprep.mubr.f32.mxu0 0.0
      %2190 = vmatmul.mubr.f32.gmra.mrb[0].mxu0 %v2027
      %v2191 = vpop.f32.mrb[0].mxu0
      %v2192 = vadd.f32 0.0, %v2191
      %v2193 = vpop.f32.mrb[0].mxu0
      %v2194 = vadd.f32 0.0, %v2193
      %2195 = vdwg.mxu0
      %v2196 = vadd.f32 %v1990, %v2192
      %v2197 = vadd.f32 %v1991, %v2194
      %s2198 = scalar_lea.vmem %s13, 24
      %v2199 = vld [vmem:[%s2198] sm:$0x7]
      %v2200 = vld [vmem:[%s894] sm:$0xff]
      %v2201 = vld [vmem:[%s894 + $0x8] sm:$0xff]
      %v2202 = vld [vmem:[%s894 + $0x10] sm:$0xff]
      %v2203 = vld [vmem:[%s894 + $0x18] sm:$0xff]
      %v2204 = vld [vmem:[%s894 + $0x20] sm:$0xff]
      %v2205 = vld [vmem:[%s894 + $0x28] sm:$0xff]
      %v2206 = vld [vmem:[%s894 + $0x30] sm:$0xff]
      %v2207 = vld [vmem:[%s894 + $0x38] sm:$0xff]
      %v2208 = vld [vmem:[%s894 + $0x40] sm:$0xff]
      %v2209 = vld [vmem:[%s894 + $0x48] sm:$0xff]
      %v2210 = vld [vmem:[%s894 + $0x50] sm:$0xff]
      %v2211 = vld [vmem:[%s894 + $0x58] sm:$0xff]
      %v2212 = vld [vmem:[%s894 + $0x60] sm:$0xff]
      %v2213 = vld [vmem:[%s894 + $0x68] sm:$0xff]
      %v2214 = vld [vmem:[%s894 + $0x70] sm:$0xff]
      %v2215 = vld [vmem:[%s894 + $0x78] sm:$0xff]
      %v2216 = vld [vmem:[%s894 + $0x80] sm:$0xff]
      %v2217 = vld [vmem:[%s894 + $0x88] sm:$0xff]
      %v2218 = vld [vmem:[%s894 + $0x90] sm:$0xff]
      %v2219 = vld [vmem:[%s894 + $0x98] sm:$0xff]
      %v2220 = vld [vmem:[%s894 + $0xa0] sm:$0xff]
      %v2221 = vld [vmem:[%s894 + $0xa8] sm:$0xff]
      %v2222 = vld [vmem:[%s894 + $0xb0] sm:$0xff]
      %v2223 = vld [vmem:[%s894 + $0xb8] sm:$0xff]
      %v2224 = vld [vmem:[%s894 + $0xc0] sm:$0xff]
      %v2225 = vld [vmem:[%s894 + $0xc8] sm:$0xff]
      %v2226 = vld [vmem:[%s894 + $0xd0] sm:$0xff]
      %v2227 = vld [vmem:[%s894 + $0xd8] sm:$0xff]
      %v2228 = vld [vmem:[%s894 + $0xe0] sm:$0xff]
      %v2229 = vld [vmem:[%s894 + $0xe8] sm:$0xff]
      %v2230 = vld [vmem:[%s894 + $0xf0] sm:$0xff]
      %v2231 = vld [vmem:[%s894 + $0xf8] sm:$0xff]
      %v2233 = vsel %vm1033, %v2199, 0
      %v2236 = vsel %vm1033, %v2200, 0
      %v2239 = vsel %vm1033, %v2201, 0
      %v2242 = vsel %vm1033, %v2202, 0
      %v2245 = vsel %vm1033, %v2203, 0
      %v2248 = vsel %vm1033, %v2204, 0
      %v2251 = vsel %vm1033, %v2205, 0
      %v2254 = vsel %vm1033, %v2206, 0
      %v2257 = vsel %vm1033, %v2207, 0
      %v2260 = vsel %vm1033, %v2208, 0
      %v2263 = vsel %vm1033, %v2209, 0
      %v2266 = vsel %vm1033, %v2210, 0
      %v2269 = vsel %vm1033, %v2211, 0
      %v2272 = vsel %vm1033, %v2212, 0
      %v2275 = vsel %vm1033, %v2213, 0
      %v2278 = vsel %vm1033, %v2214, 0
      %v2281 = vsel %vm1033, %v2215, 0
      %v2284 = vsel %vm1033, %v2216, 0
      %v2287 = vsel %vm1033, %v2217, 0
      %v2290 = vsel %vm1033, %v2218, 0
      %v2293 = vsel %vm1033, %v2219, 0
      %v2296 = vsel %vm1033, %v2220, 0
      %v2299 = vsel %vm1033, %v2221, 0
      %v2302 = vsel %vm1033, %v2222, 0
      %v2305 = vsel %vm1033, %v2223, 0
      %v2308 = vsel %vm1033, %v2224, 0
      %v2311 = vsel %vm1033, %v2225, 0
      %v2314 = vsel %vm1033, %v2226, 0
      %v2317 = vsel %vm1033, %v2227, 0
      %v2320 = vsel %vm1033, %v2228, 0
      %v2323 = vsel %vm1033, %v2229, 0
      %v2326 = vsel %vm1033, %v2230, 0
      %v2329 = vsel %vm1033, %v2231, 0
      %2331 = vmatprep.subr.mxu0 0.0
      %2332 = vmatpush1.xpose.msra.mxu0 %v2236
      %2333 = vmatprep.subr.mxu0 0.0
      %2334 = vmatpush1.xpose.msra.mxu0 %v2239
      %2335 = vmatprep.subr.mxu0 0.0
      %2336 = vmatpush1.xpose.msra.mxu0 %v2242
      %2337 = vmatprep.subr.mxu0 0.0
      %2338 = vmatpush1.xpose.msra.mxu0 %v2245
      %2339 = vmatprep.subr.mxu0 0.0
      %2340 = vmatpush1.xpose.msra.mxu0 %v2248
      %2341 = vmatprep.subr.mxu0 0.0
      %2342 = vmatpush1.xpose.msra.mxu0 %v2251
      %2343 = vmatprep.subr.mxu0 0.0
      %2344 = vmatpush1.xpose.msra.mxu0 %v2254
      %2345 = vmatprep.subr.mxu0 0.0
      %2346 = vmatpush1.xpose.msra.mxu0 %v2257
      %2347 = vmatprep.subr.mxu0 0.0
      %2348 = vmatpush1.xpose.msra.mxu0 %v2260
      %2349 = vmatprep.subr.mxu0 0.0
      %2350 = vmatpush1.xpose.msra.mxu0 %v2263
      %2351 = vmatprep.subr.mxu0 0.0
      %2352 = vmatpush1.xpose.msra.mxu0 %v2266
      %2353 = vmatprep.subr.mxu0 0.0
      %2354 = vmatpush1.xpose.msra.mxu0 %v2269
      %2355 = vmatprep.subr.mxu0 0.0
      %2356 = vmatpush1.xpose.msra.mxu0 %v2272
      %2357 = vmatprep.subr.mxu0 0.0
      %2358 = vmatpush1.xpose.msra.mxu0 %v2275
      %2359 = vmatprep.subr.mxu0 0.0
      %2360 = vmatpush1.xpose.msra.mxu0 %v2278
      %2361 = vmatprep.subr.mxu0 0.0
      %2362 = vmatpush1.xpose.msra.mxu0 %v2281
      %2363 = vmatprep.subr.mxu0 0.0
      %2364 = vmatpush1.xpose.msra.mxu0 %v2284
      %2365 = vmatprep.subr.mxu0 0.0
      %2366 = vmatpush1.xpose.msra.mxu0 %v2287
      %2367 = vmatprep.subr.mxu0 0.0
      %2368 = vmatpush1.xpose.msra.mxu0 %v2290
      %2369 = vmatprep.subr.mxu0 0.0
      %2370 = vmatpush1.xpose.msra.mxu0 %v2293
      %2371 = vmatprep.subr.mxu0 0.0
      %2372 = vmatpush1.xpose.msra.mxu0 %v2296
      %2373 = vmatprep.subr.mxu0 0.0
      %2374 = vmatpush1.xpose.msra.mxu0 %v2299
      %2375 = vmatprep.subr.mxu0 0.0
      %2376 = vmatpush1.xpose.msra.mxu0 %v2302
      %2377 = vmatprep.subr.mxu0 0.0
      %2378 = vmatpush1.xpose.msra.mxu0 %v2305
      %2379 = vmatprep.subr.mxu0 0.0
      %2380 = vmatpush1.xpose.msra.mxu0 %v2308
      %2381 = vmatprep.subr.mxu0 0.0
      %2382 = vmatpush1.xpose.msra.mxu0 %v2311
      %2383 = vmatprep.subr.mxu0 0.0
      %2384 = vmatpush1.xpose.msra.mxu0 %v2314
      %2385 = vmatprep.subr.mxu0 0.0
      %2386 = vmatpush1.xpose.msra.mxu0 %v2317
      %2387 = vmatprep.subr.mxu0 0.0
      %2388 = vmatpush1.xpose.msra.mxu0 %v2320
      %2389 = vmatprep.subr.mxu0 0.0
      %2390 = vmatpush1.xpose.msra.mxu0 %v2323
      %2391 = vmatprep.subr.mxu0 0.0
      %2392 = vmatpush1.xpose.msra.mxu0 %v2326
      %2393 = vmatprep.subr.mxu0 0.0
      %2394 = vmatpush1.xpose.msra.mxu0 %v2329
      %2395 = vmatprep.mubr.f32.mxu0 0.0
      %2396 = vmatmul.mubr.f32.gmra.mrb[0].mxu0 %v2233
      %v2397 = vpop.f32.mrb[0].mxu0
      %v2398 = vadd.f32 0.0, %v2397
      %v2399 = vpop.f32.mrb[0].mxu0
      %v2400 = vadd.f32 0.0, %v2399
      %2401 = vdwg.mxu0
      %v2402 = vadd.f32 %v2196, %v2398
      %v2403 = vadd.f32 %v2197, %v2400
      %s2404 = scalar_lea.vmem %s13, 28
      %v2405 = vld [vmem:[%s2404] sm:$0x7]
      %v2406 = vld [vmem:[%s904] sm:$0xff]
      %v2407 = vld [vmem:[%s904 + $0x8] sm:$0xff]
      %v2408 = vld [vmem:[%s904 + $0x10] sm:$0xff]
      %v2409 = vld [vmem:[%s904 + $0x18] sm:$0xff]
      %v2410 = vld [vmem:[%s904 + $0x20] sm:$0xff]
      %v2411 = vld [vmem:[%s904 + $0x28] sm:$0xff]
      %v2412 = vld [vmem:[%s904 + $0x30] sm:$0xff]
      %v2413 = vld [vmem:[%s904 + $0x38] sm:$0xff]
      %v2414 = vld [vmem:[%s904 + $0x40] sm:$0xff]
      %v2415 = vld [vmem:[%s904 + $0x48] sm:$0xff]
      %v2416 = vld [vmem:[%s904 + $0x50] sm:$0xff]
      %v2417 = vld [vmem:[%s904 + $0x58] sm:$0xff]
      %v2418 = vld [vmem:[%s904 + $0x60] sm:$0xff]
      %v2419 = vld [vmem:[%s904 + $0x68] sm:$0xff]
      %v2420 = vld [vmem:[%s904 + $0x70] sm:$0xff]
      %v2421 = vld [vmem:[%s904 + $0x78] sm:$0xff]
      %v2422 = vld [vmem:[%s904 + $0x80] sm:$0xff]
      %v2423 = vld [vmem:[%s904 + $0x88] sm:$0xff]
      %v2424 = vld [vmem:[%s904 + $0x90] sm:$0xff]
      %v2425 = vld [vmem:[%s904 + $0x98] sm:$0xff]
      %v2426 = vld [vmem:[%s904 + $0xa0] sm:$0xff]
      %v2427 = vld [vmem:[%s904 + $0xa8] sm:$0xff]
      %v2428 = vld [vmem:[%s904 + $0xb0] sm:$0xff]
      %v2429 = vld [vmem:[%s904 + $0xb8] sm:$0xff]
      %v2430 = vld [vmem:[%s904 + $0xc0] sm:$0xff]
      %v2431 = vld [vmem:[%s904 + $0xc8] sm:$0xff]
      %v2432 = vld [vmem:[%s904 + $0xd0] sm:$0xff]
      %v2433 = vld [vmem:[%s904 + $0xd8] sm:$0xff]
      %v2434 = vld [vmem:[%s904 + $0xe0] sm:$0xff]
      %v2435 = vld [vmem:[%s904 + $0xe8] sm:$0xff]
      %v2436 = vld [vmem:[%s904 + $0xf0] sm:$0xff]
      %v2437 = vld [vmem:[%s904 + $0xf8] sm:$0xff]
      %v2439 = vsel %vm1033, %v2405, 0
      %v2442 = vsel %vm1033, %v2406, 0
      %v2445 = vsel %vm1033, %v2407, 0
      %v2448 = vsel %vm1033, %v2408, 0
      %v2451 = vsel %vm1033, %v2409, 0
      %v2454 = vsel %vm1033, %v2410, 0
      %v2457 = vsel %vm1033, %v2411, 0
      %v2460 = vsel %vm1033, %v2412, 0
      %v2463 = vsel %vm1033, %v2413, 0
      %v2466 = vsel %vm1033, %v2414, 0
      %v2469 = vsel %vm1033, %v2415, 0
      %v2472 = vsel %vm1033, %v2416, 0
      %v2475 = vsel %vm1033, %v2417, 0
      %v2478 = vsel %vm1033, %v2418, 0
      %v2481 = vsel %vm1033, %v2419, 0
      %v2484 = vsel %vm1033, %v2420, 0
      %v2487 = vsel %vm1033, %v2421, 0
      %v2490 = vsel %vm1033, %v2422, 0
      %v2493 = vsel %vm1033, %v2423, 0
      %v2496 = vsel %vm1033, %v2424, 0
      %v2499 = vsel %vm1033, %v2425, 0
      %v2502 = vsel %vm1033, %v2426, 0
      %v2505 = vsel %vm1033, %v2427, 0
      %v2508 = vsel %vm1033, %v2428, 0
      %v2511 = vsel %vm1033, %v2429, 0
      %v2514 = vsel %vm1033, %v2430, 0
      %v2517 = vsel %vm1033, %v2431, 0
      %v2520 = vsel %vm1033, %v2432, 0
      %v2523 = vsel %vm1033, %v2433, 0
      %v2526 = vsel %vm1033, %v2434, 0
      %v2529 = vsel %vm1033, %v2435, 0
      %v2532 = vsel %vm1033, %v2436, 0
      %v2535 = vsel %vm1033, %v2437, 0
      %2537 = vmatprep.subr.mxu0 0.0
      %2538 = vmatpush1.xpose.msra.mxu0 %v2442
      %2539 = vmatprep.subr.mxu0 0.0
      %2540 = vmatpush1.xpose.msra.mxu0 %v2445
      %2541 = vmatprep.subr.mxu0 0.0
      %2542 = vmatpush1.xpose.msra.mxu0 %v2448
      %2543 = vmatprep.subr.mxu0 0.0
      %2544 = vmatpush1.xpose.msra.mxu0 %v2451
      %2545 = vmatprep.subr.mxu0 0.0
      %2546 = vmatpush1.xpose.msra.mxu0 %v2454
      %2547 = vmatprep.subr.mxu0 0.0
      %2548 = vmatpush1.xpose.msra.mxu0 %v2457
      %2549 = vmatprep.subr.mxu0 0.0
      %2550 = vmatpush1.xpose.msra.mxu0 %v2460
      %2551 = vmatprep.subr.mxu0 0.0
      %2552 = vmatpush1.xpose.msra.mxu0 %v2463
      %2553 = vmatprep.subr.mxu0 0.0
      %2554 = vmatpush1.xpose.msra.mxu0 %v2466
      %2555 = vmatprep.subr.mxu0 0.0
      %2556 = vmatpush1.xpose.msra.mxu0 %v2469
      %2557 = vmatprep.subr.mxu0 0.0
      %2558 = vmatpush1.xpose.msra.mxu0 %v2472
      %2559 = vmatprep.subr.mxu0 0.0
      %2560 = vmatpush1.xpose.msra.mxu0 %v2475
      %2561 = vmatprep.subr.mxu0 0.0
      %2562 = vmatpush1.xpose.msra.mxu0 %v2478
      %2563 = vmatprep.subr.mxu0 0.0
      %2564 = vmatpush1.xpose.msra.mxu0 %v2481
      %2565 = vmatprep.subr.mxu0 0.0
      %2566 = vmatpush1.xpose.msra.mxu0 %v2484
      %2567 = vmatprep.subr.mxu0 0.0
      %2568 = vmatpush1.xpose.msra.mxu0 %v2487
      %2569 = vmatprep.subr.mxu0 0.0
      %2570 = vmatpush1.xpose.msra.mxu0 %v2490
      %2571 = vmatprep.subr.mxu0 0.0
      %2572 = vmatpush1.xpose.msra.mxu0 %v2493
      %2573 = vmatprep.subr.mxu0 0.0
      %2574 = vmatpush1.xpose.msra.mxu0 %v2496
      %2575 = vmatprep.subr.mxu0 0.0
      %2576 = vmatpush1.xpose.msra.mxu0 %v2499
      %2577 = vmatprep.subr.mxu0 0.0
      %2578 = vmatpush1.xpose.msra.mxu0 %v2502
      %2579 = vmatprep.subr.mxu0 0.0
      %2580 = vmatpush1.xpose.msra.mxu0 %v2505
      %2581 = vmatprep.subr.mxu0 0.0
      %2582 = vmatpush1.xpose.msra.mxu0 %v2508
      %2583 = vmatprep.subr.mxu0 0.0
      %2584 = vmatpush1.xpose.msra.mxu0 %v2511
      %2585 = vmatprep.subr.mxu0 0.0
      %2586 = vmatpush1.xpose.msra.mxu0 %v2514
      %2587 = vmatprep.subr.mxu0 0.0
      %2588 = vmatpush1.xpose.msra.mxu0 %v2517
      %2589 = vmatprep.subr.mxu0 0.0
      %2590 = vmatpush1.xpose.msra.mxu0 %v2520
      %2591 = vmatprep.subr.mxu0 0.0
      %2592 = vmatpush1.xpose.msra.mxu0 %v2523
      %2593 = vmatprep.subr.mxu0 0.0
      %2594 = vmatpush1.xpose.msra.mxu0 %v2526
      %2595 = vmatprep.subr.mxu0 0.0
      %2596 = vmatpush1.xpose.msra.mxu0 %v2529
      %2597 = vmatprep.subr.mxu0 0.0
      %2598 = vmatpush1.xpose.msra.mxu0 %v2532
      %2599 = vmatprep.subr.mxu0 0.0
      %2600 = vmatpush1.xpose.msra.mxu0 %v2535
      %2601 = vmatprep.mubr.f32.mxu0 0.0
      %2602 = vmatmul.mubr.f32.gmra.mrb[0].mxu0 %v2439
      %v2603 = vpop.f32.mrb[0].mxu0
      %v2604 = vadd.f32 0.0, %v2603
      %v2605 = vpop.f32.mrb[0].mxu0
      %v2606 = vadd.f32 0.0, %v2605
      %2607 = vdwg.mxu0
      %v2608 = vadd.f32 %v2402, %v2604
      %v2609 = vadd.f32 %v2403, %v2606
      %s2610 = scalar_lea.vmem %s13, 32
      %v2611 = vld [vmem:[%s2610] sm:$0x7]
      %v2612 = vld [vmem:[%s914] sm:$0xff]
      %v2613 = vld [vmem:[%s914 + $0x8] sm:$0xff]
      %v2614 = vld [vmem:[%s914 + $0x10] sm:$0xff]
      %v2615 = vld [vmem:[%s914 + $0x18] sm:$0xff]
      %v2616 = vld [vmem:[%s914 + $0x20] sm:$0xff]
      %v2617 = vld [vmem:[%s914 + $0x28] sm:$0xff]
      %v2618 = vld [vmem:[%s914 + $0x30] sm:$0xff]
      %v2619 = vld [vmem:[%s914 + $0x38] sm:$0xff]
      %v2620 = vld [vmem:[%s914 + $0x40] sm:$0xff]
      %v2621 = vld [vmem:[%s914 + $0x48] sm:$0xff]
      %v2622 = vld [vmem:[%s914 + $0x50] sm:$0xff]
      %v2623 = vld [vmem:[%s914 + $0x58] sm:$0xff]
      %v2624 = vld [vmem:[%s914 + $0x60] sm:$0xff]
      %v2625 = vld [vmem:[%s914 + $0x68] sm:$0xff]
      %v2626 = vld [vmem:[%s914 + $0x70] sm:$0xff]
      %v2627 = vld [vmem:[%s914 + $0x78] sm:$0xff]
      %v2628 = vld [vmem:[%s914 + $0x80] sm:$0xff]
      %v2629 = vld [vmem:[%s914 + $0x88] sm:$0xff]
      %v2630 = vld [vmem:[%s914 + $0x90] sm:$0xff]
      %v2631 = vld [vmem:[%s914 + $0x98] sm:$0xff]
      %v2632 = vld [vmem:[%s914 + $0xa0] sm:$0xff]
      %v2633 = vld [vmem:[%s914 + $0xa8] sm:$0xff]
      %v2634 = vld [vmem:[%s914 + $0xb0] sm:$0xff]
      %v2635 = vld [vmem:[%s914 + $0xb8] sm:$0xff]
      %v2636 = vld [vmem:[%s914 + $0xc0] sm:$0xff]
      %v2637 = vld [vmem:[%s914 + $0xc8] sm:$0xff]
      %v2638 = vld [vmem:[%s914 + $0xd0] sm:$0xff]
      %v2639 = vld [vmem:[%s914 + $0xd8] sm:$0xff]
      %v2640 = vld [vmem:[%s914 + $0xe0] sm:$0xff]
      %v2641 = vld [vmem:[%s914 + $0xe8] sm:$0xff]
      %v2642 = vld [vmem:[%s914 + $0xf0] sm:$0xff]
      %v2643 = vld [vmem:[%s914 + $0xf8] sm:$0xff]
      %v2645 = vsel %vm1033, %v2611, 0
      %v2648 = vsel %vm1033, %v2612, 0
      %v2651 = vsel %vm1033, %v2613, 0
      %v2654 = vsel %vm1033, %v2614, 0
      %v2657 = vsel %vm1033, %v2615, 0
      %v2660 = vsel %vm1033, %v2616, 0
      %v2663 = vsel %vm1033, %v2617, 0
      %v2666 = vsel %vm1033, %v2618, 0
      %v2669 = vsel %vm1033, %v2619, 0
      %v2672 = vsel %vm1033, %v2620, 0
      %v2675 = vsel %vm1033, %v2621, 0
      %v2678 = vsel %vm1033, %v2622, 0
      %v2681 = vsel %vm1033, %v2623, 0
      %v2684 = vsel %vm1033, %v2624, 0
      %v2687 = vsel %vm1033, %v2625, 0
      %v2690 = vsel %vm1033, %v2626, 0
      %v2693 = vsel %vm1033, %v2627, 0
      %v2696 = vsel %vm1033, %v2628, 0
      %v2699 = vsel %vm1033, %v2629, 0
      %v2702 = vsel %vm1033, %v2630, 0
      %v2705 = vsel %vm1033, %v2631, 0
      %v2708 = vsel %vm1033, %v2632, 0
      %v2711 = vsel %vm1033, %v2633, 0
      %v2714 = vsel %vm1033, %v2634, 0
      %v2717 = vsel %vm1033, %v2635, 0
      %v2720 = vsel %vm1033, %v2636, 0
      %v2723 = vsel %vm1033, %v2637, 0
      %v2726 = vsel %vm1033, %v2638, 0
      %v2729 = vsel %vm1033, %v2639, 0
      %v2732 = vsel %vm1033, %v2640, 0
      %v2735 = vsel %vm1033, %v2641, 0
      %v2738 = vsel %vm1033, %v2642, 0
      %v2741 = vsel %vm1033, %v2643, 0
      %2743 = vmatprep.subr.mxu0 0.0
      %2744 = vmatpush1.xpose.msra.mxu0 %v2648
      %2745 = vmatprep.subr.mxu0 0.0
      %2746 = vmatpush1.xpose.msra.mxu0 %v2651
      %2747 = vmatprep.subr.mxu0 0.0
      %2748 = vmatpush1.xpose.msra.mxu0 %v2654
      %2749 = vmatprep.subr.mxu0 0.0
      %2750 = vmatpush1.xpose.msra.mxu0 %v2657
      %2751 = vmatprep.subr.mxu0 0.0
      %2752 = vmatpush1.xpose.msra.mxu0 %v2660
      %2753 = vmatprep.subr.mxu0 0.0
      %2754 = vmatpush1.xpose.msra.mxu0 %v2663
      %2755 = vmatprep.subr.mxu0 0.0
      %2756 = vmatpush1.xpose.msra.mxu0 %v2666
      %2757 = vmatprep.subr.mxu0 0.0
      %2758 = vmatpush1.xpose.msra.mxu0 %v2669
      %2759 = vmatprep.subr.mxu0 0.0
      %2760 = vmatpush1.xpose.msra.mxu0 %v2672
      %2761 = vmatprep.subr.mxu0 0.0
      %2762 = vmatpush1.xpose.msra.mxu0 %v2675
      %2763 = vmatprep.subr.mxu0 0.0
      %2764 = vmatpush1.xpose.msra.mxu0 %v2678
      %2765 = vmatprep.subr.mxu0 0.0
      %2766 = vmatpush1.xpose.msra.mxu0 %v2681
      %2767 = vmatprep.subr.mxu0 0.0
      %2768 = vmatpush1.xpose.msra.mxu0 %v2684
      %2769 = vmatprep.subr.mxu0 0.0
      %2770 = vmatpush1.xpose.msra.mxu0 %v2687
      %2771 = vmatprep.subr.mxu0 0.0
      %2772 = vmatpush1.xpose.msra.mxu0 %v2690
      %2773 = vmatprep.subr.mxu0 0.0
      %2774 = vmatpush1.xpose.msra.mxu0 %v2693
      %2775 = vmatprep.subr.mxu0 0.0
      %2776 = vmatpush1.xpose.msra.mxu0 %v2696
      %2777 = vmatprep.subr.mxu0 0.0
      %2778 = vmatpush1.xpose.msra.mxu0 %v2699
      %2779 = vmatprep.subr.mxu0 0.0
      %2780 = vmatpush1.xpose.msra.mxu0 %v2702
      %2781 = vmatprep.subr.mxu0 0.0
      %2782 = vmatpush1.xpose.msra.mxu0 %v2705
      %2783 = vmatprep.subr.mxu0 0.0
      %2784 = vmatpush1.xpose.msra.mxu0 %v2708
      %2785 = vmatprep.subr.mxu0 0.0
      %2786 = vmatpush1.xpose.msra.mxu0 %v2711
      %2787 = vmatprep.subr.mxu0 0.0
      %2788 = vmatpush1.xpose.msra.mxu0 %v2714
      %2789 = vmatprep.subr.mxu0 0.0
      %2790 = vmatpush1.xpose.msra.mxu0 %v2717
      %2791 = vmatprep.subr.mxu0 0.0
      %2792 = vmatpush1.xpose.msra.mxu0 %v2720
      %2793 = vmatprep.subr.mxu0 0.0
      %2794 = vmatpush1.xpose.msra.mxu0 %v2723
      %2795 = vmatprep.subr.mxu0 0.0
      %2796 = vmatpush1.xpose.msra.mxu0 %v2726
      %2797 = vmatprep.subr.mxu0 0.0
      %2798 = vmatpush1.xpose.msra.mxu0 %v2729
      %2799 = vmatprep.subr.mxu0 0.0
      %2800 = vmatpush1.xpose.msra.mxu0 %v2732
      %2801 = vmatprep.subr.mxu0 0.0
      %2802 = vmatpush1.xpose.msra.mxu0 %v2735
      %2803 = vmatprep.subr.mxu0 0.0
      %2804 = vmatpush1.xpose.msra.mxu0 %v2738
      %2805 = vmatprep.subr.mxu0 0.0
      %2806 = vmatpush1.xpose.msra.mxu0 %v2741
      %2807 = vmatprep.mubr.f32.mxu0 0.0
      %2808 = vmatmul.mubr.f32.gmra.mrb[0].mxu0 %v2645
      %v2809 = vpop.f32.mrb[0].mxu0
      %v2810 = vadd.f32 0.0, %v2809
      %v2811 = vpop.f32.mrb[0].mxu0
      %v2812 = vadd.f32 0.0, %v2811
      %2813 = vdwg.mxu0
      %v2814 = vadd.f32 %v2608, %v2810
      %v2815 = vadd.f32 %v2609, %v2812
      %s2816 = scalar_lea.vmem %s13, 36
      %v2817 = vld [vmem:[%s2816] sm:$0x7]
      %v2818 = vld [vmem:[%s924] sm:$0xff]
      %v2819 = vld [vmem:[%s924 + $0x8] sm:$0xff]
      %v2820 = vld [vmem:[%s924 + $0x10] sm:$0xff]
      %v2821 = vld [vmem:[%s924 + $0x18] sm:$0xff]
      %v2822 = vld [vmem:[%s924 + $0x20] sm:$0xff]
      %v2823 = vld [vmem:[%s924 + $0x28] sm:$0xff]
      %v2824 = vld [vmem:[%s924 + $0x30] sm:$0xff]
      %v2825 = vld [vmem:[%s924 + $0x38] sm:$0xff]
      %v2826 = vld [vmem:[%s924 + $0x40] sm:$0xff]
      %v2827 = vld [vmem:[%s924 + $0x48] sm:$0xff]
      %v2828 = vld [vmem:[%s924 + $0x50] sm:$0xff]
      %v2829 = vld [vmem:[%s924 + $0x58] sm:$0xff]
      %v2830 = vld [vmem:[%s924 + $0x60] sm:$0xff]
      %v2831 = vld [vmem:[%s924 + $0x68] sm:$0xff]
      %v2832 = vld [vmem:[%s924 + $0x70] sm:$0xff]
      %v2833 = vld [vmem:[%s924 + $0x78] sm:$0xff]
      %v2834 = vld [vmem:[%s924 + $0x80] sm:$0xff]
      %v2835 = vld [vmem:[%s924 + $0x88] sm:$0xff]
      %v2836 = vld [vmem:[%s924 + $0x90] sm:$0xff]
      %v2837 = vld [vmem:[%s924 + $0x98] sm:$0xff]
      %v2838 = vld [vmem:[%s924 + $0xa0] sm:$0xff]
      %v2839 = vld [vmem:[%s924 + $0xa8] sm:$0xff]
      %v2840 = vld [vmem:[%s924 + $0xb0] sm:$0xff]
      %v2841 = vld [vmem:[%s924 + $0xb8] sm:$0xff]
      %v2842 = vld [vmem:[%s924 + $0xc0] sm:$0xff]
      %v2843 = vld [vmem:[%s924 + $0xc8] sm:$0xff]
      %v2844 = vld [vmem:[%s924 + $0xd0] sm:$0xff]
      %v2845 = vld [vmem:[%s924 + $0xd8] sm:$0xff]
      %v2846 = vld [vmem:[%s924 + $0xe0] sm:$0xff]
      %v2847 = vld [vmem:[%s924 + $0xe8] sm:$0xff]
      %v2848 = vld [vmem:[%s924 + $0xf0] sm:$0xff]
      %v2849 = vld [vmem:[%s924 + $0xf8] sm:$0xff]
      %v2851 = vsel %vm1033, %v2817, 0
      %v2854 = vsel %vm1033, %v2818, 0
      %v2857 = vsel %vm1033, %v2819, 0
      %v2860 = vsel %vm1033, %v2820, 0
      %v2863 = vsel %vm1033, %v2821, 0
      %v2866 = vsel %vm1033, %v2822, 0
      %v2869 = vsel %vm1033, %v2823, 0
      %v2872 = vsel %vm1033, %v2824, 0
      %v2875 = vsel %vm1033, %v2825, 0
      %v2878 = vsel %vm1033, %v2826, 0
      %v2881 = vsel %vm1033, %v2827, 0
      %v2884 = vsel %vm1033, %v2828, 0
      %v2887 = vsel %vm1033, %v2829, 0
      %v2890 = vsel %vm1033, %v2830, 0
      %v2893 = vsel %vm1033, %v2831, 0
      %v2896 = vsel %vm1033, %v2832, 0
      %v2899 = vsel %vm1033, %v2833, 0
      %v2902 = vsel %vm1033, %v2834, 0
      %v2905 = vsel %vm1033, %v2835, 0
      %v2908 = vsel %vm1033, %v2836, 0
      %v2911 = vsel %vm1033, %v2837, 0
      %v2914 = vsel %vm1033, %v2838, 0
      %v2917 = vsel %vm1033, %v2839, 0
      %v2920 = vsel %vm1033, %v2840, 0
      %v2923 = vsel %vm1033, %v2841, 0
      %v2926 = vsel %vm1033, %v2842, 0
      %v2929 = vsel %vm1033, %v2843, 0
      %v2932 = vsel %vm1033, %v2844, 0
      %v2935 = vsel %vm1033, %v2845, 0
      %v2938 = vsel %vm1033, %v2846, 0
      %v2941 = vsel %vm1033, %v2847, 0
      %v2944 = vsel %vm1033, %v2848, 0
      %v2947 = vsel %vm1033, %v2849, 0
      %2949 = vmatprep.subr.mxu0 0.0
      %2950 = vmatpush1.xpose.msra.mxu0 %v2854
      %2951 = vmatprep.subr.mxu0 0.0
      %2952 = vmatpush1.xpose.msra.mxu0 %v2857
      %2953 = vmatprep.subr.mxu0 0.0
      %2954 = vmatpush1.xpose.msra.mxu0 %v2860
      %2955 = vmatprep.subr.mxu0 0.0
      %2956 = vmatpush1.xpose.msra.mxu0 %v2863
      %2957 = vmatprep.subr.mxu0 0.0
      %2958 = vmatpush1.xpose.msra.mxu0 %v2866
      %2959 = vmatprep.subr.mxu0 0.0
      %2960 = vmatpush1.xpose.msra.mxu0 %v2869
      %2961 = vmatprep.subr.mxu0 0.0
      %2962 = vmatpush1.xpose.msra.mxu0 %v2872
      %2963 = vmatprep.subr.mxu0 0.0
      %2964 = vmatpush1.xpose.msra.mxu0 %v2875
      %2965 = vmatprep.subr.mxu0 0.0
      %2966 = vmatpush1.xpose.msra.mxu0 %v2878
      %2967 = vmatprep.subr.mxu0 0.0
      %2968 = vmatpush1.xpose.msra.mxu0 %v2881
      %2969 = vmatprep.subr.mxu0 0.0
      %2970 = vmatpush1.xpose.msra.mxu0 %v2884
      %2971 = vmatprep.subr.mxu0 0.0
      %2972 = vmatpush1.xpose.msra.mxu0 %v2887
      %2973 = vmatprep.subr.mxu0 0.0
      %2974 = vmatpush1.xpose.msra.mxu0 %v2890
      %2975 = vmatprep.subr.mxu0 0.0
      %2976 = vmatpush1.xpose.msra.mxu0 %v2893
      %2977 = vmatprep.subr.mxu0 0.0
      %2978 = vmatpush1.xpose.msra.mxu0 %v2896
      %2979 = vmatprep.subr.mxu0 0.0
      %2980 = vmatpush1.xpose.msra.mxu0 %v2899
      %2981 = vmatprep.subr.mxu0 0.0
      %2982 = vmatpush1.xpose.msra.mxu0 %v2902
      %2983 = vmatprep.subr.mxu0 0.0
      %2984 = vmatpush1.xpose.msra.mxu0 %v2905
      %2985 = vmatprep.subr.mxu0 0.0
      %2986 = vmatpush1.xpose.msra.mxu0 %v2908
      %2987 = vmatprep.subr.mxu0 0.0
      %2988 = vmatpush1.xpose.msra.mxu0 %v2911
      %2989 = vmatprep.subr.mxu0 0.0
      %2990 = vmatpush1.xpose.msra.mxu0 %v2914
      %2991 = vmatprep.subr.mxu0 0.0
      %2992 = vmatpush1.xpose.msra.mxu0 %v2917
      %2993 = vmatprep.subr.mxu0 0.0
      %2994 = vmatpush1.xpose.msra.mxu0 %v2920
      %2995 = vmatprep.subr.mxu0 0.0
      %2996 = vmatpush1.xpose.msra.mxu0 %v2923
      %2997 = vmatprep.subr.mxu0 0.0
      %2998 = vmatpush1.xpose.msra.mxu0 %v2926
      %2999 = vmatprep.subr.mxu0 0.0
      %3000 = vmatpush1.xpose.msra.mxu0 %v2929
      %3001 = vmatprep.subr.mxu0 0.0
      %3002 = vmatpush1.xpose.msra.mxu0 %v2932
      %3003 = vmatprep.subr.mxu0 0.0
      %3004 = vmatpush1.xpose.msra.mxu0 %v2935
      %3005 = vmatprep.subr.mxu0 0.0
      %3006 = vmatpush1.xpose.msra.mxu0 %v2938
      %3007 = vmatprep.subr.mxu0 0.0
      %3008 = vmatpush1.xpose.msra.mxu0 %v2941
      %3009 = vmatprep.subr.mxu0 0.0
      %3010 = vmatpush1.xpose.msra.mxu0 %v2944
      %3011 = vmatprep.subr.mxu0 0.0
      %3012 = vmatpush1.xpose.msra.mxu0 %v2947
      %3013 = vmatprep.mubr.f32.mxu0 0.0
      %3014 = vmatmul.mubr.f32.gmra.mrb[0].mxu0 %v2851
      %v3015 = vpop.f32.mrb[0].mxu0
      %v3016 = vadd.f32 0.0, %v3015
      %v3017 = vpop.f32.mrb[0].mxu0
      %v3018 = vadd.f32 0.0, %v3017
      %3019 = vdwg.mxu0
      %v3020 = vadd.f32 %v2814, %v3016
      %v3021 = vadd.f32 %v2815, %v3018
      %s3022 = scalar_lea.vmem %s13, 40
      %v3023 = vld [vmem:[%s3022] sm:$0x7]
      %v3024 = vld [vmem:[%s934] sm:$0xff]
      %v3025 = vld [vmem:[%s934 + $0x8] sm:$0xff]
      %v3026 = vld [vmem:[%s934 + $0x10] sm:$0xff]
      %v3027 = vld [vmem:[%s934 + $0x18] sm:$0xff]
      %v3028 = vld [vmem:[%s934 + $0x20] sm:$0xff]
      %v3029 = vld [vmem:[%s934 + $0x28] sm:$0xff]
      %v3030 = vld [vmem:[%s934 + $0x30] sm:$0xff]
      %v3031 = vld [vmem:[%s934 + $0x38] sm:$0xff]
      %v3032 = vld [vmem:[%s934 + $0x40] sm:$0xff]
      %v3033 = vld [vmem:[%s934 + $0x48] sm:$0xff]
      %v3034 = vld [vmem:[%s934 + $0x50] sm:$0xff]
      %v3035 = vld [vmem:[%s934 + $0x58] sm:$0xff]
      %v3036 = vld [vmem:[%s934 + $0x60] sm:$0xff]
      %v3037 = vld [vmem:[%s934 + $0x68] sm:$0xff]
      %v3038 = vld [vmem:[%s934 + $0x70] sm:$0xff]
      %v3039 = vld [vmem:[%s934 + $0x78] sm:$0xff]
      %v3040 = vld [vmem:[%s934 + $0x80] sm:$0xff]
      %v3041 = vld [vmem:[%s934 + $0x88] sm:$0xff]
      %v3042 = vld [vmem:[%s934 + $0x90] sm:$0xff]
      %v3043 = vld [vmem:[%s934 + $0x98] sm:$0xff]
      %v3044 = vld [vmem:[%s934 + $0xa0] sm:$0xff]
      %v3045 = vld [vmem:[%s934 + $0xa8] sm:$0xff]
      %v3046 = vld [vmem:[%s934 + $0xb0] sm:$0xff]
      %v3047 = vld [vmem:[%s934 + $0xb8] sm:$0xff]
      %v3048 = vld [vmem:[%s934 + $0xc0] sm:$0xff]
      %v3049 = vld [vmem:[%s934 + $0xc8] sm:$0xff]
      %v3050 = vld [vmem:[%s934 + $0xd0] sm:$0xff]
      %v3051 = vld [vmem:[%s934 + $0xd8] sm:$0xff]
      %v3052 = vld [vmem:[%s934 + $0xe0] sm:$0xff]
      %v3053 = vld [vmem:[%s934 + $0xe8] sm:$0xff]
      %v3054 = vld [vmem:[%s934 + $0xf0] sm:$0xff]
      %v3055 = vld [vmem:[%s934 + $0xf8] sm:$0xff]
      %v3057 = vsel %vm1033, %v3023, 0
      %v3060 = vsel %vm1033, %v3024, 0
      %v3063 = vsel %vm1033, %v3025, 0
      %v3066 = vsel %vm1033, %v3026, 0
      %v3069 = vsel %vm1033, %v3027, 0
      %v3072 = vsel %vm1033, %v3028, 0
      %v3075 = vsel %vm1033, %v3029, 0
      %v3078 = vsel %vm1033, %v3030, 0
      %v3081 = vsel %vm1033, %v3031, 0
      %v3084 = vsel %vm1033, %v3032, 0
      %v3087 = vsel %vm1033, %v3033, 0
      %v3090 = vsel %vm1033, %v3034, 0
      %v3093 = vsel %vm1033, %v3035, 0
      %v3096 = vsel %vm1033, %v3036, 0
      %v3099 = vsel %vm1033, %v3037, 0
      %v3102 = vsel %vm1033, %v3038, 0
      %v3105 = vsel %vm1033, %v3039, 0
      %v3108 = vsel %vm1033, %v3040, 0
      %v3111 = vsel %vm1033, %v3041, 0
      %v3114 = vsel %vm1033, %v3042, 0
      %v3117 = vsel %vm1033, %v3043, 0
      %v3120 = vsel %vm1033, %v3044, 0
      %v3123 = vsel %vm1033, %v3045, 0
      %v3126 = vsel %vm1033, %v3046, 0
      %v3129 = vsel %vm1033, %v3047, 0
      %v3132 = vsel %vm1033, %v3048, 0
      %v3135 = vsel %vm1033, %v3049, 0
      %v3138 = vsel %vm1033, %v3050, 0
      %v3141 = vsel %vm1033, %v3051, 0
      %v3144 = vsel %vm1033, %v3052, 0
      %v3147 = vsel %vm1033, %v3053, 0
      %v3150 = vsel %vm1033, %v3054, 0
      %v3153 = vsel %vm1033, %v3055, 0
      %3155 = vmatprep.subr.mxu0 0.0
      %3156 = vmatpush1.xpose.msra.mxu0 %v3060
      %3157 = vmatprep.subr.mxu0 0.0
      %3158 = vmatpush1.xpose.msra.mxu0 %v3063
      %3159 = vmatprep.subr.mxu0 0.0
      %3160 = vmatpush1.xpose.msra.mxu0 %v3066
      %3161 = vmatprep.subr.mxu0 0.0
      %3162 = vmatpush1.xpose.msra.mxu0 %v3069
      %3163 = vmatprep.subr.mxu0 0.0
      %3164 = vmatpush1.xpose.msra.mxu0 %v3072
      %3165 = vmatprep.subr.mxu0 0.0
      %3166 = vmatpush1.xpose.msra.mxu0 %v3075
      %3167 = vmatprep.subr.mxu0 0.0
      %3168 = vmatpush1.xpose.msra.mxu0 %v3078
      %3169 = vmatprep.subr.mxu0 0.0
      %3170 = vmatpush1.xpose.msra.mxu0 %v3081
      %3171 = vmatprep.subr.mxu0 0.0
      %3172 = vmatpush1.xpose.msra.mxu0 %v3084
      %3173 = vmatprep.subr.mxu0 0.0
      %3174 = vmatpush1.xpose.msra.mxu0 %v3087
      %3175 = vmatprep.subr.mxu0 0.0
      %3176 = vmatpush1.xpose.msra.mxu0 %v3090
      %3177 = vmatprep.subr.mxu0 0.0
      %3178 = vmatpush1.xpose.msra.mxu0 %v3093
      %3179 = vmatprep.subr.mxu0 0.0
      %3180 = vmatpush1.xpose.msra.mxu0 %v3096
      %3181 = vmatprep.subr.mxu0 0.0
      %3182 = vmatpush1.xpose.msra.mxu0 %v3099
      %3183 = vmatprep.subr.mxu0 0.0
      %3184 = vmatpush1.xpose.msra.mxu0 %v3102
      %3185 = vmatprep.subr.mxu0 0.0
      %3186 = vmatpush1.xpose.msra.mxu0 %v3105
      %3187 = vmatprep.subr.mxu0 0.0
      %3188 = vmatpush1.xpose.msra.mxu0 %v3108
      %3189 = vmatprep.subr.mxu0 0.0
      %3190 = vmatpush1.xpose.msra.mxu0 %v3111
      %3191 = vmatprep.subr.mxu0 0.0
      %3192 = vmatpush1.xpose.msra.mxu0 %v3114
      %3193 = vmatprep.subr.mxu0 0.0
      %3194 = vmatpush1.xpose.msra.mxu0 %v3117
      %3195 = vmatprep.subr.mxu0 0.0
      %3196 = vmatpush1.xpose.msra.mxu0 %v3120
      %3197 = vmatprep.subr.mxu0 0.0
      %3198 = vmatpush1.xpose.msra.mxu0 %v3123
      %3199 = vmatprep.subr.mxu0 0.0
      %3200 = vmatpush1.xpose.msra.mxu0 %v3126
      %3201 = vmatprep.subr.mxu0 0.0
      %3202 = vmatpush1.xpose.msra.mxu0 %v3129
      %3203 = vmatprep.subr.mxu0 0.0
      %3204 = vmatpush1.xpose.msra.mxu0 %v3132
      %3205 = vmatprep.subr.mxu0 0.0
      %3206 = vmatpush1.xpose.msra.mxu0 %v3135
      %3207 = vmatprep.subr.mxu0 0.0
      %3208 = vmatpush1.xpose.msra.mxu0 %v3138
      %3209 = vmatprep.subr.mxu0 0.0
      %3210 = vmatpush1.xpose.msra.mxu0 %v3141
      %3211 = vmatprep.subr.mxu0 0.0
      %3212 = vmatpush1.xpose.msra.mxu0 %v3144
      %3213 = vmatprep.subr.mxu0 0.0
      %3214 = vmatpush1.xpose.msra.mxu0 %v3147
      %3215 = vmatprep.subr.mxu0 0.0
      %3216 = vmatpush1.xpose.msra.mxu0 %v3150
      %3217 = vmatprep.subr.mxu0 0.0
      %3218 = vmatpush1.xpose.msra.mxu0 %v3153
      %3219 = vmatprep.mubr.f32.mxu0 0.0
      %3220 = vmatmul.mubr.f32.gmra.mrb[0].mxu0 %v3057
      %v3221 = vpop.f32.mrb[0].mxu0
      %v3222 = vadd.f32 0.0, %v3221
      %v3223 = vpop.f32.mrb[0].mxu0
      %v3224 = vadd.f32 0.0, %v3223
      %3225 = vdwg.mxu0
      %v3226 = vadd.f32 %v3020, %v3222
      %v3227 = vadd.f32 %v3021, %v3224
      %s3228 = scalar_lea.vmem %s13, 44
      %v3229 = vld [vmem:[%s3228] sm:$0x7]
      %v3230 = vld [vmem:[%s944] sm:$0xff]
      %v3231 = vld [vmem:[%s944 + $0x8] sm:$0xff]
      %v3232 = vld [vmem:[%s944 + $0x10] sm:$0xff]
      %v3233 = vld [vmem:[%s944 + $0x18] sm:$0xff]
      %v3234 = vld [vmem:[%s944 + $0x20] sm:$0xff]
      %v3235 = vld [vmem:[%s944 + $0x28] sm:$0xff]
      %v3236 = vld [vmem:[%s944 + $0x30] sm:$0xff]
      %v3237 = vld [vmem:[%s944 + $0x38] sm:$0xff]
      %v3238 = vld [vmem:[%s944 + $0x40] sm:$0xff]
      %v3239 = vld [vmem:[%s944 + $0x48] sm:$0xff]
      %v3240 = vld [vmem:[%s944 + $0x50] sm:$0xff]
      %v3241 = vld [vmem:[%s944 + $0x58] sm:$0xff]
      %v3242 = vld [vmem:[%s944 + $0x60] sm:$0xff]
      %v3243 = vld [vmem:[%s944 + $0x68] sm:$0xff]
      %v3244 = vld [vmem:[%s944 + $0x70] sm:$0xff]
      %v3245 = vld [vmem:[%s944 + $0x78] sm:$0xff]
      %v3246 = vld [vmem:[%s944 + $0x80] sm:$0xff]
      %v3247 = vld [vmem:[%s944 + $0x88] sm:$0xff]
      %v3248 = vld [vmem:[%s944 + $0x90] sm:$0xff]
      %v3249 = vld [vmem:[%s944 + $0x98] sm:$0xff]
      %v3250 = vld [vmem:[%s944 + $0xa0] sm:$0xff]
      %v3251 = vld [vmem:[%s944 + $0xa8] sm:$0xff]
      %v3252 = vld [vmem:[%s944 + $0xb0] sm:$0xff]
      %v3253 = vld [vmem:[%s944 + $0xb8] sm:$0xff]
      %v3254 = vld [vmem:[%s944 + $0xc0] sm:$0xff]
      %v3255 = vld [vmem:[%s944 + $0xc8] sm:$0xff]
      %v3256 = vld [vmem:[%s944 + $0xd0] sm:$0xff]
      %v3257 = vld [vmem:[%s944 + $0xd8] sm:$0xff]
      %v3258 = vld [vmem:[%s944 + $0xe0] sm:$0xff]
      %v3259 = vld [vmem:[%s944 + $0xe8] sm:$0xff]
      %v3260 = vld [vmem:[%s944 + $0xf0] sm:$0xff]
      %v3261 = vld [vmem:[%s944 + $0xf8] sm:$0xff]
      %v3263 = vsel %vm1033, %v3229, 0
      %v3266 = vsel %vm1033, %v3230, 0
      %v3269 = vsel %vm1033, %v3231, 0
      %v3272 = vsel %vm1033, %v3232, 0
      %v3275 = vsel %vm1033, %v3233, 0
      %v3278 = vsel %vm1033, %v3234, 0
      %v3281 = vsel %vm1033, %v3235, 0
      %v3284 = vsel %vm1033, %v3236, 0
      %v3287 = vsel %vm1033, %v3237, 0
      %v3290 = vsel %vm1033, %v3238, 0
      %v3293 = vsel %vm1033, %v3239, 0
      %v3296 = vsel %vm1033, %v3240, 0
      %v3299 = vsel %vm1033, %v3241, 0
      %v3302 = vsel %vm1033, %v3242, 0
      %v3305 = vsel %vm1033, %v3243, 0
      %v3308 = vsel %vm1033, %v3244, 0
      %v3311 = vsel %vm1033, %v3245, 0
      %v3314 = vsel %vm1033, %v3246, 0
      %v3317 = vsel %vm1033, %v3247, 0
      %v3320 = vsel %vm1033, %v3248, 0
      %v3323 = vsel %vm1033, %v3249, 0
      %v3326 = vsel %vm1033, %v3250, 0
      %v3329 = vsel %vm1033, %v3251, 0
      %v3332 = vsel %vm1033, %v3252, 0
      %v3335 = vsel %vm1033, %v3253, 0
      %v3338 = vsel %vm1033, %v3254, 0
      %v3341 = vsel %vm1033, %v3255, 0
      %v3344 = vsel %vm1033, %v3256, 0
      %v3347 = vsel %vm1033, %v3257, 0
      %v3350 = vsel %vm1033, %v3258, 0
      %v3353 = vsel %vm1033, %v3259, 0
      %v3356 = vsel %vm1033, %v3260, 0
      %v3359 = vsel %vm1033, %v3261, 0
      %3361 = vmatprep.subr.mxu0 0.0
      %3362 = vmatpush1.xpose.msra.mxu0 %v3266
      %3363 = vmatprep.subr.mxu0 0.0
      %3364 = vmatpush1.xpose.msra.mxu0 %v3269
      %3365 = vmatprep.subr.mxu0 0.0
      %3366 = vmatpush1.xpose.msra.mxu0 %v3272
      %3367 = vmatprep.subr.mxu0 0.0
      %3368 = vmatpush1.xpose.msra.mxu0 %v3275
      %3369 = vmatprep.subr.mxu0 0.0
      %3370 = vmatpush1.xpose.msra.mxu0 %v3278
      %3371 = vmatprep.subr.mxu0 0.0
      %3372 = vmatpush1.xpose.msra.mxu0 %v3281
      %3373 = vmatprep.subr.mxu0 0.0
      %3374 = vmatpush1.xpose.msra.mxu0 %v3284
      %3375 = vmatprep.subr.mxu0 0.0
      %3376 = vmatpush1.xpose.msra.mxu0 %v3287
      %3377 = vmatprep.subr.mxu0 0.0
      %3378 = vmatpush1.xpose.msra.mxu0 %v3290
      %3379 = vmatprep.subr.mxu0 0.0
      %3380 = vmatpush1.xpose.msra.mxu0 %v3293
      %3381 = vmatprep.subr.mxu0 0.0
      %3382 = vmatpush1.xpose.msra.mxu0 %v3296
      %3383 = vmatprep.subr.mxu0 0.0
      %3384 = vmatpush1.xpose.msra.mxu0 %v3299
      %3385 = vmatprep.subr.mxu0 0.0
      %3386 = vmatpush1.xpose.msra.mxu0 %v3302
      %3387 = vmatprep.subr.mxu0 0.0
      %3388 = vmatpush1.xpose.msra.mxu0 %v3305
      %3389 = vmatprep.subr.mxu0 0.0
      %3390 = vmatpush1.xpose.msra.mxu0 %v3308
      %3391 = vmatprep.subr.mxu0 0.0
      %3392 = vmatpush1.xpose.msra.mxu0 %v3311
      %3393 = vmatprep.subr.mxu0 0.0
      %3394 = vmatpush1.xpose.msra.mxu0 %v3314
      %3395 = vmatprep.subr.mxu0 0.0
      %3396 = vmatpush1.xpose.msra.mxu0 %v3317
      %3397 = vmatprep.subr.mxu0 0.0
      %3398 = vmatpush1.xpose.msra.mxu0 %v3320
      %3399 = vmatprep.subr.mxu0 0.0
      %3400 = vmatpush1.xpose.msra.mxu0 %v3323
      %3401 = vmatprep.subr.mxu0 0.0
      %3402 = vmatpush1.xpose.msra.mxu0 %v3326
      %3403 = vmatprep.subr.mxu0 0.0
      %3404 = vmatpush1.xpose.msra.mxu0 %v3329
      %3405 = vmatprep.subr.mxu0 0.0
      %3406 = vmatpush1.xpose.msra.mxu0 %v3332
      %3407 = vmatprep.subr.mxu0 0.0
      %3408 = vmatpush1.xpose.msra.mxu0 %v3335
      %3409 = vmatprep.subr.mxu0 0.0
      %3410 = vmatpush1.xpose.msra.mxu0 %v3338
      %3411 = vmatprep.subr.mxu0 0.0
      %3412 = vmatpush1.xpose.msra.mxu0 %v3341
      %3413 = vmatprep.subr.mxu0 0.0
      %3414 = vmatpush1.xpose.msra.mxu0 %v3344
      %3415 = vmatprep.subr.mxu0 0.0
      %3416 = vmatpush1.xpose.msra.mxu0 %v3347
      %3417 = vmatprep.subr.mxu0 0.0
      %3418 = vmatpush1.xpose.msra.mxu0 %v3350
      %3419 = vmatprep.subr.mxu0 0.0
      %3420 = vmatpush1.xpose.msra.mxu0 %v3353
      %3421 = vmatprep.subr.mxu0 0.0
      %3422 = vmatpush1.xpose.msra.mxu0 %v3356
      %3423 = vmatprep.subr.mxu0 0.0
      %3424 = vmatpush1.xpose.msra.mxu0 %v3359
      %3425 = vmatprep.mubr.f32.mxu0 0.0
      %3426 = vmatmul.mubr.f32.gmra.mrb[0].mxu0 %v3263
      %v3427 = vpop.f32.mrb[0].mxu0
      %v3428 = vadd.f32 0.0, %v3427
      %v3429 = vpop.f32.mrb[0].mxu0
      %v3430 = vadd.f32 0.0, %v3429
      %3431 = vdwg.mxu0
      %v3432 = vadd.f32 %v3226, %v3428
      %v3433 = vadd.f32 %v3227, %v3430
      %s3434 = scalar_lea.vmem %s13, 48
      %v3435 = vld [vmem:[%s3434] sm:$0x7]
      %v3436 = vld [vmem:[%s954] sm:$0xff]
      %v3437 = vld [vmem:[%s954 + $0x8] sm:$0xff]
      %v3438 = vld [vmem:[%s954 + $0x10] sm:$0xff]
      %v3439 = vld [vmem:[%s954 + $0x18] sm:$0xff]
      %v3440 = vld [vmem:[%s954 + $0x20] sm:$0xff]
      %v3441 = vld [vmem:[%s954 + $0x28] sm:$0xff]
      %v3442 = vld [vmem:[%s954 + $0x30] sm:$0xff]
      %v3443 = vld [vmem:[%s954 + $0x38] sm:$0xff]
      %v3444 = vld [vmem:[%s954 + $0x40] sm:$0xff]
      %v3445 = vld [vmem:[%s954 + $0x48] sm:$0xff]
      %v3446 = vld [vmem:[%s954 + $0x50] sm:$0xff]
      %v3447 = vld [vmem:[%s954 + $0x58] sm:$0xff]
      %v3448 = vld [vmem:[%s954 + $0x60] sm:$0xff]
      %v3449 = vld [vmem:[%s954 + $0x68] sm:$0xff]
      %v3450 = vld [vmem:[%s954 + $0x70] sm:$0xff]
      %v3451 = vld [vmem:[%s954 + $0x78] sm:$0xff]
      %v3452 = vld [vmem:[%s954 + $0x80] sm:$0xff]
      %v3453 = vld [vmem:[%s954 + $0x88] sm:$0xff]
      %v3454 = vld [vmem:[%s954 + $0x90] sm:$0xff]
      %v3455 = vld [vmem:[%s954 + $0x98] sm:$0xff]
      %v3456 = vld [vmem:[%s954 + $0xa0] sm:$0xff]
      %v3457 = vld [vmem:[%s954 + $0xa8] sm:$0xff]
      %v3458 = vld [vmem:[%s954 + $0xb0] sm:$0xff]
      %v3459 = vld [vmem:[%s954 + $0xb8] sm:$0xff]
      %v3460 = vld [vmem:[%s954 + $0xc0] sm:$0xff]
      %v3461 = vld [vmem:[%s954 + $0xc8] sm:$0xff]
      %v3462 = vld [vmem:[%s954 + $0xd0] sm:$0xff]
      %v3463 = vld [vmem:[%s954 + $0xd8] sm:$0xff]
      %v3464 = vld [vmem:[%s954 + $0xe0] sm:$0xff]
      %v3465 = vld [vmem:[%s954 + $0xe8] sm:$0xff]
      %v3466 = vld [vmem:[%s954 + $0xf0] sm:$0xff]
      %v3467 = vld [vmem:[%s954 + $0xf8] sm:$0xff]
      %v3469 = vsel %vm1033, %v3435, 0
      %v3472 = vsel %vm1033, %v3436, 0
      %v3475 = vsel %vm1033, %v3437, 0
      %v3478 = vsel %vm1033, %v3438, 0
      %v3481 = vsel %vm1033, %v3439, 0
      %v3484 = vsel %vm1033, %v3440, 0
      %v3487 = vsel %vm1033, %v3441, 0
      %v3490 = vsel %vm1033, %v3442, 0
      %v3493 = vsel %vm1033, %v3443, 0
      %v3496 = vsel %vm1033, %v3444, 0
      %v3499 = vsel %vm1033, %v3445, 0
      %v3502 = vsel %vm1033, %v3446, 0
      %v3505 = vsel %vm1033, %v3447, 0
      %v3508 = vsel %vm1033, %v3448, 0
      %v3511 = vsel %vm1033, %v3449, 0
      %v3514 = vsel %vm1033, %v3450, 0
      %v3517 = vsel %vm1033, %v3451, 0
      %v3520 = vsel %vm1033, %v3452, 0
      %v3523 = vsel %vm1033, %v3453, 0
      %v3526 = vsel %vm1033, %v3454, 0
      %v3529 = vsel %vm1033, %v3455, 0
      %v3532 = vsel %vm1033, %v3456, 0
      %v3535 = vsel %vm1033, %v3457, 0
      %v3538 = vsel %vm1033, %v3458, 0
      %v3541 = vsel %vm1033, %v3459, 0
      %v3544 = vsel %vm1033, %v3460, 0
      %v3547 = vsel %vm1033, %v3461, 0
      %v3550 = vsel %vm1033, %v3462, 0
      %v3553 = vsel %vm1033, %v3463, 0
      %v3556 = vsel %vm1033, %v3464, 0
      %v3559 = vsel %vm1033, %v3465, 0
      %v3562 = vsel %vm1033, %v3466, 0
      %v3565 = vsel %vm1033, %v3467, 0
      %3567 = vmatprep.subr.mxu0 0.0
      %3568 = vmatpush1.xpose.msra.mxu0 %v3472
      %3569 = vmatprep.subr.mxu0 0.0
      %3570 = vmatpush1.xpose.msra.mxu0 %v3475
      %3571 = vmatprep.subr.mxu0 0.0
      %3572 = vmatpush1.xpose.msra.mxu0 %v3478
      %3573 = vmatprep.subr.mxu0 0.0
      %3574 = vmatpush1.xpose.msra.mxu0 %v3481
      %3575 = vmatprep.subr.mxu0 0.0
      %3576 = vmatpush1.xpose.msra.mxu0 %v3484
      %3577 = vmatprep.subr.mxu0 0.0
      %3578 = vmatpush1.xpose.msra.mxu0 %v3487
      %3579 = vmatprep.subr.mxu0 0.0
      %3580 = vmatpush1.xpose.msra.mxu0 %v3490
      %3581 = vmatprep.subr.mxu0 0.0
      %3582 = vmatpush1.xpose.msra.mxu0 %v3493
      %3583 = vmatprep.subr.mxu0 0.0
      %3584 = vmatpush1.xpose.msra.mxu0 %v3496
      %3585 = vmatprep.subr.mxu0 0.0
      %3586 = vmatpush1.xpose.msra.mxu0 %v3499
      %3587 = vmatprep.subr.mxu0 0.0
      %3588 = vmatpush1.xpose.msra.mxu0 %v3502
      %3589 = vmatprep.subr.mxu0 0.0
      %3590 = vmatpush1.xpose.msra.mxu0 %v3505
      %3591 = vmatprep.subr.mxu0 0.0
      %3592 = vmatpush1.xpose.msra.mxu0 %v3508
      %3593 = vmatprep.subr.mxu0 0.0
      %3594 = vmatpush1.xpose.msra.mxu0 %v3511
      %3595 = vmatprep.subr.mxu0 0.0
      %3596 = vmatpush1.xpose.msra.mxu0 %v3514
      %3597 = vmatprep.subr.mxu0 0.0
      %3598 = vmatpush1.xpose.msra.mxu0 %v3517
      %3599 = vmatprep.subr.mxu0 0.0
      %3600 = vmatpush1.xpose.msra.mxu0 %v3520
      %3601 = vmatprep.subr.mxu0 0.0
      %3602 = vmatpush1.xpose.msra.mxu0 %v3523
      %3603 = vmatprep.subr.mxu0 0.0
      %3604 = vmatpush1.xpose.msra.mxu0 %v3526
      %3605 = vmatprep.subr.mxu0 0.0
      %3606 = vmatpush1.xpose.msra.mxu0 %v3529
      %3607 = vmatprep.subr.mxu0 0.0
      %3608 = vmatpush1.xpose.msra.mxu0 %v3532
      %3609 = vmatprep.subr.mxu0 0.0
      %3610 = vmatpush1.xpose.msra.mxu0 %v3535
      %3611 = vmatprep.subr.mxu0 0.0
      %3612 = vmatpush1.xpose.msra.mxu0 %v3538
      %3613 = vmatprep.subr.mxu0 0.0
      %3614 = vmatpush1.xpose.msra.mxu0 %v3541
      %3615 = vmatprep.subr.mxu0 0.0
      %3616 = vmatpush1.xpose.msra.mxu0 %v3544
      %3617 = vmatprep.subr.mxu0 0.0
      %3618 = vmatpush1.xpose.msra.mxu0 %v3547
      %3619 = vmatprep.subr.mxu0 0.0
      %3620 = vmatpush1.xpose.msra.mxu0 %v3550
      %3621 = vmatprep.subr.mxu0 0.0
      %3622 = vmatpush1.xpose.msra.mxu0 %v3553
      %3623 = vmatprep.subr.mxu0 0.0
      %3624 = vmatpush1.xpose.msra.mxu0 %v3556
      %3625 = vmatprep.subr.mxu0 0.0
      %3626 = vmatpush1.xpose.msra.mxu0 %v3559
      %3627 = vmatprep.subr.mxu0 0.0
      %3628 = vmatpush1.xpose.msra.mxu0 %v3562
      %3629 = vmatprep.subr.mxu0 0.0
      %3630 = vmatpush1.xpose.msra.mxu0 %v3565
      %3631 = vmatprep.mubr.f32.mxu0 0.0
      %3632 = vmatmul.mubr.f32.gmra.mrb[0].mxu0 %v3469
      %v3633 = vpop.f32.mrb[0].mxu0
      %v3634 = vadd.f32 0.0, %v3633
      %v3635 = vpop.f32.mrb[0].mxu0
      %v3636 = vadd.f32 0.0, %v3635
      %3637 = vdwg.mxu0
      %v3638 = vadd.f32 %v3432, %v3634
      %v3639 = vadd.f32 %v3433, %v3636
      %v3640 = vld [vmem:[%s14] sm:$0x7]
      %3642 = vset.pattern.permute.xlu0 0
      %3643 = vperm.xlu0 %3642, %v3640
      %v3644 = vpop.permute.xlu0 %3643
      %v3646 = vadd.f32 %v3638, %v3644
      %v3647 = vadd.f32 %v3639, %v3644
      %v3650 = vcombine.low %v3646, %v3647
      %3652 = vst [vmem:[%s964] sm:$0x77] %v3650
      %s3653 = smul.u32 2, %s31
      %p3654 = scmp.lt.s32.totalorder %s30, 1
      %s3655 = scalar_select %p3654, %s30, 1
      %p3656 = scmp.lt.s32.totalorder %s3653, 1
      %s3657 = scalar_select %p3656, %s3653, 1
      %s3658 = smul.addr %s3655, 2
      %s3659 = sadd.s32 %s3657, %s3658
      %s3660 = smul.addr %s3659, 4
      %s3661 = scalar_lea.vmem %s15, %s3660
      // Predicated region
      $region81: #{tpu_custom_call.1} parent=79 // pred_check
        %p3662 = pneg %p464
      $region82: #{tpu_custom_call.1} parent=79 // pred_check_branch
        %3664 = sbr.rel (%p3662) target = $region84
      $region83: #{tpu_custom_call.1} parent=79 // pred_region
        %s3665 = smul.u32 2, %s31
      $region84: #{tpu_custom_call.1} parent=79 // pred_fallthru
        _
    $region80: #{tpu_custom_call.1} parent=5 // pred_fallthru
      _
    %p3666 = scmp.le.s32.totalorder 2, %s21
    // Predicated region
    $region85: #{tpu_custom_call.1} parent=5 // pred_check
      %p3667 = pneg %p3666
    $region86: #{tpu_custom_call.1} parent=5 // pred_check_branch
      %3669 = sbr.rel (%p3667) target = $region88
    $region87: #{tpu_custom_call.1} parent=5 // pred_region
      %s3670 = ssub.s32 %s21, 2
      // Predicated region
      $region89: #{tpu_custom_call.1} parent=87 // pred_check
        %p3671 = pneg %p470
      $region90: #{tpu_custom_call.1} parent=87 // pred_check_branch
        %3673 = sbr.rel (%p3671) target = $region92
      $region91: #{tpu_custom_call.1} parent=87 // pred_region
        %s3674 = smul.u32 2, %s33
        %p3675 = scmp.lt.s32.totalorder %s32, 1
        %s3676 = scalar_select %p3675, %s32, 1
        %p3677 = scmp.lt.s32.totalorder %s3674, 1
        %s3678 = scalar_select %p3677, %s3674, 1
        %s3679 = smul.addr %s3676, 2
        %s3680 = sadd.s32 %s3678, %s3679
        %s3681 = smul.addr %s3680, 4
        %s3682 = scalar_lea.vmem %s15, %s3681
      $region92: #{tpu_custom_call.1} parent=87 // pred_fallthru
        _
    $region88: #{tpu_custom_call.1} parent=5 // pred_fallthru
      _
  $region6: #{tpu_custom_call.1} parent=0 // loop_footer
    %s25 = sadd.s32 1, %s21
  $region7: #{tpu_custom_call.1} parent=0 // loop_footer_branch
    %20 = sbr.rel target = $region3
  $region8: #{tpu_custom_call.1} parent=0 // loop_exit
    _

</llo_original>
